<compile_context>
chip_gen: v7x
topology: tpu7x:2x2x1
jax: 0.10.0
libtpu: 0.0.40
codegen_flags: <defaults>
</compile_context>

<pallas_src>
import functools

import jax
import jax.numpy as jnp
from jax import lax
from jax.experimental import pallas as pl
from jax.experimental.pallas import tpu as pltpu


# ---------------------------------------------------------------------------
# Fused Pallas kernel: upsample + (concat)conv1 + BN + ReLU + conv2 + BN + ReLU
# ---------------------------------------------------------------------------
def _up_bilinear_kernel(
    x1_ref, x2p_ref, lh_ref, kwm_ref, k1a_ref, k1b_ref, k2_ref,
    s1_ref, b1_ref, s2_ref, b2_ref,
    o_ref,
    up_pad, y1_pad,
    *, H2, W2, C1, C2, CO,
):
    f32 = jnp.float32

    # --- bilinear 2x upsample of x1 (align_corners=True) --------------------
    # Interpolation operators are pre-padded, so the upsampled slab comes out
    # with the conv halo (zero border row/width-position) already in place.
    x1 = x1_ref[0]                                                  # [H1, W1*C1]
    t = jnp.dot(lh_ref[...], x1, preferred_element_type=f32)        # [H2+2, W1*C1]
    up_pad[...] = jnp.dot(t, kwm_ref[...], preferred_element_type=f32)

    # --- conv1 (3x3, pad=1) over cat([x2, up]) as 9+9 shifted dots -----------
    # cat is folded into the weights: k1a acts on x2's channels, k1b on the
    # upsampled-x1 channels.  The kron'd taps scatter into padded width
    # positions, so conv2's halo columns are already zero in `acc`.
    acc = jnp.zeros((H2, (W2 + 2) * CO), f32)
    for kh in range(3):
        for kw in range(3):
            k = kh * 3 + kw
            acc += jnp.dot(
                x2p_ref[0, kh:kh + H2, kw * C2:kw * C2 + W2 * C2],
                k1a_ref[k], preferred_element_type=f32)
            acc += jnp.dot(
                up_pad[kh:kh + H2, kw * C1:kw * C1 + W2 * C1],
                k1b_ref[k], preferred_element_type=f32)
    # Fused conv-bias + BatchNorm(eval) + ReLU.  scale/shift are zero on the
    # halo columns so the padding stays exactly zero through the ReLU.
    y1 = jnp.maximum(acc * s1_ref[...] + b1_ref[...], 0.0)
    y1_pad[...] = jnp.zeros_like(y1_pad)
    y1_pad[1:1 + H2, :] = y1

    # --- conv2 (3x3, pad=1) + BN + ReLU --------------------------------------
    acc2 = jnp.zeros((H2, W2 * CO), f32)
    for kh in range(3):
        for kw in range(3):
            k = kh * 3 + kw
            acc2 += jnp.dot(
                y1_pad[kh:kh + H2, kw * CO:kw * CO + W2 * CO],
                k2_ref[k], preferred_element_type=f32)
    y2 = jnp.maximum(acc2 * s2_ref[...] + b2_ref[...], 0.0)
    o_ref[0] = y2.astype(o_ref.dtype)


# ---------------------------------------------------------------------------
# Host-side operator construction (tiny, runs under jit with the kernel)
# ---------------------------------------------------------------------------
def _linear_interp_matrix(n_in, n_out):
    """[n_out, n_in] 1-D linear interpolation matrix, align_corners=True."""
    f32 = jnp.float32
    if n_in == 1:
        return jnp.ones((n_out, 1), f32)
    src = jnp.arange(n_out, dtype=f32) * ((n_in - 1) / (n_out - 1))
    i0 = jnp.clip(jnp.floor(src).astype(jnp.int32), 0, n_in - 2)
    frac = src - i0.astype(f32)
    rows = jnp.arange(n_out)
    m = jnp.zeros((n_out, n_in), f32)
    m = m.at[rows, i0].add(1.0 - frac)
    m = m.at[rows, i0 + 1].add(frac)
    return m


def up_bilinear_forward(x1_nchw, x2_nchw, p, eps=1e-5):
    """Mirrors Up_Bilinear.forward(x1, x2); NCHW in / NCHW out like PyTorch."""
    B, C1, H1, W1 = x1_nchw.shape
    Bx, C2, H2, W2 = x2_nchw.shape
    assert B == Bx and H2 == 2 * H1 and W2 == 2 * W1, (x1_nchw.shape, x2_nchw.shape)
    CO, Cin = p["c1_w"].shape[0], p["c1_w"].shape[1]
    assert Cin == C1 + C2, (Cin, C1, C2)
    f32 = jnp.float32

    # Lane-dense per-image layout [H, W*C] (channel fastest, then width).
    x1_2d = jnp.transpose(x1_nchw, (0, 2, 3, 1)).reshape(B, H1, W1 * C1).astype(f32)
    # x2 gets its conv halo (padding=1) in the wrapper (tiny one-off XLA pad),
    # so the kernel only does full-block stores and sliced loads.
    x2_pad = jnp.pad(jnp.transpose(x2_nchw, (0, 2, 3, 1)),
                     ((0, 0), (1, 1), (1, 1), (0, 0))).astype(f32)
    x2_2d = x2_pad.reshape(B, H2 + 2, (W2 + 2) * C2)

    # Separable align_corners=True bilinear operators, pre-padded with the
    # conv1 halo so the upsampled slab is produced already zero-padded.
    lh = jnp.pad(_linear_interp_matrix(H1, H2), ((1, 1), (0, 0)))        # [H2+2, H1]
    lw = jnp.pad(_linear_interp_matrix(W1, W2), ((1, 1), (0, 0)))        # [W2+2, W1]
    kwm = jnp.kron(lw.T, jnp.eye(C1, dtype=f32))                         # [W1*C1,(W2+2)*C1]

    # 3x3 conv taps lifted via kron to the flattened [H, W*Cin] layout.
    # conv1 taps scatter into padded width positions (placement matrix).
    place = jnp.pad(jnp.eye(W2, dtype=f32), ((0, 0), (1, 1)))            # [W2, W2+2]
    eye_w = jnp.eye(W2, dtype=f32)
    w1 = jnp.transpose(p["c1_w"], (2, 3, 1, 0)).astype(f32)              # [3,3,Cin,CO]
    w2 = jnp.transpose(p["c2_w"], (2, 3, 1, 0)).astype(f32)              # [3,3,CO,CO]
    k1a = jnp.stack([jnp.kron(place, w1[i, j, :C2, :])
                     for i in range(3) for j in range(3)])               # [9,W2*C2,(W2+2)*CO]
    k1b = jnp.stack([jnp.kron(place, w1[i, j, C2:, :])
                     for i in range(3) for j in range(3)])               # [9,W2*C1,(W2+2)*CO]
    k2 = jnp.stack([jnp.kron(eye_w, w2[i, j])
                    for i in range(3) for j in range(3)])                # [9,W2*CO,W2*CO]

    # Fold conv bias + BatchNorm (inference) into per-channel scale/shift,
    # tiled over width; conv1's halo columns get scale = shift = 0.
    sc1 = p["bn1_g"] / jnp.sqrt(p["bn1_v"] + eps)
    sh1 = (p["c1_b"] - p["bn1_m"]) * sc1 + p["bn1_b"]
    sc2 = p["bn2_g"] / jnp.sqrt(p["bn2_v"] + eps)
    sh2 = (p["c2_b"] - p["bn2_m"]) * sc2 + p["bn2_b"]
    s1 = jnp.pad(jnp.tile(sc1, W2), (CO, CO))[None, :]
    b1 = jnp.pad(jnp.tile(sh1, W2), (CO, CO))[None, :]
    s2 = jnp.tile(sc2, W2)[None, :]
    b2 = jnp.tile(sh2, W2)[None, :]

    kern = functools.partial(_up_bilinear_kernel, H2=H2, W2=W2, C1=C1, C2=C2, CO=CO)
    out = pl.pallas_call(
        kern,
        out_shape=jax.ShapeDtypeStruct((B, H2, W2 * CO), f32),
        grid_spec=pltpu.PrefetchScalarGridSpec(
            num_scalar_prefetch=0,
            grid=(B,),
            in_specs=[
                pl.BlockSpec((1, H1, W1 * C1), lambda b: (b, 0, 0)),           # x1
                pl.BlockSpec((1, H2 + 2, (W2 + 2) * C2), lambda b: (b, 0, 0)), # x2 (padded)
                pl.BlockSpec((H2 + 2, H1), lambda b: (0, 0)),                  # Lh
                pl.BlockSpec((W1 * C1, (W2 + 2) * C1), lambda b: (0, 0)),      # Kw
                pl.BlockSpec((9, W2 * C2, (W2 + 2) * CO), lambda b: (0, 0, 0)),
                pl.BlockSpec((9, W2 * C1, (W2 + 2) * CO), lambda b: (0, 0, 0)),
                pl.BlockSpec((9, W2 * CO, W2 * CO), lambda b: (0, 0, 0)),
                pl.BlockSpec((1, (W2 + 2) * CO), lambda b: (0, 0)),            # s1
                pl.BlockSpec((1, (W2 + 2) * CO), lambda b: (0, 0)),            # b1
                pl.BlockSpec((1, W2 * CO), lambda b: (0, 0)),                  # s2
                pl.BlockSpec((1, W2 * CO), lambda b: (0, 0)),                  # b2
            ],
            out_specs=pl.BlockSpec((1, H2, W2 * CO), lambda b: (b, 0, 0)),
            scratch_shapes=[
                pltpu.VMEM((H2 + 2, (W2 + 2) * C1), f32),   # padded upsampled x1
                pltpu.VMEM((H2 + 2, (W2 + 2) * CO), f32),   # padded conv1 output
            ],
        ),
        compiler_params=pltpu.CompilerParams(
            dimension_semantics=("parallel",)),   # >=2 parallel steps -> both v7x TCs
    )(x1_2d, x2_2d, lh, kwm, k1a, k1b, k2, s1, b1, s2, b2)

    out = out.reshape(B, H2, W2, CO)
    return jnp.transpose(out, (0, 3, 1, 2))       # back to NCHW (PyTorch interface)


# ---------------------------------------------------------------------------
# Pure-JAX reference (gather-based upsample + lax convolutions) for validation
# ---------------------------------------------------------------------------
def _ref_bilinear_up2x(x_nhwc):
    B, H, W, C = x_nhwc.shape
    Ho, Wo = 2 * H, 2 * W

    def coords(n_in, n_out):
        src = jnp.arange(n_out, dtype=jnp.float32) * ((n_in - 1) / (n_out - 1))
        i0 = jnp.clip(jnp.floor(src).astype(jnp.int32), 0, n_in - 2)
        return i0, src - i0.astype(jnp.float32)

    h0, fh = coords(H, Ho)
    w0, fw = coords(W, Wo)
    xh0, xh1 = x_nhwc[:, h0], x_nhwc[:, h0 + 1]
    x00, x01 = xh0[:, :, w0], xh0[:, :, w0 + 1]
    x10, x11 = xh1[:, :, w0], xh1[:, :, w0 + 1]
    fh = fh[None, :, None, None]
    fw = fw[None, None, :, None]
    return (x00 * (1 - fh) * (1 - fw) + x01 * (1 - fh) * fw
            + x10 * fh * (1 - fw) + x11 * fh * fw)


def _ref_conv_bn_relu(x_nhwc, w_torch, b, gamma, beta, mean, var, eps=1e-5):
    w_hwio = jnp.transpose(w_torch, (2, 3, 1, 0))
    dn = lax.conv_dimension_numbers(x_nhwc.shape, w_hwio.shape, ("NHWC", "HWIO", "NHWC"))
    z = lax.conv_general_dilated(x_nhwc, w_hwio, (1, 1), "SAME",
                                 dimension_numbers=dn) + b
    z = (z - mean) * (gamma / jnp.sqrt(var + eps)) + beta
    return jnp.maximum(z, 0.0)


def up_bilinear_reference(x1_nchw, x2_nchw, p):
    x1 = jnp.transpose(x1_nchw, (0, 2, 3, 1))
    x2 = jnp.transpose(x2_nchw, (0, 2, 3, 1))
    up = _ref_bilinear_up2x(x1)
    xcat = jnp.concatenate([x2, up], axis=-1)          # torch.cat([x2, x1], dim=1)
    y = _ref_conv_bn_relu(xcat, p["c1_w"], p["c1_b"],
                          p["bn1_g"], p["bn1_b"], p["bn1_m"], p["bn1_v"])
    y = _ref_conv_bn_relu(y, p["c2_w"], p["c2_b"],
                          p["bn2_g"], p["bn2_b"], p["bn2_m"], p["bn2_v"])
    return jnp.transpose(y, (0, 3, 1, 2))


# ---------------------------------------------------------------------------
if __name__ == "__main__":
    B = 2
    in_channels, out_channels = 8, 4          # Up_Bilinear(8, 4)
    C1 = C2 = in_channels // 2                # cat([x2, up(x1)]) has 8 channels
    H1 = W1 = 8                               # x1 spatial (low-res path)
    H2 = W2 = 16                              # x2 spatial (skip connection)

    key = jax.random.PRNGKey(0)
    ks = jax.random.split(key, 6)
    f32 = jnp.float32

    params = {
        # DoubleConv(in_channels, out_channels)
        "c1_w": 0.2 * jax.random.normal(ks[0], (out_channels, in_channels, 3, 3), f32),
        "c1_b": 0.1 * jax.random.normal(ks[1], (out_channels,), f32),
        "c2_w": 0.2 * jax.random.normal(ks[2], (out_channels, out_channels, 3, 3), f32),
        "c2_b": 0.1 * jax.random.normal(ks[3], (out_channels,), f32),
        # BatchNorm2d defaults (eval mode)
        "bn1_g": jnp.ones((out_channels,), f32), "bn1_b": jnp.zeros((out_channels,), f32),
        "bn1_m": jnp.zeros((out_channels,), f32), "bn1_v": jnp.ones((out_channels,), f32),
        "bn2_g": jnp.ones((out_channels,), f32), "bn2_b": jnp.zeros((out_channels,), f32),
        "bn2_m": jnp.zeros((out_channels,), f32), "bn2_v": jnp.ones((out_channels,), f32),
    }

    x1 = jax.random.normal(ks[4], (B, C1, H1, W1), f32)   # NCHW low-res input
    x2 = jax.random.normal(ks[5], (B, C2, H2, W2), f32)   # NCHW skip connection

    fwd = jax.jit(up_bilinear_forward)
    out = jax.block_until_ready(fwd(x1, x2, params))
    ref = jax.block_until_ready(up_bilinear_reference(x1, x2, params))

    assert out.shape == (B, out_channels, H2, W2), out.shape
    err = float(jnp.abs(out - ref).max())
    assert jnp.allclose(out, ref, atol=2e-3, rtol=2e-3), err
    print("KERNEL_OK")
</pallas_src>

<mosaic_0001>
module attributes {stable_mosaic.version = 11 : i64} {
  func.func private @main(%arg0: i32) attributes {dimension_semantics = [#tpu.dimension_semantics<core_parallel>], iteration_bounds = array<i64: 2>, tpu.core_type = #tpu.core_type<sc_scalar_subcore>, window_params = []} {
    return
  }
}

module attributes {stable_mosaic.version = 11 : i64} {
  func.func private @main(%arg0: i32) attributes {dimension_semantics = [#tpu.dimension_semantics<core_parallel>], iteration_bounds = array<i64: 2>, tpu.core_type = #tpu.core_type<sc_scalar_subcore>, window_params = []} {
    return
  }
}

module attributes {stable_mosaic.version = 11 : i64} {
  func.func @_up_bilinear_kernel(%arg0: i32, %arg1: memref<1x8x32xf32, #tpu.memory_space<vmem>>, %arg2: memref<1x18x72xf32, #tpu.memory_space<vmem>>, %arg3: memref<18x8xf32, #tpu.memory_space<vmem>>, %arg4: memref<32x72xf32, #tpu.memory_space<vmem>>, %arg5: memref<9x64x72xf32, #tpu.memory_space<vmem>>, %arg6: memref<9x64x72xf32, #tpu.memory_space<vmem>>, %arg7: memref<9x64x64xf32, #tpu.memory_space<vmem>>, %arg8: memref<1x72xf32, #tpu.memory_space<vmem>>, %arg9: memref<1x72xf32, #tpu.memory_space<vmem>>, %arg10: memref<1x64xf32, #tpu.memory_space<vmem>>, %arg11: memref<1x64xf32, #tpu.memory_space<vmem>>, %arg12: memref<1x16x64xf32, #tpu.memory_space<vmem>>, %arg13: memref<18x72xf32, #tpu.memory_space<vmem>>, %arg14: memref<18x72xf32, #tpu.memory_space<vmem>>) attributes {dimension_semantics = [#tpu.dimension_semantics<parallel>], iteration_bounds = array<i64: 2>, scalar_prefetch = 0 : i64, scratch_operands = 2 : i64, tpu.core_type = #tpu.core_type<tc>, window_params = [{transform_indices = @transform_0, window_bounds = array<i64: 1, 8, 32>}, {transform_indices = @transform_1, window_bounds = array<i64: 1, 18, 72>}, {pipeline_mode = #tpu.pipeline_mode<synchronous>, transform_indices = @transform_2, window_bounds = array<i64: 18, 8>}, {pipeline_mode = #tpu.pipeline_mode<synchronous>, transform_indices = @transform_3, window_bounds = array<i64: 32, 72>}, {pipeline_mode = #tpu.pipeline_mode<synchronous>, transform_indices = @transform_4, window_bounds = array<i64: 9, 64, 72>}, {pipeline_mode = #tpu.pipeline_mode<synchronous>, transform_indices = @transform_5, window_bounds = array<i64: 9, 64, 72>}, {pipeline_mode = #tpu.pipeline_mode<synchronous>, transform_indices = @transform_6, window_bounds = array<i64: 9, 64, 64>}, {pipeline_mode = #tpu.pipeline_mode<synchronous>, transform_indices = @transform_7, window_bounds = array<i64: 1, 72>}, {pipeline_mode = #tpu.pipeline_mode<synchronous>, transform_indices = @transform_8, window_bounds = array<i64: 1, 72>}, {pipeline_mode = #tpu.pipeline_mode<synchronous>, transform_indices = @transform_9, window_bounds = array<i64: 1, 64>}, {pipeline_mode = #tpu.pipeline_mode<synchronous>, transform_indices = @transform_10, window_bounds = array<i64: 1, 64>}, {transform_indices = @transform_11, window_bounds = array<i64: 1, 16, 64>}]} {
    %c0 = arith.constant 0 : index
    %c0_0 = arith.constant 0 : index
    %c0_1 = arith.constant 0 : index
    %0 = vector.load %arg1[%c0, %c0_0, %c0_1] : memref<1x8x32xf32, #tpu.memory_space<vmem>>, vector<1x8x32xf32>
    %1 = vector.shape_cast %0 : vector<1x8x32xf32> to vector<8x32xf32>
    %c0_2 = arith.constant 0 : index
    %c0_3 = arith.constant 0 : index
    %2 = vector.load %arg3[%c0_2, %c0_3] : memref<18x8xf32, #tpu.memory_space<vmem>>, vector<18x8xf32>
    %cst = arith.constant dense<0.000000e+00> : vector<18x32xf32>
    %3 = tpu.matmul %2, %1, %cst {dimension_numbers = #tpu.dot_dimension_numbers<[1], [0], [0], [1], [0, 0, 1, 1], [], []>} : vector<18x8xf32>, vector<8x32xf32>, vector<18x32xf32> -> vector<18x32xf32>
    %c0_4 = arith.constant 0 : index
    %c0_5 = arith.constant 0 : index
    %4 = vector.load %arg4[%c0_4, %c0_5] : memref<32x72xf32, #tpu.memory_space<vmem>>, vector<32x72xf32>
    %cst_6 = arith.constant dense<0.000000e+00> : vector<18x72xf32>
    %5 = tpu.matmul %3, %4, %cst_6 {dimension_numbers = #tpu.dot_dimension_numbers<[1], [0], [0], [1], [0, 0, 1, 1], [], []>} : vector<18x32xf32>, vector<32x72xf32>, vector<18x72xf32> -> vector<18x72xf32>
    %c0_7 = arith.constant 0 : index
    %c0_8 = arith.constant 0 : index
    %6 = vector.load %arg13[%c0_7, %c0_8] : memref<18x72xf32, #tpu.memory_space<vmem>>, vector<18x72xf32>
    tpu.vector_store %arg13[%c0_7, %c0_8], %5 {strides = array<i32>} : memref<18x72xf32, #tpu.memory_space<vmem>>, vector<18x72xf32>,
    %cst_9 = arith.constant 0.000000e+00 : f32
    %7 = vector.broadcast %cst_9 : f32 to vector<16x72xf32>
    %c0_10 = arith.constant 0 : index
    %c0_11 = arith.constant 0 : index
    %c0_12 = arith.constant 0 : index
    %8 = vector.load %arg2[%c0_10, %c0_11, %c0_12] : memref<1x18x72xf32, #tpu.memory_space<vmem>>, vector<1x16x64xf32>
    %9 = vector.shape_cast %8 : vector<1x16x64xf32> to vector<16x64xf32>
    %c0_13 = arith.constant 0 : index
    %c0_14 = arith.constant 0 : index
    %c0_15 = arith.constant 0 : index
    %10 = vector.load %arg5[%c0_13, %c0_14, %c0_15] : memref<9x64x72xf32, #tpu.memory_space<vmem>>, vector<1x64x72xf32>
    %11 = vector.shape_cast %10 : vector<1x64x72xf32> to vector<64x72xf32>
    %cst_16 = arith.constant dense<0.000000e+00> : vector<16x72xf32>
    %12 = tpu.matmul %9, %11, %cst_16 {dimension_numbers = #tpu.dot_dimension_numbers<[1], [0], [0], [1], [0, 0, 1, 1], [], []>} : vector<16x64xf32>, vector<64x72xf32>, vector<16x72xf32> -> vector<16x72xf32>
    %13 = arith.addf %7, %12 : vector<16x72xf32>
    %c0_17 = arith.constant 0 : index
    %c0_18 = arith.constant 0 : index
    %14 = vector.load %arg13[%c0_17, %c0_18] : memref<18x72xf32, #tpu.memory_space<vmem>>, vector<16x64xf32>
    %c0_19 = arith.constant 0 : index
    %c0_20 = arith.constant 0 : index
    %c0_21 = arith.constant 0 : index
    %15 = vector.load %arg6[%c0_19, %c0_20, %c0_21] : memref<9x64x72xf32, #tpu.memory_space<vmem>>, vector<1x64x72xf32>
    %16 = vector.shape_cast %15 : vector<1x64x72xf32> to vector<64x72xf32>
    %cst_22 = arith.constant dense<0.000000e+00> : vector<16x72xf32>
    %17 = tpu.matmul %14, %16, %cst_22 {dimension_numbers = #tpu.dot_dimension_numbers<[1], [0], [0], [1], [0, 0, 1, 1], [], []>} : vector<16x64xf32>, vector<64x72xf32>, vector<16x72xf32> -> vector<16x72xf32>
    %18 = arith.addf %13, %17 : vector<16x72xf32>
    %c0_23 = arith.constant 0 : index
    %c0_24 = arith.constant 0 : index
    %c4 = arith.constant 4 : index
    %19 = vector.load %arg2[%c0_23, %c0_24, %c4] : memref<1x18x72xf32, #tpu.memory_space<vmem>>, vector<1x16x64xf32>
    %20 = vector.shape_cast %19 : vector<1x16x64xf32> to vector<16x64xf32>
    %c1 = arith.constant 1 : index
    %c0_25 = arith.constant 0 : index
    %c0_26 = arith.constant 0 : index
    %21 = vector.load %arg5[%c1, %c0_25, %c0_26] : memref<9x64x72xf32, #tpu.memory_space<vmem>>, vector<1x64x72xf32>
    %22 = vector.shape_cast %21 : vector<1x64x72xf32> to vector<64x72xf32>
    %cst_27 = arith.constant dense<0.000000e+00> : vector<16x72xf32>
    %23 = tpu.matmul %20, %22, %cst_27 {dimension_numbers = #tpu.dot_dimension_numbers<[1], [0], [0], [1], [0, 0, 1, 1], [], []>} : vector<16x64xf32>, vector<64x72xf32>, vector<16x72xf32> -> vector<16x72xf32>
    %24 = arith.addf %18, %23 : vector<16x72xf32>
    %c0_28 = arith.constant 0 : index
    %c4_29 = arith.constant 4 : index
    %25 = vector.load %arg13[%c0_28, %c4_29] : memref<18x72xf32, #tpu.memory_space<vmem>>, vector<16x64xf32>
    %c1_30 = arith.constant 1 : index
    %c0_31 = arith.constant 0 : index
    %c0_32 = arith.constant 0 : index
    %26 = vector.load %arg6[%c1_30, %c0_31, %c0_32] : memref<9x64x72xf32, #tpu.memory_space<vmem>>, vector<1x64x72xf32>
    %27 = vector.shape_cast %26 : vector<1x64x72xf32> to vector<64x72xf32>
    %cst_33 = arith.constant dense<0.000000e+00> : vector<16x72xf32>
    %28 = tpu.matmul %25, %27, %cst_33 {dimension_numbers = #tpu.dot_dimension_numbers<[1], [0], [0], [1], [0, 0, 1, 1], [], []>} : vector<16x64xf32>, vector<64x72xf32>, vector<16x72xf32> -> vector<16x72xf32>
    %29 = arith.addf %24, %28 : vector<16x72xf32>
    %c0_34 = arith.constant 0 : index
    %c0_35 = arith.constant 0 : index
    %c8 = arith.constant 8 : index
    %30 = vector.load %arg2[%c0_34, %c0_35, %c8] : memref<1x18x72xf32, #tpu.memory_space<vmem>>, vector<1x16x64xf32>
    %31 = vector.shape_cast %30 : vector<1x16x64xf32> to vector<16x64xf32>
    %c2 = arith.constant 2 : index
    %c0_36 = arith.constant 0 : index
    %c0_37 = arith.constant 0 : index
    %32 = vector.load %arg5[%c2, %c0_36, %c0_37] : memref<9x64x72xf32, #tpu.memory_space<vmem>>, vector<1x64x72xf32>
    %33 = vector.shape_cast %32 : vector<1x64x72xf32> to vector<64x72xf32>
    %cst_38 = arith.constant dense<0.000000e+00> : vector<16x72xf32>
    %34 = tpu.matmul %31, %33, %cst_38 {dimension_numbers = #tpu.dot_dimension_numbers<[1], [0], [0], [1], [0, 0, 1, 1], [], []>} : vector<16x64xf32>, vector<64x72xf32>, vector<16x72xf32> -> vector<16x72xf32>
    %35 = arith.addf %29, %34 : vector<16x72xf32>
    %c0_39 = arith.constant 0 : index
    %c8_40 = arith.constant 8 : index
    %36 = vector.load %arg13[%c0_39, %c8_40] : memref<18x72xf32, #tpu.memory_space<vmem>>, vector<16x64xf32>
    %c2_41 = arith.constant 2 : index
    %c0_42 = arith.constant 0 : index
    %c0_43 = arith.constant 0 : index
    %37 = vector.load %arg6[%c2_41, %c0_42, %c0_43] : memref<9x64x72xf32, #tpu.memory_space<vmem>>, vector<1x64x72xf32>
    %38 = vector.shape_cast %37 : vector<1x64x72xf32> to vector<64x72xf32>
    %cst_44 = arith.constant dense<0.000000e+00> : vector<16x72xf32>
    %39 = tpu.matmul %36, %38, %cst_44 {dimension_numbers = #tpu.dot_dimension_numbers<[1], [0], [0], [1], [0, 0, 1, 1], [], []>} : vector<16x64xf32>, vector<64x72xf32>, vector<16x72xf32> -> vector<16x72xf32>
    %40 = arith.addf %35, %39 : vector<16x72xf32>
    %c0_45 = arith.constant 0 : index
    %c1_46 = arith.constant 1 : index
    %c0_47 = arith.constant 0 : index
    %41 = vector.load %arg2[%c0_45, %c1_46, %c0_47] : memref<1x18x72xf32, #tpu.memory_space<vmem>>, vector<1x16x64xf32>
    %42 = vector.shape_cast %41 : vector<1x16x64xf32> to vector<16x64xf32>
    %c3 = arith.constant 3 : index
    %c0_48 = arith.constant 0 : index
    %c0_49 = arith.constant 0 : index
    %43 = vector.load %arg5[%c3, %c0_48, %c0_49] : memref<9x64x72xf32, #tpu.memory_space<vmem>>, vector<1x64x72xf32>
    %44 = vector.shape_cast %43 : vector<1x64x72xf32> to vector<64x72xf32>
    %cst_50 = arith.constant dense<0.000000e+00> : vector<16x72xf32>
    %45 = tpu.matmul %42, %44, %cst_50 {dimension_numbers = #tpu.dot_dimension_numbers<[1], [0], [0], [1], [0, 0, 1, 1], [], []>} : vector<16x64xf32>, vector<64x72xf32>, vector<16x72xf32> -> vector<16x72xf32>
    %46 = arith.addf %40, %45 : vector<16x72xf32>
    %c1_51 = arith.constant 1 : index
    %c0_52 = arith.constant 0 : index
    %47 = vector.load %arg13[%c1_51, %c0_52] : memref<18x72xf32, #tpu.memory_space<vmem>>, vector<16x64xf32>
    %c3_53 = arith.constant 3 : index
    %c0_54 = arith.constant 0 : index
    %c0_55 = arith.constant 0 : index
    %48 = vector.load %arg6[%c3_53, %c0_54, %c0_55] : memref<9x64x72xf32, #tpu.memory_space<vmem>>, vector<1x64x72xf32>
    %49 = vector.shape_cast %48 : vector<1x64x72xf32> to vector<64x72xf32>
    %cst_56 = arith.constant dense<0.000000e+00> : vector<16x72xf32>
    %50 = tpu.matmul %47, %49, %cst_56 {dimension_numbers = #tpu.dot_dimension_numbers<[1], [0], [0], [1], [0, 0, 1, 1], [], []>} : vector<16x64xf32>, vector<64x72xf32>, vector<16x72xf32> -> vector<16x72xf32>
    %51 = arith.addf %46, %50 : vector<16x72xf32>
    %c0_57 = arith.constant 0 : index
    %c1_58 = arith.constant 1 : index
    %c4_59 = arith.constant 4 : index
    %52 = vector.load %arg2[%c0_57, %c1_58, %c4_59] : memref<1x18x72xf32, #tpu.memory_space<vmem>>, vector<1x16x64xf32>
    %53 = vector.shape_cast %52 : vector<1x16x64xf32> to vector<16x64xf32>
    %c4_60 = arith.constant 4 : index
    %c0_61 = arith.constant 0 : index
    %c0_62 = arith.constant 0 : index
    %54 = vector.load %arg5[%c4_60, %c0_61, %c0_62] : memref<9x64x72xf32, #tpu.memory_space<vmem>>, vector<1x64x72xf32>
    %55 = vector.shape_cast %54 : vector<1x64x72xf32> to vector<64x72xf32>
    %cst_63 = arith.constant dense<0.000000e+00> : vector<16x72xf32>
    %56 = tpu.matmul %53, %55, %cst_63 {dimension_numbers = #tpu.dot_dimension_numbers<[1], [0], [0], [1], [0, 0, 1, 1], [], []>} : vector<16x64xf32>, vector<64x72xf32>, vector<16x72xf32> -> vector<16x72xf32>
    %57 = arith.addf %51, %56 : vector<16x72xf32>
    %c1_64 = arith.constant 1 : index
    %c4_65 = arith.constant 4 : index
    %58 = vector.load %arg13[%c1_64, %c4_65] : memref<18x72xf32, #tpu.memory_space<vmem>>, vector<16x64xf32>
    %c4_66 = arith.constant 4 : index
    %c0_67 = arith.constant 0 : index
    %c0_68 = arith.constant 0 : index
    %59 = vector.load %arg6[%c4_66, %c0_67, %c0_68] : memref<9x64x72xf32, #tpu.memory_space<vmem>>, vector<1x64x72xf32>
    %60 = vector.shape_cast %59 : vector<1x64x72xf32> to vector<64x72xf32>
    %cst_69 = arith.constant dense<0.000000e+00> : vector<16x72xf32>
    %61 = tpu.matmul %58, %60, %cst_69 {dimension_numbers = #tpu.dot_dimension_numbers<[1], [0], [0], [1], [0, 0, 1, 1], [], []>} : vector<16x64xf32>, vector<64x72xf32>, vector<16x72xf32> -> vector<16x72xf32>
    %62 = arith.addf %57, %61 : vector<16x72xf32>
    %c0_70 = arith.constant 0 : index
    %c1_71 = arith.constant 1 : index
    %c8_72 = arith.constant 8 : index
    %63 = vector.load %arg2[%c0_70, %c1_71, %c8_72] : memref<1x18x72xf32, #tpu.memory_space<vmem>>, vector<1x16x64xf32>
    %64 = vector.shape_cast %63 : vector<1x16x64xf32> to vector<16x64xf32>
    %c5 = arith.constant 5 : index
    %c0_73 = arith.constant 0 : index
    %c0_74 = arith.constant 0 : index
    %65 = vector.load %arg5[%c5, %c0_73, %c0_74] : memref<9x64x72xf32, #tpu.memory_space<vmem>>, vector<1x64x72xf32>
    %66 = vector.shape_cast %65 : vector<1x64x72xf32> to vector<64x72xf32>
    %cst_75 = arith.constant dense<0.000000e+00> : vector<16x72xf32>
    %67 = tpu.matmul %64, %66, %cst_75 {dimension_numbers = #tpu.dot_dimension_numbers<[1], [0], [0], [1], [0, 0, 1, 1], [], []>} : vector<16x64xf32>, vector<64x72xf32>, vector<16x72xf32> -> vector<16x72xf32>
    %68 = arith.addf %62, %67 : vector<16x72xf32>
    %c1_76 = arith.constant 1 : index
    %c8_77 = arith.constant 8 : index
    %69 = vector.load %arg13[%c1_76, %c8_77] : memref<18x72xf32, #tpu.memory_space<vmem>>, vector<16x64xf32>
    %c5_78 = arith.constant 5 : index
    %c0_79 = arith.constant 0 : index
    %c0_80 = arith.constant 0 : index
    %70 = vector.load %arg6[%c5_78, %c0_79, %c0_80] : memref<9x64x72xf32, #tpu.memory_space<vmem>>, vector<1x64x72xf32>
    %71 = vector.shape_cast %70 : vector<1x64x72xf32> to vector<64x72xf32>
    %cst_81 = arith.constant dense<0.000000e+00> : vector<16x72xf32>
    %72 = tpu.matmul %69, %71, %cst_81 {dimension_numbers = #tpu.dot_dimension_numbers<[1], [0], [0], [1], [0, 0, 1, 1], [], []>} : vector<16x64xf32>, vector<64x72xf32>, vector<16x72xf32> -> vector<16x72xf32>
    %73 = arith.addf %68, %72 : vector<16x72xf32>
    %c0_82 = arith.constant 0 : index
    %c2_83 = arith.constant 2 : index
    %c0_84 = arith.constant 0 : index
    %74 = vector.load %arg2[%c0_82, %c2_83, %c0_84] : memref<1x18x72xf32, #tpu.memory_space<vmem>>, vector<1x16x64xf32>
    %75 = vector.shape_cast %74 : vector<1x16x64xf32> to vector<16x64xf32>
    %c6 = arith.constant 6 : index
    %c0_85 = arith.constant 0 : index
    %c0_86 = arith.constant 0 : index
    %76 = vector.load %arg5[%c6, %c0_85, %c0_86] : memref<9x64x72xf32, #tpu.memory_space<vmem>>, vector<1x64x72xf32>
    %77 = vector.shape_cast %76 : vector<1x64x72xf32> to vector<64x72xf32>
    %cst_87 = arith.constant dense<0.000000e+00> : vector<16x72xf32>
    %78 = tpu.matmul %75, %77, %cst_87 {dimension_numbers = #tpu.dot_dimension_numbers<[1], [0], [0], [1], [0, 0, 1, 1], [], []>} : vector<16x64xf32>, vector<64x72xf32>, vector<16x72xf32> -> vector<16x72xf32>
    %79 = arith.addf %73, %78 : vector<16x72xf32>
    %c2_88 = arith.constant 2 : index
    %c0_89 = arith.constant 0 : index
    %80 = vector.load %arg13[%c2_88, %c0_89] : memref<18x72xf32, #tpu.memory_space<vmem>>, vector<16x64xf32>
    %c6_90 = arith.constant 6 : index
    %c0_91 = arith.constant 0 : index
    %c0_92 = arith.constant 0 : index
    %81 = vector.load %arg6[%c6_90, %c0_91, %c0_92] : memref<9x64x72xf32, #tpu.memory_space<vmem>>, vector<1x64x72xf32>
    %82 = vector.shape_cast %81 : vector<1x64x72xf32> to vector<64x72xf32>
    %cst_93 = arith.constant dense<0.000000e+00> : vector<16x72xf32>
    %83 = tpu.matmul %80, %82, %cst_93 {dimension_numbers = #tpu.dot_dimension_numbers<[1], [0], [0], [1], [0, 0, 1, 1], [], []>} : vector<16x64xf32>, vector<64x72xf32>, vector<16x72xf32> -> vector<16x72xf32>
    %84 = arith.addf %79, %83 : vector<16x72xf32>
    %c0_94 = arith.constant 0 : index
    %c2_95 = arith.constant 2 : index
    %c4_96 = arith.constant 4 : index
    %85 = vector.load %arg2[%c0_94, %c2_95, %c4_96] : memref<1x18x72xf32, #tpu.memory_space<vmem>>, vector<1x16x64xf32>
    %86 = vector.shape_cast %85 : vector<1x16x64xf32> to vector<16x64xf32>
    %c7 = arith.constant 7 : index
    %c0_97 = arith.constant 0 : index
    %c0_98 = arith.constant 0 : index
    %87 = vector.load %arg5[%c7, %c0_97, %c0_98] : memref<9x64x72xf32, #tpu.memory_space<vmem>>, vector<1x64x72xf32>
    %88 = vector.shape_cast %87 : vector<1x64x72xf32> to vector<64x72xf32>
    %cst_99 = arith.constant dense<0.000000e+00> : vector<16x72xf32>
    %89 = tpu.matmul %86, %88, %cst_99 {dimension_numbers = #tpu.dot_dimension_numbers<[1], [0], [0], [1], [0, 0, 1, 1], [], []>} : vector<16x64xf32>, vector<64x72xf32>, vector<16x72xf32> -> vector<16x72xf32>
    %90 = arith.addf %84, %89 : vector<16x72xf32>
    %c2_100 = arith.constant 2 : index
    %c4_101 = arith.constant 4 : index
    %91 = vector.load %arg13[%c2_100, %c4_101] : memref<18x72xf32, #tpu.memory_space<vmem>>, vector<16x64xf32>
    %c7_102 = arith.constant 7 : index
    %c0_103 = arith.constant 0 : index
    %c0_104 = arith.constant 0 : index
    %92 = vector.load %arg6[%c7_102, %c0_103, %c0_104] : memref<9x64x72xf32, #tpu.memory_space<vmem>>, vector<1x64x72xf32>
    %93 = vector.shape_cast %92 : vector<1x64x72xf32> to vector<64x72xf32>
    %cst_105 = arith.constant dense<0.000000e+00> : vector<16x72xf32>
    %94 = tpu.matmul %91, %93, %cst_105 {dimension_numbers = #tpu.dot_dimension_numbers<[1], [0], [0], [1], [0, 0, 1, 1], [], []>} : vector<16x64xf32>, vector<64x72xf32>, vector<16x72xf32> -> vector<16x72xf32>
    %95 = arith.addf %90, %94 : vector<16x72xf32>
    %c0_106 = arith.constant 0 : index
    %c2_107 = arith.constant 2 : index
    %c8_108 = arith.constant 8 : index
    %96 = vector.load %arg2[%c0_106, %c2_107, %c8_108] : memref<1x18x72xf32, #tpu.memory_space<vmem>>, vector<1x16x64xf32>
    %97 = vector.shape_cast %96 : vector<1x16x64xf32> to vector<16x64xf32>
    %c8_109 = arith.constant 8 : index
    %c0_110 = arith.constant 0 : index
    %c0_111 = arith.constant 0 : index
    %98 = vector.load %arg5[%c8_109, %c0_110, %c0_111] : memref<9x64x72xf32, #tpu.memory_space<vmem>>, vector<1x64x72xf32>
    %99 = vector.shape_cast %98 : vector<1x64x72xf32> to vector<64x72xf32>
    %cst_112 = arith.constant dense<0.000000e+00> : vector<16x72xf32>
    %100 = tpu.matmul %97, %99, %cst_112 {dimension_numbers = #tpu.dot_dimension_numbers<[1], [0], [0], [1], [0, 0, 1, 1], [], []>} : vector<16x64xf32>, vector<64x72xf32>, vector<16x72xf32> -> vector<16x72xf32>
    %101 = arith.addf %95, %100 : vector<16x72xf32>
    %c2_113 = arith.constant 2 : index
    %c8_114 = arith.constant 8 : index
    %102 = vector.load %arg13[%c2_113, %c8_114] : memref<18x72xf32, #tpu.memory_space<vmem>>, vector<16x64xf32>
    %c8_115 = arith.constant 8 : index
    %c0_116 = arith.constant 0 : index
    %c0_117 = arith.constant 0 : index
    %103 = vector.load %arg6[%c8_115, %c0_116, %c0_117] : memref<9x64x72xf32, #tpu.memory_space<vmem>>, vector<1x64x72xf32>
    %104 = vector.shape_cast %103 : vector<1x64x72xf32> to vector<64x72xf32>
    %cst_118 = arith.constant dense<0.000000e+00> : vector<16x72xf32>
    %105 = tpu.matmul %102, %104, %cst_118 {dimension_numbers = #tpu.dot_dimension_numbers<[1], [0], [0], [1], [0, 0, 1, 1], [], []>} : vector<16x64xf32>, vector<64x72xf32>, vector<16x72xf32> -> vector<16x72xf32>
    %106 = arith.addf %101, %105 : vector<16x72xf32>
    %c0_119 = arith.constant 0 : index
    %c0_120 = arith.constant 0 : index
    %107 = vector.load %arg8[%c0_119, %c0_120] : memref<1x72xf32, #tpu.memory_space<vmem>>, vector<1x72xf32>
    %108 = vector.broadcast %107 : vector<1x72xf32> to vector<16x72xf32>
    %109 = arith.mulf %106, %108 : vector<16x72xf32>
    %c0_121 = arith.constant 0 : index
    %c0_122 = arith.constant 0 : index
    %110 = vector.load %arg9[%c0_121, %c0_122] : memref<1x72xf32, #tpu.memory_space<vmem>>, vector<1x72xf32>
    %111 = vector.broadcast %110 : vector<1x72xf32> to vector<16x72xf32>
    %112 = arith.addf %109, %111 : vector<16x72xf32>
    %cst_123 = arith.constant 0.000000e+00 : f32
    %113 = vector.broadcast %cst_123 : f32 to vector<16x72xf32>
    %114 = arith.maximumf %112, %113 : vector<16x72xf32>
    %cst_124 = arith.constant 0.000000e+00 : f32
    %115 = vector.broadcast %cst_124 : f32 to vector<18x72xf32>
    %c0_125 = arith.constant 0 : index
    %c0_126 = arith.constant 0 : index
    %116 = vector.load %arg14[%c0_125, %c0_126] : memref<18x72xf32, #tpu.memory_space<vmem>>, vector<18x72xf32>
    tpu.vector_store %arg14[%c0_125, %c0_126], %115 {strides = array<i32>} : memref<18x72xf32, #tpu.memory_space<vmem>>, vector<18x72xf32>,
    %c1_127 = arith.constant 1 : index
    %c0_128 = arith.constant 0 : index
    %117 = vector.load %arg14[%c1_127, %c0_128] : memref<18x72xf32, #tpu.memory_space<vmem>>, vector<16x72xf32>
    tpu.vector_store %arg14[%c1_127, %c0_128], %114 {strides = array<i32>} : memref<18x72xf32, #tpu.memory_space<vmem>>, vector<16x72xf32>,
    %cst_129 = arith.constant 0.000000e+00 : f32
    %118 = vector.broadcast %cst_129 : f32 to vector<16x64xf32>
    %c0_130 = arith.constant 0 : index
    %c0_131 = arith.constant 0 : index
    %119 = vector.load %arg14[%c0_130, %c0_131] : memref<18x72xf32, #tpu.memory_space<vmem>>, vector<16x64xf32>
    %c0_132 = arith.constant 0 : index
    %c0_133 = arith.constant 0 : index
    %c0_134 = arith.constant 0 : index
    %120 = vector.load %arg7[%c0_132, %c0_133, %c0_134] : memref<9x64x64xf32, #tpu.memory_space<vmem>>, vector<1x64x64xf32>
    %121 = vector.shape_cast %120 : vector<1x64x64xf32> to vector<64x64xf32>
    %cst_135 = arith.constant dense<0.000000e+00> : vector<16x64xf32>
    %122 = tpu.matmul %119, %121, %cst_135 {dimension_numbers = #tpu.dot_dimension_numbers<[1], [0], [0], [1], [0, 0, 1, 1], [], []>} : vector<16x64xf32>, vector<64x64xf32>, vector<16x64xf32> -> vector<16x64xf32>
    %123 = arith.addf %118, %122 : vector<16x64xf32>
    %c0_136 = arith.constant 0 : index
    %c4_137 = arith.constant 4 : index
    %124 = vector.load %arg14[%c0_136, %c4_137] : memref<18x72xf32, #tpu.memory_space<vmem>>, vector<16x64xf32>
    %c1_138 = arith.constant 1 : index
    %c0_139 = arith.constant 0 : index
    %c0_140 = arith.constant 0 : index
    %125 = vector.load %arg7[%c1_138, %c0_139, %c0_140] : memref<9x64x64xf32, #tpu.memory_space<vmem>>, vector<1x64x64xf32>
    %126 = vector.shape_cast %125 : vector<1x64x64xf32> to vector<64x64xf32>
    %cst_141 = arith.constant dense<0.000000e+00> : vector<16x64xf32>
    %127 = tpu.matmul %124, %126, %cst_141 {dimension_numbers = #tpu.dot_dimension_numbers<[1], [0], [0], [1], [0, 0, 1, 1], [], []>} : vector<16x64xf32>, vector<64x64xf32>, vector<16x64xf32> -> vector<16x64xf32>
    %128 = arith.addf %123, %127 : vector<16x64xf32>
    %c0_142 = arith.constant 0 : index
    %c8_143 = arith.constant 8 : index
    %129 = vector.load %arg14[%c0_142, %c8_143] : memref<18x72xf32, #tpu.memory_space<vmem>>, vector<16x64xf32>
    %c2_144 = arith.constant 2 : index
    %c0_145 = arith.constant 0 : index
    %c0_146 = arith.constant 0 : index
    %130 = vector.load %arg7[%c2_144, %c0_145, %c0_146] : memref<9x64x64xf32, #tpu.memory_space<vmem>>, vector<1x64x64xf32>
    %131 = vector.shape_cast %130 : vector<1x64x64xf32> to vector<64x64xf32>
    %cst_147 = arith.constant dense<0.000000e+00> : vector<16x64xf32>
    %132 = tpu.matmul %129, %131, %cst_147 {dimension_numbers = #tpu.dot_dimension_numbers<[1], [0], [0], [1], [0, 0, 1, 1], [], []>} : vector<16x64xf32>, vector<64x64xf32>, vector<16x64xf32> -> vector<16x64xf32>
    %133 = arith.addf %128, %132 : vector<16x64xf32>
    %c1_148 = arith.constant 1 : index
    %c0_149 = arith.constant 0 : index
    %134 = vector.load %arg14[%c1_148, %c0_149] : memref<18x72xf32, #tpu.memory_space<vmem>>, vector<16x64xf32>
    %c3_150 = arith.constant 3 : index
    %c0_151 = arith.constant 0 : index
    %c0_152 = arith.constant 0 : index
    %135 = vector.load %arg7[%c3_150, %c0_151, %c0_152] : memref<9x64x64xf32, #tpu.memory_space<vmem>>, vector<1x64x64xf32>
    %136 = vector.shape_cast %135 : vector<1x64x64xf32> to vector<64x64xf32>
    %cst_153 = arith.constant dense<0.000000e+00> : vector<16x64xf32>
    %137 = tpu.matmul %134, %136, %cst_153 {dimension_numbers = #tpu.dot_dimension_numbers<[1], [0], [0], [1], [0, 0, 1, 1], [], []>} : vector<16x64xf32>, vector<64x64xf32>, vector<16x64xf32> -> vector<16x64xf32>
    %138 = arith.addf %133, %137 : vector<16x64xf32>
    %c1_154 = arith.constant 1 : index
    %c4_155 = arith.constant 4 : index
    %139 = vector.load %arg14[%c1_154, %c4_155] : memref<18x72xf32, #tpu.memory_space<vmem>>, vector<16x64xf32>
    %c4_156 = arith.constant 4 : index
    %c0_157 = arith.constant 0 : index
    %c0_158 = arith.constant 0 : index
    %140 = vector.load %arg7[%c4_156, %c0_157, %c0_158] : memref<9x64x64xf32, #tpu.memory_space<vmem>>, vector<1x64x64xf32>
    %141 = vector.shape_cast %140 : vector<1x64x64xf32> to vector<64x64xf32>
    %cst_159 = arith.constant dense<0.000000e+00> : vector<16x64xf32>
    %142 = tpu.matmul %139, %141, %cst_159 {dimension_numbers = #tpu.dot_dimension_numbers<[1], [0], [0], [1], [0, 0, 1, 1], [], []>} : vector<16x64xf32>, vector<64x64xf32>, vector<16x64xf32> -> vector<16x64xf32>
    %143 = arith.addf %138, %142 : vector<16x64xf32>
    %c1_160 = arith.constant 1 : index
    %c8_161 = arith.constant 8 : index
    %144 = vector.load %arg14[%c1_160, %c8_161] : memref<18x72xf32, #tpu.memory_space<vmem>>, vector<16x64xf32>
    %c5_162 = arith.constant 5 : index
    %c0_163 = arith.constant 0 : index
    %c0_164 = arith.constant 0 : index
    %145 = vector.load %arg7[%c5_162, %c0_163, %c0_164] : memref<9x64x64xf32, #tpu.memory_space<vmem>>, vector<1x64x64xf32>
    %146 = vector.shape_cast %145 : vector<1x64x64xf32> to vector<64x64xf32>
    %cst_165 = arith.constant dense<0.000000e+00> : vector<16x64xf32>
    %147 = tpu.matmul %144, %146, %cst_165 {dimension_numbers = #tpu.dot_dimension_numbers<[1], [0], [0], [1], [0, 0, 1, 1], [], []>} : vector<16x64xf32>, vector<64x64xf32>, vector<16x64xf32> -> vector<16x64xf32>
    %148 = arith.addf %143, %147 : vector<16x64xf32>
    %c2_166 = arith.constant 2 : index
    %c0_167 = arith.constant 0 : index
    %149 = vector.load %arg14[%c2_166, %c0_167] : memref<18x72xf32, #tpu.memory_space<vmem>>, vector<16x64xf32>
    %c6_168 = arith.constant 6 : index
    %c0_169 = arith.constant 0 : index
    %c0_170 = arith.constant 0 : index
    %150 = vector.load %arg7[%c6_168, %c0_169, %c0_170] : memref<9x64x64xf32, #tpu.memory_space<vmem>>, vector<1x64x64xf32>
    %151 = vector.shape_cast %150 : vector<1x64x64xf32> to vector<64x64xf32>
    %cst_171 = arith.constant dense<0.000000e+00> : vector<16x64xf32>
    %152 = tpu.matmul %149, %151, %cst_171 {dimension_numbers = #tpu.dot_dimension_numbers<[1], [0], [0], [1], [0, 0, 1, 1], [], []>} : vector<16x64xf32>, vector<64x64xf32>, vector<16x64xf32> -> vector<16x64xf32>
    %153 = arith.addf %148, %152 : vector<16x64xf32>
    %c2_172 = arith.constant 2 : index
    %c4_173 = arith.constant 4 : index
    %154 = vector.load %arg14[%c2_172, %c4_173] : memref<18x72xf32, #tpu.memory_space<vmem>>, vector<16x64xf32>
    %c7_174 = arith.constant 7 : index
    %c0_175 = arith.constant 0 : index
    %c0_176 = arith.constant 0 : index
    %155 = vector.load %arg7[%c7_174, %c0_175, %c0_176] : memref<9x64x64xf32, #tpu.memory_space<vmem>>, vector<1x64x64xf32>
    %156 = vector.shape_cast %155 : vector<1x64x64xf32> to vector<64x64xf32>
    %cst_177 = arith.constant dense<0.000000e+00> : vector<16x64xf32>
    %157 = tpu.matmul %154, %156, %cst_177 {dimension_numbers = #tpu.dot_dimension_numbers<[1], [0], [0], [1], [0, 0, 1, 1], [], []>} : vector<16x64xf32>, vector<64x64xf32>, vector<16x64xf32> -> vector<16x64xf32>
    %158 = arith.addf %153, %157 : vector<16x64xf32>
    %c2_178 = arith.constant 2 : index
    %c8_179 = arith.constant 8 : index
    %159 = vector.load %arg14[%c2_178, %c8_179] : memref<18x72xf32, #tpu.memory_space<vmem>>, vector<16x64xf32>
    %c8_180 = arith.constant 8 : index
    %c0_181 = arith.constant 0 : index
    %c0_182 = arith.constant 0 : index
    %160 = vector.load %arg7[%c8_180, %c0_181, %c0_182] : memref<9x64x64xf32, #tpu.memory_space<vmem>>, vector<1x64x64xf32>
    %161 = vector.shape_cast %160 : vector<1x64x64xf32> to vector<64x64xf32>
    %cst_183 = arith.constant dense<0.000000e+00> : vector<16x64xf32>
    %162 = tpu.matmul %159, %161, %cst_183 {dimension_numbers = #tpu.dot_dimension_numbers<[1], [0], [0], [1], [0, 0, 1, 1], [], []>} : vector<16x64xf32>, vector<64x64xf32>, vector<16x64xf32> -> vector<16x64xf32>
    %163 = arith.addf %158, %162 : vector<16x64xf32>
    %c0_184 = arith.constant 0 : index
    %c0_185 = arith.constant 0 : index
    %164 = vector.load %arg10[%c0_184, %c0_185] : memref<1x64xf32, #tpu.memory_space<vmem>>, vector<1x64xf32>
    %165 = vector.broadcast %164 : vector<1x64xf32> to vector<16x64xf32>
    %166 = arith.mulf %163, %165 : vector<16x64xf32>
    %c0_186 = arith.constant 0 : index
    %c0_187 = arith.constant 0 : index
    %167 = vector.load %arg11[%c0_186, %c0_187] : memref<1x64xf32, #tpu.memory_space<vmem>>, vector<1x64xf32>
    %168 = vector.broadcast %167 : vector<1x64xf32> to vector<16x64xf32>
    %169 = arith.addf %166, %168 : vector<16x64xf32>
    %cst_188 = arith.constant 0.000000e+00 : f32
    %170 = vector.broadcast %cst_188 : f32 to vector<16x64xf32>
    %171 = arith.maximumf %169, %170 : vector<16x64xf32>
    %c0_189 = arith.constant 0 : index
    %c0_190 = arith.constant 0 : index
    %c0_191 = arith.constant 0 : index
    %172 = vector.load %arg12[%c0_189, %c0_190, %c0_191] : memref<1x16x64xf32, #tpu.memory_space<vmem>>, vector<1x16x64xf32>
    %173 = vector.shape_cast %172 : vector<1x16x64xf32> to vector<16x64xf32>
    %174 = vector.shape_cast %171 : vector<16x64xf32> to vector<1x16x64xf32>
    tpu.vector_store %arg12[%c0_189, %c0_190, %c0_191], %174 {strides = array<i32>} : memref<1x16x64xf32, #tpu.memory_space<vmem>>, vector<1x16x64xf32>,
    return
  }
  func.func @transform_0(%arg0: i32) -> (i32, i32, i32) {
    %c0_i32 = arith.constant 0 : i32
    %c0_i32_0 = arith.constant 0 : i32
    %c0_i32_1 = arith.constant 0 : i32
    return %arg0, %c0_i32, %c0_i32_0 : i32, i32, i32
  }
  func.func @transform_1(%arg0: i32) -> (i32, i32, i32) {
    %c0_i32 = arith.constant 0 : i32
    %c0_i32_0 = arith.constant 0 : i32
    %c0_i32_1 = arith.constant 0 : i32
    return %arg0, %c0_i32, %c0_i32_0 : i32, i32, i32
  }
  func.func @transform_2(%arg0: i32) -> (i32, i32) {
    %c0_i32 = arith.constant 0 : i32
    %c0_i32_0 = arith.constant 0 : i32
    %c0_i32_1 = arith.constant 0 : i32
    return %c0_i32, %c0_i32_0 : i32, i32
  }
  func.func @transform_3(%arg0: i32) -> (i32, i32) {
    %c0_i32 = arith.constant 0 : i32
    %c0_i32_0 = arith.constant 0 : i32
    %c0_i32_1 = arith.constant 0 : i32
    return %c0_i32, %c0_i32_0 : i32, i32
  }
  func.func @transform_4(%arg0: i32) -> (i32, i32, i32) {
    %c0_i32 = arith.constant 0 : i32
    %c0_i32_0 = arith.constant 0 : i32
    %c0_i32_1 = arith.constant 0 : i32
    %c0_i32_2 = arith.constant 0 : i32
    return %c0_i32, %c0_i32_0, %c0_i32_1 : i32, i32, i32
  }
  func.func @transform_5(%arg0: i32) -> (i32, i32, i32) {
    %c0_i32 = arith.constant 0 : i32
    %c0_i32_0 = arith.constant 0 : i32
    %c0_i32_1 = arith.constant 0 : i32
    %c0_i32_2 = arith.constant 0 : i32
    return %c0_i32, %c0_i32_0, %c0_i32_1 : i32, i32, i32
  }
  func.func @transform_6(%arg0: i32) -> (i32, i32, i32) {
    %c0_i32 = arith.constant 0 : i32
    %c0_i32_0 = arith.constant 0 : i32
    %c0_i32_1 = arith.constant 0 : i32
    %c0_i32_2 = arith.constant 0 : i32
    return %c0_i32, %c0_i32_0, %c0_i32_1 : i32, i32, i32
  }
  func.func @transform_7(%arg0: i32) -> (i32, i32) {
    %c0_i32 = arith.constant 0 : i32
    %c0_i32_0 = arith.constant 0 : i32
    %c0_i32_1 = arith.constant 0 : i32
    return %c0_i32, %c0_i32_0 : i32, i32
  }
  func.func @transform_8(%arg0: i32) -> (i32, i32) {
    %c0_i32 = arith.constant 0 : i32
    %c0_i32_0 = arith.constant 0 : i32
    %c0_i32_1 = arith.constant 0 : i32
    return %c0_i32, %c0_i32_0 : i32, i32
  }
  func.func @transform_9(%arg0: i32) -> (i32, i32) {
    %c0_i32 = arith.constant 0 : i32
    %c0_i32_0 = arith.constant 0 : i32
    %c0_i32_1 = arith.constant 0 : i32
    return %c0_i32, %c0_i32_0 : i32, i32
  }
  func.func @transform_10(%arg0: i32) -> (i32, i32) {
    %c0_i32 = arith.constant 0 : i32
    %c0_i32_0 = arith.constant 0 : i32
    %c0_i32_1 = arith.constant 0 : i32
    return %c0_i32, %c0_i32_0 : i32, i32
  }
  func.func @transform_11(%arg0: i32) -> (i32, i32, i32) {
    %c0_i32 = arith.constant 0 : i32
    %c0_i32_0 = arith.constant 0 : i32
    %c0_i32_1 = arith.constant 0 : i32
    return %arg0, %c0_i32, %c0_i32_0 : i32, i32, i32
  }
}

</mosaic_0001>

<llo_original>
// kernel: tile.28
$region0: #{tile.28}
  #allocation0 [shape = 's32[1]{0}', space=sflag, size = 0x4, scoped, tag = 'scoped memory for tile.28']
  %s0 = inlined_call_operand.vmem [shape: f32[4], index: 0, kind: input, shape index: {}]
  %s1 = inlined_call_operand.vmem [shape: f32[16,4], index: 1, kind: output, shape index: {}]
  // Predicated region
  $region2: #{tile.28} parent=0 // pred_check
    _
  $region3: #{tile.28} parent=0 // pred_check_branch
    %3 = sbr.rel (0) target = $region5
  $region4: #{tile.28} parent=0 // pred_region
    _
  $region5: #{tile.28} parent=0 // pred_fallthru
    _
  %v4 = vld [vmem:[%s0] ss:$0 sm:$0xff]
  %5 = vst [vmem:[%s1] sm:$0xff] %v4
  %s6 = scalar_lea.vmem %s1, 8
  %7 = vst [vmem:[%s6] sm:$0xff] %v4

// kernel: tile.29
$region0: #{tile.29}
  %s0 = inlined_call_operand.vmem [shape: f32[16,4], index: 0, kind: input, shape index: {}]
  %s1 = inlined_call_operand.vmem [shape: f32[64], index: 1, kind: output, shape index: {}]
  $region1: #{tile.29} parent=0
    #allocation0 [shape = 'u8[4096]{0}', space=vmem, size = 0x1000, scoped, tag = 'scoped mem for output reshape']
    %v2 = vld [vmem:[%s0] sm:$0x1]
    %vm3 = vcmask 31744
    %4 = vst.msk [vmem:[#allocation0] sm:$0x1] %vm3, %v2
    %s5 = scalar_lea.vmem %s0, 15
    %v6 = vld [vmem:[%s5] sm:$0x1]
    %7 = vrot.lane.b32.xlu0 %v6, 60
    %v8 = vpop.permute.xlu0 %7
    %vm9 = vcmask 523744
    %10 = vst.msk [vmem:[#allocation0] sm:$0x1] %vm9, %v8
    %s11 = scalar_lea.vmem %s0, 14
    %v12 = vld [vmem:[%s11] sm:$0x1]
    %13 = vrot.lane.b32.xlu0 %v12, 56
    %v14 = vpop.permute.xlu0 %13
    %vm15 = vcmask 490944
    %16 = vst.msk [vmem:[#allocation0] sm:$0x1] %vm15, %v14
    %s17 = scalar_lea.vmem %s0, 13
    %v18 = vld [vmem:[%s17] sm:$0x1]
    %19 = vrot.lane.b32.xlu0 %v18, 52
    %v20 = vpop.permute.xlu0 %19
    %vm21 = vcmask 458144
    %22 = vst.msk [vmem:[#allocation0] sm:$0x1] %vm21, %v20
    %s23 = scalar_lea.vmem %s0, 12
    %v24 = vld [vmem:[%s23] sm:$0x1]
    %25 = vrot.lane.b32.xlu0 %v24, 48
    %v26 = vpop.permute.xlu0 %25
    %vm27 = vcmask 425344
    %28 = vst.msk [vmem:[#allocation0] sm:$0x1] %vm27, %v26
    %s29 = scalar_lea.vmem %s0, 11
    %v30 = vld [vmem:[%s29] sm:$0x1]
    %31 = vrot.lane.b32.xlu0 %v30, 44
    %v32 = vpop.permute.xlu0 %31
    %vm33 = vcmask 392544
    %34 = vst.msk [vmem:[#allocation0] sm:$0x1] %vm33, %v32
    %s35 = scalar_lea.vmem %s0, 10
    %v36 = vld [vmem:[%s35] sm:$0x1]
    %37 = vrot.lane.b32.xlu0 %v36, 40
    %v38 = vpop.permute.xlu0 %37
    %vm39 = vcmask 359744
    %40 = vst.msk [vmem:[#allocation0] sm:$0x1] %vm39, %v38
    %s41 = scalar_lea.vmem %s0, 9
    %v42 = vld [vmem:[%s41] sm:$0x1]
    %43 = vrot.lane.b32.xlu0 %v42, 36
    %v44 = vpop.permute.xlu0 %43
    %vm45 = vcmask 326944
    %46 = vst.msk [vmem:[#allocation0] sm:$0x1] %vm45, %v44
    %s47 = scalar_lea.vmem %s0, 8
    %v48 = vld [vmem:[%s47] sm:$0x1]
    %49 = vrot.lane.b32.xlu0 %v48, 32
    %v50 = vpop.permute.xlu0 %49
    %vm51 = vcmask 294144
    %52 = vst.msk [vmem:[#allocation0] sm:$0x1] %vm51, %v50
    %s53 = scalar_lea.vmem %s0, 7
    %v54 = vld [vmem:[%s53] sm:$0x1]
    %55 = vrot.lane.b32.xlu0 %v54, 28
    %v56 = vpop.permute.xlu0 %55
    %vm57 = vcmask 261344
    %58 = vst.msk [vmem:[#allocation0] sm:$0x1] %vm57, %v56
    %s59 = scalar_lea.vmem %s0, 6
    %v60 = vld [vmem:[%s59] sm:$0x1]
    %61 = vrot.lane.b32.xlu0 %v60, 24
    %v62 = vpop.permute.xlu0 %61
    %vm63 = vcmask 228544
    %64 = vst.msk [vmem:[#allocation0] sm:$0x1] %vm63, %v62
    %s65 = scalar_lea.vmem %s0, 5
    %v66 = vld [vmem:[%s65] sm:$0x1]
    %67 = vrot.lane.b32.xlu0 %v66, 20
    %v68 = vpop.permute.xlu0 %67
    %vm69 = vcmask 195744
    %70 = vst.msk [vmem:[#allocation0] sm:$0x1] %vm69, %v68
    %s71 = scalar_lea.vmem %s0, 4
    %v72 = vld [vmem:[%s71] sm:$0x1]
    %73 = vrot.lane.b32.xlu0 %v72, 16
    %v74 = vpop.permute.xlu0 %73
    %vm75 = vcmask 162944
    %76 = vst.msk [vmem:[#allocation0] sm:$0x1] %vm75, %v74
    %s77 = scalar_lea.vmem %s0, 3
    %v78 = vld [vmem:[%s77] sm:$0x1]
    %79 = vrot.lane.b32.xlu0 %v78, 12
    %v80 = vpop.permute.xlu0 %79
    %vm81 = vcmask 130144
    %82 = vst.msk [vmem:[#allocation0] sm:$0x1] %vm81, %v80
    %s83 = scalar_lea.vmem %s0, 2
    %v84 = vld [vmem:[%s83] sm:$0x1]
    %85 = vrot.lane.b32.xlu0 %v84, 8
    %v86 = vpop.permute.xlu0 %85
    %vm87 = vcmask 97344
    %88 = vst.msk [vmem:[#allocation0] sm:$0x1] %vm87, %v86
    %s89 = scalar_lea.vmem %s0, 1
    %v90 = vld [vmem:[%s89] sm:$0x1]
    %91 = vrot.lane.b32.xlu0 %v90, 4
    %v92 = vpop.permute.xlu0 %91
    %vm93 = vcmask 64544
    %94 = vst.msk [vmem:[#allocation0] sm:$0x1] %vm93, %v92
    %s96 = sshllo.u32 0, 1
    %v98 = vld [vmem:[#allocation0] sm:%s96]
    %s99 = sshllo.u32 0, 1
    %100 = vst [vmem:[%s1] sm:%s99] %v98

// kernel: tile.34
$region0: #{tile.34}
  %s0 = inlined_call_operand.vmem [shape: f32[16,4], index: 0, kind: input, shape index: {}]
  %s1 = inlined_call_operand.vmem [shape: f32[1,64], index: 1, kind: output, shape index: {}]
  $region1: #{tile.34} parent=0
    #allocation0 [shape = 'u8[4096]{0}', space=vmem, size = 0x1000, scoped, tag = 'scoped mem for output reshape']
    %v2 = vld [vmem:[%s0] sm:$0x1]
    %vm3 = vcmask 31744
    %4 = vst.msk [vmem:[#allocation0] sm:$0x1] %vm3, %v2
    %s5 = scalar_lea.vmem %s0, 15
    %v6 = vld [vmem:[%s5] sm:$0x1]
    %7 = vrot.lane.b32.xlu0 %v6, 60
    %v8 = vpop.permute.xlu0 %7
    %vm9 = vcmask 523744
    %10 = vst.msk [vmem:[#allocation0] sm:$0x1] %vm9, %v8
    %s11 = scalar_lea.vmem %s0, 14
    %v12 = vld [vmem:[%s11] sm:$0x1]
    %13 = vrot.lane.b32.xlu0 %v12, 56
    %v14 = vpop.permute.xlu0 %13
    %vm15 = vcmask 490944
    %16 = vst.msk [vmem:[#allocation0] sm:$0x1] %vm15, %v14
    %s17 = scalar_lea.vmem %s0, 13
    %v18 = vld [vmem:[%s17] sm:$0x1]
    %19 = vrot.lane.b32.xlu0 %v18, 52
    %v20 = vpop.permute.xlu0 %19
    %vm21 = vcmask 458144
    %22 = vst.msk [vmem:[#allocation0] sm:$0x1] %vm21, %v20
    %s23 = scalar_lea.vmem %s0, 12
    %v24 = vld [vmem:[%s23] sm:$0x1]
    %25 = vrot.lane.b32.xlu0 %v24, 48
    %v26 = vpop.permute.xlu0 %25
    %vm27 = vcmask 425344
    %28 = vst.msk [vmem:[#allocation0] sm:$0x1] %vm27, %v26
    %s29 = scalar_lea.vmem %s0, 11
    %v30 = vld [vmem:[%s29] sm:$0x1]
    %31 = vrot.lane.b32.xlu0 %v30, 44
    %v32 = vpop.permute.xlu0 %31
    %vm33 = vcmask 392544
    %34 = vst.msk [vmem:[#allocation0] sm:$0x1] %vm33, %v32
    %s35 = scalar_lea.vmem %s0, 10
    %v36 = vld [vmem:[%s35] sm:$0x1]
    %37 = vrot.lane.b32.xlu0 %v36, 40
    %v38 = vpop.permute.xlu0 %37
    %vm39 = vcmask 359744
    %40 = vst.msk [vmem:[#allocation0] sm:$0x1] %vm39, %v38
    %s41 = scalar_lea.vmem %s0, 9
    %v42 = vld [vmem:[%s41] sm:$0x1]
    %43 = vrot.lane.b32.xlu0 %v42, 36
    %v44 = vpop.permute.xlu0 %43
    %vm45 = vcmask 326944
    %46 = vst.msk [vmem:[#allocation0] sm:$0x1] %vm45, %v44
    %s47 = scalar_lea.vmem %s0, 8
    %v48 = vld [vmem:[%s47] sm:$0x1]
    %49 = vrot.lane.b32.xlu0 %v48, 32
    %v50 = vpop.permute.xlu0 %49
    %vm51 = vcmask 294144
    %52 = vst.msk [vmem:[#allocation0] sm:$0x1] %vm51, %v50
    %s53 = scalar_lea.vmem %s0, 7
    %v54 = vld [vmem:[%s53] sm:$0x1]
    %55 = vrot.lane.b32.xlu0 %v54, 28
    %v56 = vpop.permute.xlu0 %55
    %vm57 = vcmask 261344
    %58 = vst.msk [vmem:[#allocation0] sm:$0x1] %vm57, %v56
    %s59 = scalar_lea.vmem %s0, 6
    %v60 = vld [vmem:[%s59] sm:$0x1]
    %61 = vrot.lane.b32.xlu0 %v60, 24
    %v62 = vpop.permute.xlu0 %61
    %vm63 = vcmask 228544
    %64 = vst.msk [vmem:[#allocation0] sm:$0x1] %vm63, %v62
    %s65 = scalar_lea.vmem %s0, 5
    %v66 = vld [vmem:[%s65] sm:$0x1]
    %67 = vrot.lane.b32.xlu0 %v66, 20
    %v68 = vpop.permute.xlu0 %67
    %vm69 = vcmask 195744
    %70 = vst.msk [vmem:[#allocation0] sm:$0x1] %vm69, %v68
    %s71 = scalar_lea.vmem %s0, 4
    %v72 = vld [vmem:[%s71] sm:$0x1]
    %73 = vrot.lane.b32.xlu0 %v72, 16
    %v74 = vpop.permute.xlu0 %73
    %vm75 = vcmask 162944
    %76 = vst.msk [vmem:[#allocation0] sm:$0x1] %vm75, %v74
    %s77 = scalar_lea.vmem %s0, 3
    %v78 = vld [vmem:[%s77] sm:$0x1]
    %79 = vrot.lane.b32.xlu0 %v78, 12
    %v80 = vpop.permute.xlu0 %79
    %vm81 = vcmask 130144
    %82 = vst.msk [vmem:[#allocation0] sm:$0x1] %vm81, %v80
    %s83 = scalar_lea.vmem %s0, 2
    %v84 = vld [vmem:[%s83] sm:$0x1]
    %85 = vrot.lane.b32.xlu0 %v84, 8
    %v86 = vpop.permute.xlu0 %85
    %vm87 = vcmask 97344
    %88 = vst.msk [vmem:[#allocation0] sm:$0x1] %vm87, %v86
    %s89 = scalar_lea.vmem %s0, 1
    %v90 = vld [vmem:[%s89] sm:$0x1]
    %91 = vrot.lane.b32.xlu0 %v90, 4
    %v92 = vpop.permute.xlu0 %91
    %vm93 = vcmask 64544
    %94 = vst.msk [vmem:[#allocation0] sm:$0x1] %vm93, %v92
    %s96 = sshllo.u32 0, 1
    %v98 = vld [vmem:[#allocation0] sm:%s96]
    %s99 = sshllo.u32 0, 1
    %100 = vst [vmem:[%s1] sm:%s99] %v98

// kernel: up_bilinear_forward.1
$region0: #{up_bilinear_forward.1}
  #allocation0 [shape = 'u32[]', space=smem, size = 0x4, offset = 0x4, fixed_abs, tag = 'smem constant byte address 0x4 - core index']
  #allocation1 [shape = 'u32[144,128]{1,0:T(1,128)}', space=vmem, size = 0x12000, scoped, tag = 'internal scratch']
  #allocation2 [shape = 'f32[18,72]{1,0:T(8,128)}', space=vmem, size = 0x3000, scoped, tag = 'scratch operand']
  #allocation3 [shape = 'f32[18,72]{1,0:T(8,128)}', space=vmem, size = 0x3000, scoped, tag = 'scratch operand']
  %s0 = inlined_call_operand.vmem [shape: f32[2,8,32], index: 0, kind: input, shape index: {}]
  %s1 = inlined_call_operand.vmem [shape: f32[2,18,72], index: 1, kind: input, shape index: {}]
  %s2 = inlined_call_operand.vmem [shape: f32[18,8], index: 2, kind: input, shape index: {}]
  %s3 = inlined_call_operand.vmem [shape: f32[32,72], index: 3, kind: input, shape index: {}]
  %s4 = inlined_call_operand.vmem [shape: f32[9,64,72], index: 4, kind: input, shape index: {}]
  %s5 = inlined_call_operand.vmem [shape: f32[9,64,72], index: 5, kind: input, shape index: {}]
  %s6 = inlined_call_operand.vmem [shape: f32[9,64,64], index: 6, kind: input, shape index: {}]
  %s7 = inlined_call_operand.vmem [shape: f32[1,72], index: 7, kind: input, shape index: {}]
  %s8 = inlined_call_operand.vmem [shape: f32[1,72], index: 8, kind: input, shape index: {}]
  %s9 = inlined_call_operand.vmem [shape: f32[1,64], index: 9, kind: input, shape index: {}]
  %s10 = inlined_call_operand.vmem [shape: f32[1,64], index: 10, kind: input, shape index: {}]
  %s11 = inlined_call_operand.vmem [shape: f32[2,16,64], index: 11, kind: output, shape index: {}]
  %s12 = sld [smem:[#allocation0]]
  $region77: #{up_bilinear_forward.1} parent=0
    _
  %s14 = ssub.s32 1, %s12
  %s15 = scalar_select 0, %s14, %s12
  loop: start=0, step=1, limit=4
  $region2: #{up_bilinear_forward.1} parent=0 // loop_pre_header
    _
  $region3: #{up_bilinear_forward.1} parent=0 // loop_header
    %s17 = sphi 0, %s21
    %p18 = scmp.ge.s32.totalorder %s17, 4
    %s27 = sphi 0, %s29
    %s30 = sphi 0, %s27
    %s31 = sphi 0, %s30
    %s47 = sphi 0, %s31
    %s53 = sphi 0, %s55
    %s56 = sphi 0, %s53
    %s57 = sphi 0, %s56
    %s73 = sphi 0, %s57
    %s77 = sphi 0, %s77
    %s79 = sphi 0, %s77
    %s80 = sphi 0, %s79
    %s94 = sphi 0, %s80
    %s98 = sphi 0, %s98
    %s100 = sphi 0, %s98
    %s101 = sphi 0, %s100
    %s115 = sphi 0, %s101
    %s119 = sphi 0, %s119
    %s121 = sphi 0, %s119
    %s122 = sphi 0, %s121
    %s136 = sphi 0, %s122
    %s140 = sphi 0, %s140
    %s142 = sphi 0, %s140
    %s143 = sphi 0, %s142
    %s157 = sphi 0, %s143
    %s161 = sphi 0, %s161
    %s163 = sphi 0, %s161
    %s164 = sphi 0, %s163
    %s178 = sphi 0, %s164
    %s182 = sphi 0, %s182
    %s184 = sphi 0, %s182
    %s185 = sphi 0, %s184
    %s199 = sphi 0, %s185
    %s203 = sphi 0, %s203
    %s205 = sphi 0, %s203
    %s206 = sphi 0, %s205
    %s220 = sphi 0, %s206
    %s224 = sphi 0, %s224
    %s226 = sphi 0, %s224
    %s227 = sphi 0, %s226
    %s241 = sphi 0, %s227
    %s245 = sphi 0, %s245
    %s247 = sphi 0, %s245
    %s248 = sphi 0, %s247
    %s262 = sphi 0, %s248
    %s268 = sphi 0, %s270
    %s271 = sphi 0, %s268
    %s272 = sphi 0, %s271
    %s288 = sphi 0, %s272
  $region4: #{up_bilinear_forward.1} parent=0 // loop_header_branch
    %20 = sbr.rel (%p18) target = $region8
  $region5: #{up_bilinear_forward.1} parent=0 // loop_body
    %s22 = ssub.s32 %s17, 1
    %s23 = ssub.s32 %s17, 2
    %s24 = sadd.s32 %s17, 1
    %s25 = ssub.s32 %s17, %s24
    %p26 = scmp.eq.s32.totalorder %s25, 0
    %s28 = sadd.s32 %s27, 1
    %s29 = scalar_select %p26, %s27, %s28
    %p32 = pneg %p26
    %p33 = scmp.eq.s32.totalorder %s17, 1
    %p34 = por %p32, %p33
    %p35 = scmp.ne.s32.totalorder %s27, %s30
    %p36 = scmp.eq.s32.totalorder %s17, 0
    %p37 = por %p35, %p36
    %p38 = scmp.ne.s32.totalorder %s27, %s30
    %p39 = scmp.eq.s32.totalorder %s22, 1
    %p40 = por %p38, %p39
    %p41 = scmp.ne.s32.totalorder %s30, %s31
    %p42 = scmp.eq.s32.totalorder %s22, 0
    %p43 = por %p41, %p42
    %p44 = scmp.ne.s32.totalorder %s30, %s31
    %p45 = scmp.eq.s32.totalorder %s23, 1
    %p46 = por %p44, %p45
    %p48 = scmp.ne.s32.totalorder %s31, %s47
    %p49 = scmp.eq.s32.totalorder %s23, 0
    %p50 = por %p48, %p49
    %s51 = ssub.s32 %s17, %s24
    %p52 = scmp.eq.s32.totalorder %s51, 0
    %s54 = sadd.s32 %s53, 1
    %s55 = scalar_select %p52, %s53, %s54
    %p58 = pneg %p52
    %p59 = scmp.eq.s32.totalorder %s17, 1
    %p60 = por %p58, %p59
    %p61 = scmp.ne.s32.totalorder %s53, %s56
    %p62 = scmp.eq.s32.totalorder %s17, 0
    %p63 = por %p61, %p62
    %p64 = scmp.ne.s32.totalorder %s53, %s56
    %p65 = scmp.eq.s32.totalorder %s22, 1
    %p66 = por %p64, %p65
    %p67 = scmp.ne.s32.totalorder %s56, %s57
    %p68 = scmp.eq.s32.totalorder %s22, 0
    %p69 = por %p67, %p68
    %p70 = scmp.ne.s32.totalorder %s56, %s57
    %p71 = scmp.eq.s32.totalorder %s23, 1
    %p72 = por %p70, %p71
    %p74 = scmp.ne.s32.totalorder %s57, %s73
    %p75 = scmp.eq.s32.totalorder %s23, 0
    %p76 = por %p74, %p75
    %s78 = sadd.s32 %s77, 1
    %p81 = scmp.eq.s32.totalorder %s17, 1
    %p82 = scmp.ne.s32.totalorder %s77, %s79
    %p83 = scmp.eq.s32.totalorder %s17, 0
    %p84 = por %p82, %p83
    %p85 = scmp.ne.s32.totalorder %s77, %s79
    %p86 = scmp.eq.s32.totalorder %s22, 1
    %p87 = por %p85, %p86
    %p88 = scmp.ne.s32.totalorder %s79, %s80
    %p89 = scmp.eq.s32.totalorder %s22, 0
    %p90 = por %p88, %p89
    %p91 = scmp.ne.s32.totalorder %s79, %s80
    %p92 = scmp.eq.s32.totalorder %s23, 1
    %p93 = por %p91, %p92
    %p95 = scmp.ne.s32.totalorder %s80, %s94
    %p96 = scmp.eq.s32.totalorder %s23, 0
    %p97 = por %p95, %p96
    %s99 = sadd.s32 %s98, 1
    %p102 = scmp.eq.s32.totalorder %s17, 1
    %p103 = scmp.ne.s32.totalorder %s98, %s100
    %p104 = scmp.eq.s32.totalorder %s17, 0
    %p105 = por %p103, %p104
    %p106 = scmp.ne.s32.totalorder %s98, %s100
    %p107 = scmp.eq.s32.totalorder %s22, 1
    %p108 = por %p106, %p107
    %p109 = scmp.ne.s32.totalorder %s100, %s101
    %p110 = scmp.eq.s32.totalorder %s22, 0
    %p111 = por %p109, %p110
    %p112 = scmp.ne.s32.totalorder %s100, %s101
    %p113 = scmp.eq.s32.totalorder %s23, 1
    %p114 = por %p112, %p113
    %p116 = scmp.ne.s32.totalorder %s101, %s115
    %p117 = scmp.eq.s32.totalorder %s23, 0
    %p118 = por %p116, %p117
    %s120 = sadd.s32 %s119, 1
    %p123 = scmp.eq.s32.totalorder %s17, 1
    %p124 = scmp.ne.s32.totalorder %s119, %s121
    %p125 = scmp.eq.s32.totalorder %s17, 0
    %p126 = por %p124, %p125
    %p127 = scmp.ne.s32.totalorder %s119, %s121
    %p128 = scmp.eq.s32.totalorder %s22, 1
    %p129 = por %p127, %p128
    %p130 = scmp.ne.s32.totalorder %s121, %s122
    %p131 = scmp.eq.s32.totalorder %s22, 0
    %p132 = por %p130, %p131
    %p133 = scmp.ne.s32.totalorder %s121, %s122
    %p134 = scmp.eq.s32.totalorder %s23, 1
    %p135 = por %p133, %p134
    %p137 = scmp.ne.s32.totalorder %s122, %s136
    %p138 = scmp.eq.s32.totalorder %s23, 0
    %p139 = por %p137, %p138
    %s141 = sadd.s32 %s140, 1
    %p144 = scmp.eq.s32.totalorder %s17, 1
    %p145 = scmp.ne.s32.totalorder %s140, %s142
    %p146 = scmp.eq.s32.totalorder %s17, 0
    %p147 = por %p145, %p146
    %p148 = scmp.ne.s32.totalorder %s140, %s142
    %p149 = scmp.eq.s32.totalorder %s22, 1
    %p150 = por %p148, %p149
    %p151 = scmp.ne.s32.totalorder %s142, %s143
    %p152 = scmp.eq.s32.totalorder %s22, 0
    %p153 = por %p151, %p152
    %p154 = scmp.ne.s32.totalorder %s142, %s143
    %p155 = scmp.eq.s32.totalorder %s23, 1
    %p156 = por %p154, %p155
    %p158 = scmp.ne.s32.totalorder %s143, %s157
    %p159 = scmp.eq.s32.totalorder %s23, 0
    %p160 = por %p158, %p159
    %s162 = sadd.s32 %s161, 1
    %p165 = scmp.eq.s32.totalorder %s17, 1
    %p166 = scmp.ne.s32.totalorder %s161, %s163
    %p167 = scmp.eq.s32.totalorder %s17, 0
    %p168 = por %p166, %p167
    %p169 = scmp.ne.s32.totalorder %s161, %s163
    %p170 = scmp.eq.s32.totalorder %s22, 1
    %p171 = por %p169, %p170
    %p172 = scmp.ne.s32.totalorder %s163, %s164
    %p173 = scmp.eq.s32.totalorder %s22, 0
    %p174 = por %p172, %p173
    %p175 = scmp.ne.s32.totalorder %s163, %s164
    %p176 = scmp.eq.s32.totalorder %s23, 1
    %p177 = por %p175, %p176
    %p179 = scmp.ne.s32.totalorder %s164, %s178
    %p180 = scmp.eq.s32.totalorder %s23, 0
    %p181 = por %p179, %p180
    %s183 = sadd.s32 %s182, 1
    %p186 = scmp.eq.s32.totalorder %s17, 1
    %p187 = scmp.ne.s32.totalorder %s182, %s184
    %p188 = scmp.eq.s32.totalorder %s17, 0
    %p189 = por %p187, %p188
    %p190 = scmp.ne.s32.totalorder %s182, %s184
    %p191 = scmp.eq.s32.totalorder %s22, 1
    %p192 = por %p190, %p191
    %p193 = scmp.ne.s32.totalorder %s184, %s185
    %p194 = scmp.eq.s32.totalorder %s22, 0
    %p195 = por %p193, %p194
    %p196 = scmp.ne.s32.totalorder %s184, %s185
    %p197 = scmp.eq.s32.totalorder %s23, 1
    %p198 = por %p196, %p197
    %p200 = scmp.ne.s32.totalorder %s185, %s199
    %p201 = scmp.eq.s32.totalorder %s23, 0
    %p202 = por %p200, %p201
    %s204 = sadd.s32 %s203, 1
    %p207 = scmp.eq.s32.totalorder %s17, 1
    %p208 = scmp.ne.s32.totalorder %s203, %s205
    %p209 = scmp.eq.s32.totalorder %s17, 0
    %p210 = por %p208, %p209
    %p211 = scmp.ne.s32.totalorder %s203, %s205
    %p212 = scmp.eq.s32.totalorder %s22, 1
    %p213 = por %p211, %p212
    %p214 = scmp.ne.s32.totalorder %s205, %s206
    %p215 = scmp.eq.s32.totalorder %s22, 0
    %p216 = por %p214, %p215
    %p217 = scmp.ne.s32.totalorder %s205, %s206
    %p218 = scmp.eq.s32.totalorder %s23, 1
    %p219 = por %p217, %p218
    %p221 = scmp.ne.s32.totalorder %s206, %s220
    %p222 = scmp.eq.s32.totalorder %s23, 0
    %p223 = por %p221, %p222
    %s225 = sadd.s32 %s224, 1
    %p228 = scmp.eq.s32.totalorder %s17, 1
    %p229 = scmp.ne.s32.totalorder %s224, %s226
    %p230 = scmp.eq.s32.totalorder %s17, 0
    %p231 = por %p229, %p230
    %p232 = scmp.ne.s32.totalorder %s224, %s226
    %p233 = scmp.eq.s32.totalorder %s22, 1
    %p234 = por %p232, %p233
    %p235 = scmp.ne.s32.totalorder %s226, %s227
    %p236 = scmp.eq.s32.totalorder %s22, 0
    %p237 = por %p235, %p236
    %p238 = scmp.ne.s32.totalorder %s226, %s227
    %p239 = scmp.eq.s32.totalorder %s23, 1
    %p240 = por %p238, %p239
    %p242 = scmp.ne.s32.totalorder %s227, %s241
    %p243 = scmp.eq.s32.totalorder %s23, 0
    %p244 = por %p242, %p243
    %s246 = sadd.s32 %s245, 1
    %p249 = scmp.eq.s32.totalorder %s17, 1
    %p250 = scmp.ne.s32.totalorder %s245, %s247
    %p251 = scmp.eq.s32.totalorder %s17, 0
    %p252 = por %p250, %p251
    %p253 = scmp.ne.s32.totalorder %s245, %s247
    %p254 = scmp.eq.s32.totalorder %s22, 1
    %p255 = por %p253, %p254
    %p256 = scmp.ne.s32.totalorder %s247, %s248
    %p257 = scmp.eq.s32.totalorder %s22, 0
    %p258 = por %p256, %p257
    %p259 = scmp.ne.s32.totalorder %s247, %s248
    %p260 = scmp.eq.s32.totalorder %s23, 1
    %p261 = por %p259, %p260
    %p263 = scmp.ne.s32.totalorder %s248, %s262
    %p264 = scmp.eq.s32.totalorder %s23, 0
    %p265 = por %p263, %p264
    %s266 = ssub.s32 %s17, %s24
    %p267 = scmp.eq.s32.totalorder %s266, 0
    %s269 = sadd.s32 %s268, 1
    %s270 = scalar_select %p267, %s268, %s269
    %p273 = pneg %p267
    %p274 = scmp.eq.s32.totalorder %s17, 1
    %p275 = por %p273, %p274
    %p276 = scmp.ne.s32.totalorder %s268, %s271
    %p277 = scmp.eq.s32.totalorder %s17, 0
    %p278 = por %p276, %p277
    %p279 = scmp.ne.s32.totalorder %s268, %s271
    %p280 = scmp.eq.s32.totalorder %s22, 1
    %p281 = por %p279, %p280
    %p282 = scmp.ne.s32.totalorder %s271, %s272
    %p283 = scmp.eq.s32.totalorder %s22, 0
    %p284 = por %p282, %p283
    %p285 = scmp.ne.s32.totalorder %s271, %s272
    %p286 = scmp.eq.s32.totalorder %s23, 1
    %p287 = por %p285, %p286
    %p289 = scmp.ne.s32.totalorder %s272, %s288
    %p290 = scmp.eq.s32.totalorder %s23, 0
    %p291 = por %p289, %p290
    %p292 = scmp.le.s32.totalorder 1, %s17
    %p293 = scmp.lt.s32.totalorder %s17, 3
    %p294 = pnand %p292, %p293
    %p295 = pneg %p294
    // Predicated region
    $region9: #{up_bilinear_forward.1} parent=5 // pred_check
      _
    $region10: #{up_bilinear_forward.1} parent=5 // pred_check_branch
      %297 = sbr.rel (%p294) target = $region12
    $region11: #{up_bilinear_forward.1} parent=5 // pred_region
      %s298 = ssub.s32 %s17, 1
      // Predicated region
      $region13: #{up_bilinear_forward.1} parent=11 // pred_check
        %p299 = pneg %p90
      $region14: #{up_bilinear_forward.1} parent=11 // pred_check_branch
        %301 = sbr.rel (%p299) target = $region16
      $region15: #{up_bilinear_forward.1} parent=11 // pred_region
        _
      $region16: #{up_bilinear_forward.1} parent=11 // pred_fallthru
        _
      // Predicated region
      $region17: #{up_bilinear_forward.1} parent=11 // pred_check
        %p302 = pneg %p111
      $region18: #{up_bilinear_forward.1} parent=11 // pred_check_branch
        %304 = sbr.rel (%p302) target = $region20
      $region19: #{up_bilinear_forward.1} parent=11 // pred_region
        _
      $region20: #{up_bilinear_forward.1} parent=11 // pred_fallthru
        _
      // Predicated region
      $region21: #{up_bilinear_forward.1} parent=11 // pred_check
        %p305 = pneg %p132
      $region22: #{up_bilinear_forward.1} parent=11 // pred_check_branch
        %307 = sbr.rel (%p305) target = $region24
      $region23: #{up_bilinear_forward.1} parent=11 // pred_region
        _
      $region24: #{up_bilinear_forward.1} parent=11 // pred_fallthru
        _
      // Predicated region
      $region25: #{up_bilinear_forward.1} parent=11 // pred_check
        %p308 = pneg %p153
      $region26: #{up_bilinear_forward.1} parent=11 // pred_check_branch
        %310 = sbr.rel (%p308) target = $region28
      $region27: #{up_bilinear_forward.1} parent=11 // pred_region
        _
      $region28: #{up_bilinear_forward.1} parent=11 // pred_fallthru
        _
      // Predicated region
      $region29: #{up_bilinear_forward.1} parent=11 // pred_check
        %p311 = pneg %p174
      $region30: #{up_bilinear_forward.1} parent=11 // pred_check_branch
        %313 = sbr.rel (%p311) target = $region32
      $region31: #{up_bilinear_forward.1} parent=11 // pred_region
        _
      $region32: #{up_bilinear_forward.1} parent=11 // pred_fallthru
        _
      // Predicated region
      $region33: #{up_bilinear_forward.1} parent=11 // pred_check
        %p314 = pneg %p195
      $region34: #{up_bilinear_forward.1} parent=11 // pred_check_branch
        %316 = sbr.rel (%p314) target = $region36
      $region35: #{up_bilinear_forward.1} parent=11 // pred_region
        _
      $region36: #{up_bilinear_forward.1} parent=11 // pred_fallthru
        _
      // Predicated region
      $region37: #{up_bilinear_forward.1} parent=11 // pred_check
        %p317 = pneg %p216
      $region38: #{up_bilinear_forward.1} parent=11 // pred_check_branch
        %319 = sbr.rel (%p317) target = $region40
      $region39: #{up_bilinear_forward.1} parent=11 // pred_region
        _
      $region40: #{up_bilinear_forward.1} parent=11 // pred_fallthru
        _
      // Predicated region
      $region41: #{up_bilinear_forward.1} parent=11 // pred_check
        %p320 = pneg %p237
      $region42: #{up_bilinear_forward.1} parent=11 // pred_check_branch
        %322 = sbr.rel (%p320) target = $region44
      $region43: #{up_bilinear_forward.1} parent=11 // pred_region
        _
      $region44: #{up_bilinear_forward.1} parent=11 // pred_fallthru
        _
      // Predicated region
      $region45: #{up_bilinear_forward.1} parent=11 // pred_check
        %p323 = pneg %p258
      $region46: #{up_bilinear_forward.1} parent=11 // pred_check_branch
        %325 = sbr.rel (%p323) target = $region48
      $region47: #{up_bilinear_forward.1} parent=11 // pred_region
        _
      $region48: #{up_bilinear_forward.1} parent=11 // pred_fallthru
        _
    $region12: #{up_bilinear_forward.1} parent=5 // pred_fallthru
      _
    %p326 = scmp.lt.s32.totalorder %s17, 2
    // Predicated region
    $region49: #{up_bilinear_forward.1} parent=5 // pred_check
      %p327 = pneg %p326
    $region50: #{up_bilinear_forward.1} parent=5 // pred_check_branch
      %329 = sbr.rel (%p327) target = $region52
    $region51: #{up_bilinear_forward.1} parent=5 // pred_region
      // Predicated region
      $region53: #{up_bilinear_forward.1} parent=51 // pred_check
        %p330 = pneg %p37
      $region54: #{up_bilinear_forward.1} parent=51 // pred_check_branch
        %332 = sbr.rel (%p330) target = $region56
      $region55: #{up_bilinear_forward.1} parent=51 // pred_region
        %p333 = scmp.lt.s32.totalorder %s17, 1
        %s334 = scalar_select %p333, %s17, 1
        %s335 = smul.addr %s334, 8
        %s336 = scalar_lea.vmem %s0, %s335
      $region56: #{up_bilinear_forward.1} parent=51 // pred_fallthru
        _
      // Predicated region
      $region57: #{up_bilinear_forward.1} parent=51 // pred_check
        %p337 = pneg %p63
      $region58: #{up_bilinear_forward.1} parent=51 // pred_check_branch
        %339 = sbr.rel (%p337) target = $region60
      $region59: #{up_bilinear_forward.1} parent=51 // pred_region
        %p340 = scmp.lt.s32.totalorder %s17, 1
        %s341 = scalar_select %p340, %s17, 1
        %s342 = smul.addr %s341, 3
        %s343 = smul.addr %s342, 8
        %s344 = scalar_lea.vmem %s1, %s343
      $region60: #{up_bilinear_forward.1} parent=51 // pred_fallthru
        _
    $region52: #{up_bilinear_forward.1} parent=5 // pred_fallthru
      _
    %p345 = scmp.le.s32.totalorder 1, %s17
    %p346 = scmp.lt.s32.totalorder %s17, 3
    %p347 = pnand %p345, %p346
    %p348 = pneg %p347
    // Predicated region
    $region61: #{up_bilinear_forward.1} parent=5 // pred_check
      _
    $region62: #{up_bilinear_forward.1} parent=5 // pred_check_branch
      %350 = sbr.rel (%p347) target = $region64
    $region63: #{up_bilinear_forward.1} parent=5 // pred_region
      %s351 = ssub.s32 %s17, 1
      %p352 = scmp.lt.s32.totalorder %s22, 1
      %s353 = scalar_select %p352, %s22, 1
      %s354 = smul.addr %s353, 8
      %s355 = scalar_lea.vmem %s0, %s354
      %p356 = pneg %p43
      %p357 = pneg %p40
      %p358 = scmp.lt.s32.totalorder %s22, 1
      %s359 = scalar_select %p358, %s22, 1
      %s360 = smul.addr %s359, 3
      %s361 = smul.addr %s360, 8
      %s362 = scalar_lea.vmem %s1, %s361
      %p363 = pneg %p69
      %p364 = pneg %p66
      %p365 = pneg %p90
      %p366 = pneg %p87
      %p367 = pneg %p111
      %p368 = pneg %p108
      %p369 = pneg %p132
      %p370 = pneg %p129
      %p371 = pneg %p153
      %p372 = pneg %p150
      %p373 = pneg %p174
      %p374 = pneg %p171
      %p375 = pneg %p195
      %p376 = pneg %p192
      %p377 = pneg %p216
      %p378 = pneg %p213
      %p379 = pneg %p237
      %p380 = pneg %p234
      %p381 = pneg %p258
      %p382 = pneg %p255
      %p383 = pneg %p284
      %p384 = pneg %p281
      %p385 = scmp.lt.s32.totalorder %s22, 1
      %s386 = scalar_select %p385, %s22, 1
      %s387 = smul.addr %s386, 2
      %s388 = smul.addr %s387, 8
      %s389 = scalar_lea.vmem %s11, %s388
      %p390 = scmp.lt.s32.totalorder %s22, 1
      %s391 = scalar_select %p390, %s22, 1
      %s392 = smul.addr %s391, 8
      %s393 = scalar_lea.vmem %s0, %s392
      %p394 = scmp.lt.s32.totalorder %s22, 1
      %s395 = scalar_select %p394, %s22, 1
      %s396 = smul.addr %s395, 3
      %s397 = smul.addr %s396, 8
      %s398 = scalar_lea.vmem %s1, %s397
      %p399 = scmp.lt.s32.totalorder %s22, 1
      %s400 = scalar_select %p399, %s22, 1
      %s401 = smul.addr %s400, 2
      %s402 = smul.addr %s401, 8
      %s403 = scalar_lea.vmem %s11, %s402
      %v404 = vld [vmem:[%s393] sm:$0xff]
      %v405 = vld [vmem:[%s2] sm:$0xff]
      %v406 = vld [vmem:[%s2 + $0x8] sm:$0xff]
      %v407 = vld [vmem:[%s2 + $0x10] sm:$0x3]
      %vm408 = vcmask 64512
      %v410 = vsel %vm408, %v405, 0
      %v413 = vsel %vm408, %v406, 0
      %v416 = vsel %vm408, %v407, 0
      %418 = vmatprep.subr.mxu0 0.0
      %419 = vmatpush1.msra.mxu0 %v404
      %420 = vmatprep.subr.mxu0 0.0
      %421 = vmatpush1.msra.mxu0 0.0
      %422 = vmatprep.subr.mxu0 0.0
      %423 = vmatpush1.msra.mxu0 0.0
      %424 = vmatprep.subr.mxu0 0.0
      %425 = vmatpush1.msra.mxu0 0.0
      %426 = vmatprep.subr.mxu0 0.0
      %427 = vmatpush1.msra.mxu0 0.0
      %428 = vmatprep.subr.mxu0 0.0
      %429 = vmatpush1.msra.mxu0 0.0
      %430 = vmatprep.subr.mxu0 0.0
      %431 = vmatpush1.msra.mxu0 0.0
      %432 = vmatprep.subr.mxu0 0.0
      %433 = vmatpush1.msra.mxu0 0.0
      %434 = vmatprep.subr.mxu0 0.0
      %435 = vmatpush1.msra.mxu0 0.0
      %436 = vmatprep.subr.mxu0 0.0
      %437 = vmatpush1.msra.mxu0 0.0
      %438 = vmatprep.subr.mxu0 0.0
      %439 = vmatpush1.msra.mxu0 0.0
      %440 = vmatprep.subr.mxu0 0.0
      %441 = vmatpush1.msra.mxu0 0.0
      %442 = vmatprep.subr.mxu0 0.0
      %443 = vmatpush1.msra.mxu0 0.0
      %444 = vmatprep.subr.mxu0 0.0
      %445 = vmatpush1.msra.mxu0 0.0
      %446 = vmatprep.subr.mxu0 0.0
      %447 = vmatpush1.msra.mxu0 0.0
      %448 = vmatprep.subr.mxu0 0.0
      %449 = vmatpush1.msra.mxu0 0.0
      %450 = vmatprep.subr.mxu0 0.0
      %451 = vmatpush1.msra.mxu0 0.0
      %452 = vmatprep.subr.mxu0 0.0
      %453 = vmatpush1.msra.mxu0 0.0
      %454 = vmatprep.subr.mxu0 0.0
      %455 = vmatpush1.msra.mxu0 0.0
      %456 = vmatprep.subr.mxu0 0.0
      %457 = vmatpush1.msra.mxu0 0.0
      %458 = vmatprep.subr.mxu0 0.0
      %459 = vmatpush1.msra.mxu0 0.0
      %460 = vmatprep.subr.mxu0 0.0
      %461 = vmatpush1.msra.mxu0 0.0
      %462 = vmatprep.subr.mxu0 0.0
      %463 = vmatpush1.msra.mxu0 0.0
      %464 = vmatprep.subr.mxu0 0.0
      %465 = vmatpush1.msra.mxu0 0.0
      %466 = vmatprep.subr.mxu0 0.0
      %467 = vmatpush1.msra.mxu0 0.0
      %468 = vmatprep.subr.mxu0 0.0
      %469 = vmatpush1.msra.mxu0 0.0
      %470 = vmatprep.subr.mxu0 0.0
      %471 = vmatpush1.msra.mxu0 0.0
      %472 = vmatprep.subr.mxu0 0.0
      %473 = vmatpush1.msra.mxu0 0.0
      %474 = vmatprep.subr.mxu0 0.0
      %475 = vmatpush1.msra.mxu0 0.0
      %476 = vmatprep.subr.mxu0 0.0
      %477 = vmatpush1.msra.mxu0 0.0
      %478 = vmatprep.subr.mxu0 0.0
      %479 = vmatpush1.msra.mxu0 0.0
      %480 = vmatprep.subr.mxu0 0.0
      %481 = vmatpush1.msra.mxu0 0.0
      %482 = vmatprep.mubr.f32.mxu0 0.0
      %483 = vmatmul.mubr.f32.gmra.mrb[0].mxu0 %v410
      %v484 = vpop.f32.mrb[0].mxu0
      %v485 = vadd.f32 0.0, %v484
      %v486 = vpop.f32.mrb[0].mxu0
      %487 = vmatprep.mubr.f32.mxu0 0.0
      %488 = vmatmul.mubr.f32.gmra.mrb[0].mxu0 %v413
      %v489 = vpop.f32.mrb[0].mxu0
      %v490 = vadd.f32 0.0, %v489
      %v491 = vpop.f32.mrb[0].mxu0
      %492 = vmatprep.mubr.f32.mxu0 0.0
      %493 = vmatmul.mubr.f32.gmra.mrb[0].mxu0 %v416
      %v494 = vpop.f32.mrb[0].mxu0
      %v495 = vadd.f32 0.0, %v494
      %v496 = vpop.f32.mrb[0].mxu0
      %497 = vdwg.mxu0
      %v498 = vld [vmem:[%s3] sm:$0xff]
      %v499 = vld [vmem:[%s3 + $0x8] sm:$0xff]
      %v500 = vld [vmem:[%s3 + $0x10] sm:$0xff]
      %v501 = vld [vmem:[%s3 + $0x18] sm:$0xff]
      %vm502 = vcmask 261120
      %v504 = vsel %vm502, %v485, 0
      %v507 = vsel %vm502, %v490, 0
      %v510 = vsel %vm502, %v495, 0
      %512 = vmatprep.subr.mxu0 0.0
      %513 = vmatpush1.msra.mxu0 %v498
      %514 = vmatprep.subr.mxu0 0.0
      %515 = vmatpush1.msra.mxu0 %v499
      %516 = vmatprep.subr.mxu0 0.0
      %517 = vmatpush1.msra.mxu0 %v500
      %518 = vmatprep.subr.mxu0 0.0
      %519 = vmatpush1.msra.mxu0 %v501
      %520 = vmatprep.subr.mxu0 0.0
      %521 = vmatpush1.msra.mxu0 0.0
      %522 = vmatprep.subr.mxu0 0.0
      %523 = vmatpush1.msra.mxu0 0.0
      %524 = vmatprep.subr.mxu0 0.0
      %525 = vmatpush1.msra.mxu0 0.0
      %526 = vmatprep.subr.mxu0 0.0
      %527 = vmatpush1.msra.mxu0 0.0
      %528 = vmatprep.subr.mxu0 0.0
      %529 = vmatpush1.msra.mxu0 0.0
      %530 = vmatprep.subr.mxu0 0.0
      %531 = vmatpush1.msra.mxu0 0.0
      %532 = vmatprep.subr.mxu0 0.0
      %533 = vmatpush1.msra.mxu0 0.0
      %534 = vmatprep.subr.mxu0 0.0
      %535 = vmatpush1.msra.mxu0 0.0
      %536 = vmatprep.subr.mxu0 0.0
      %537 = vmatpush1.msra.mxu0 0.0
      %538 = vmatprep.subr.mxu0 0.0
      %539 = vmatpush1.msra.mxu0 0.0
      %540 = vmatprep.subr.mxu0 0.0
      %541 = vmatpush1.msra.mxu0 0.0
      %542 = vmatprep.subr.mxu0 0.0
      %543 = vmatpush1.msra.mxu0 0.0
      %544 = vmatprep.subr.mxu0 0.0
      %545 = vmatpush1.msra.mxu0 0.0
      %546 = vmatprep.subr.mxu0 0.0
      %547 = vmatpush1.msra.mxu0 0.0
      %548 = vmatprep.subr.mxu0 0.0
      %549 = vmatpush1.msra.mxu0 0.0
      %550 = vmatprep.subr.mxu0 0.0
      %551 = vmatpush1.msra.mxu0 0.0
      %552 = vmatprep.subr.mxu0 0.0
      %553 = vmatpush1.msra.mxu0 0.0
      %554 = vmatprep.subr.mxu0 0.0
      %555 = vmatpush1.msra.mxu0 0.0
      %556 = vmatprep.subr.mxu0 0.0
      %557 = vmatpush1.msra.mxu0 0.0
      %558 = vmatprep.subr.mxu0 0.0
      %559 = vmatpush1.msra.mxu0 0.0
      %560 = vmatprep.subr.mxu0 0.0
      %561 = vmatpush1.msra.mxu0 0.0
      %562 = vmatprep.subr.mxu0 0.0
      %563 = vmatpush1.msra.mxu0 0.0
      %564 = vmatprep.subr.mxu0 0.0
      %565 = vmatpush1.msra.mxu0 0.0
      %566 = vmatprep.subr.mxu0 0.0
      %567 = vmatpush1.msra.mxu0 0.0
      %568 = vmatprep.subr.mxu0 0.0
      %569 = vmatpush1.msra.mxu0 0.0
      %570 = vmatprep.subr.mxu0 0.0
      %571 = vmatpush1.msra.mxu0 0.0
      %572 = vmatprep.subr.mxu0 0.0
      %573 = vmatpush1.msra.mxu0 0.0
      %574 = vmatprep.subr.mxu0 0.0
      %575 = vmatpush1.msra.mxu0 0.0
      %576 = vmatprep.mubr.f32.mxu0 0.0
      %577 = vmatmul.mubr.f32.gmra.mrb[0].mxu0 %v504
      %v578 = vpop.f32.mrb[0].mxu0
      %v579 = vadd.f32 0.0, %v578
      %v580 = vpop.f32.mrb[0].mxu0
      %581 = vmatprep.mubr.f32.mxu0 0.0
      %582 = vmatmul.mubr.f32.gmra.mrb[0].mxu0 %v507
      %v583 = vpop.f32.mrb[0].mxu0
      %v584 = vadd.f32 0.0, %v583
      %v585 = vpop.f32.mrb[0].mxu0
      %586 = vmatprep.mubr.f32.mxu0 0.0
      %587 = vmatmul.mubr.f32.gmra.mrb[0].mxu0 %v510
      %v588 = vpop.f32.mrb[0].mxu0
      %v589 = vadd.f32 0.0, %v588
      %v590 = vpop.f32.mrb[0].mxu0
      %591 = vdwg.mxu0
      %vm592 = vcmask 588800
      %593 = vst.msk [vmem:[#allocation2] sm:$0xff] %vm592, %v579
      %594 = vst.msk [vmem:[#allocation2 + $0x8] sm:$0xff] %vm592, %v584
      %vm595 = vcmask 582656
      %596 = vst.msk [vmem:[#allocation2 + $0x10] sm:$0x3] %vm595, %v589
      %v597 = vld [vmem:[%s398] sm:$0xff]
      %v598 = vld [vmem:[%s398 + $0x8] sm:$0xff]
      %v599 = vld [vmem:[%s4] sm:$0xff]
      %v600 = vld [vmem:[%s4 + $0x8] sm:$0xff]
      %v601 = vld [vmem:[%s4 + $0x10] sm:$0xff]
      %v602 = vld [vmem:[%s4 + $0x18] sm:$0xff]
      %v603 = vld [vmem:[%s4 + $0x20] sm:$0xff]
      %v604 = vld [vmem:[%s4 + $0x28] sm:$0xff]
      %v605 = vld [vmem:[%s4 + $0x30] sm:$0xff]
      %v606 = vld [vmem:[%s4 + $0x38] sm:$0xff]
      %v607 = vld [vmem:[#allocation2] sm:$0xff]
      %v608 = vld [vmem:[#allocation2 + $0x8] sm:$0xff]
      %v609 = vld [vmem:[%s5] sm:$0xff]
      %v610 = vld [vmem:[%s5 + $0x8] sm:$0xff]
      %v611 = vld [vmem:[%s5 + $0x10] sm:$0xff]
      %v612 = vld [vmem:[%s5 + $0x18] sm:$0xff]
      %v613 = vld [vmem:[%s5 + $0x20] sm:$0xff]
      %v614 = vld [vmem:[%s5 + $0x28] sm:$0xff]
      %v615 = vld [vmem:[%s5 + $0x30] sm:$0xff]
      %v616 = vld [vmem:[%s5 + $0x38] sm:$0xff]
      %vm617 = vcmask 523264
      %v619 = vsel %vm617, %v607, 0
      %v622 = vsel %vm617, %v608, 0
      %624 = vmatprep.subr.mxu0 0.0
      %625 = vmatpush1.msra.mxu0 %v609
      %626 = vmatprep.subr.mxu0 0.0
      %627 = vmatpush1.msra.mxu0 %v610
      %628 = vmatprep.subr.mxu0 0.0
      %629 = vmatpush1.msra.mxu0 %v611
      %630 = vmatprep.subr.mxu0 0.0
      %631 = vmatpush1.msra.mxu0 %v612
      %632 = vmatprep.subr.mxu0 0.0
      %633 = vmatpush1.msra.mxu0 %v613
      %634 = vmatprep.subr.mxu0 0.0
      %635 = vmatpush1.msra.mxu0 %v614
      %636 = vmatprep.subr.mxu0 0.0
      %637 = vmatpush1.msra.mxu0 %v615
      %638 = vmatprep.subr.mxu0 0.0
      %639 = vmatpush1.msra.mxu0 %v616
      %640 = vmatprep.subr.mxu0 0.0
      %641 = vmatpush1.msra.mxu0 0.0
      %642 = vmatprep.subr.mxu0 0.0
      %643 = vmatpush1.msra.mxu0 0.0
      %644 = vmatprep.subr.mxu0 0.0
      %645 = vmatpush1.msra.mxu0 0.0
      %646 = vmatprep.subr.mxu0 0.0
      %647 = vmatpush1.msra.mxu0 0.0
      %648 = vmatprep.subr.mxu0 0.0
      %649 = vmatpush1.msra.mxu0 0.0
      %650 = vmatprep.subr.mxu0 0.0
      %651 = vmatpush1.msra.mxu0 0.0
      %652 = vmatprep.subr.mxu0 0.0
      %653 = vmatpush1.msra.mxu0 0.0
      %654 = vmatprep.subr.mxu0 0.0
      %655 = vmatpush1.msra.mxu0 0.0
      %656 = vmatprep.subr.mxu0 0.0
      %657 = vmatpush1.msra.mxu0 0.0
      %658 = vmatprep.subr.mxu0 0.0
      %659 = vmatpush1.msra.mxu0 0.0
      %660 = vmatprep.subr.mxu0 0.0
      %661 = vmatpush1.msra.mxu0 0.0
      %662 = vmatprep.subr.mxu0 0.0
      %663 = vmatpush1.msra.mxu0 0.0
      %664 = vmatprep.subr.mxu0 0.0
      %665 = vmatpush1.msra.mxu0 0.0
      %666 = vmatprep.subr.mxu0 0.0
      %667 = vmatpush1.msra.mxu0 0.0
      %668 = vmatprep.subr.mxu0 0.0
      %669 = vmatpush1.msra.mxu0 0.0
      %670 = vmatprep.subr.mxu0 0.0
      %671 = vmatpush1.msra.mxu0 0.0
      %672 = vmatprep.subr.mxu0 0.0
      %673 = vmatpush1.msra.mxu0 0.0
      %674 = vmatprep.subr.mxu0 0.0
      %675 = vmatpush1.msra.mxu0 0.0
      %676 = vmatprep.subr.mxu0 0.0
      %677 = vmatpush1.msra.mxu0 0.0
      %678 = vmatprep.subr.mxu0 0.0
      %679 = vmatpush1.msra.mxu0 0.0
      %680 = vmatprep.subr.mxu0 0.0
      %681 = vmatpush1.msra.mxu0 0.0
      %682 = vmatprep.subr.mxu0 0.0
      %683 = vmatpush1.msra.mxu0 0.0
      %684 = vmatprep.subr.mxu0 0.0
      %685 = vmatpush1.msra.mxu0 0.0
      %686 = vmatprep.subr.mxu0 0.0
      %687 = vmatpush1.msra.mxu0 0.0
      %688 = vmatprep.mubr.f32.mxu0 0.0
      %689 = vmatmul.mubr.f32.gmra.mrb[0].mxu0 %v619
      %v690 = vpop.f32.mrb[0].mxu0
      %v691 = vadd.f32 0.0, %v690
      %v692 = vpop.f32.mrb[0].mxu0
      %693 = vmatprep.mubr.f32.mxu0 0.0
      %694 = vmatmul.mubr.f32.gmra.mrb[0].mxu0 %v622
      %v695 = vpop.f32.mrb[0].mxu0
      %v696 = vadd.f32 0.0, %v695
      %v697 = vpop.f32.mrb[0].mxu0
      %698 = vdwg.mxu0
      %v700 = vsel %vm617, %v597, 0
      %v703 = vsel %vm617, %v598, 0
      %705 = vmatprep.subr.mxu0 0.0
      %706 = vmatpush1.msra.mxu0 %v599
      %707 = vmatprep.subr.mxu0 0.0
      %708 = vmatpush1.msra.mxu0 %v600
      %709 = vmatprep.subr.mxu0 0.0
      %710 = vmatpush1.msra.mxu0 %v601
      %711 = vmatprep.subr.mxu0 0.0
      %712 = vmatpush1.msra.mxu0 %v602
      %713 = vmatprep.subr.mxu0 0.0
      %714 = vmatpush1.msra.mxu0 %v603
      %715 = vmatprep.subr.mxu0 0.0
      %716 = vmatpush1.msra.mxu0 %v604
      %717 = vmatprep.subr.mxu0 0.0
      %718 = vmatpush1.msra.mxu0 %v605
      %719 = vmatprep.subr.mxu0 0.0
      %720 = vmatpush1.msra.mxu0 %v606
      %721 = vmatprep.subr.mxu0 0.0
      %722 = vmatpush1.msra.mxu0 0.0
      %723 = vmatprep.subr.mxu0 0.0
      %724 = vmatpush1.msra.mxu0 0.0
      %725 = vmatprep.subr.mxu0 0.0
      %726 = vmatpush1.msra.mxu0 0.0
      %727 = vmatprep.subr.mxu0 0.0
      %728 = vmatpush1.msra.mxu0 0.0
      %729 = vmatprep.subr.mxu0 0.0
      %730 = vmatpush1.msra.mxu0 0.0
      %731 = vmatprep.subr.mxu0 0.0
      %732 = vmatpush1.msra.mxu0 0.0
      %733 = vmatprep.subr.mxu0 0.0
      %734 = vmatpush1.msra.mxu0 0.0
      %735 = vmatprep.subr.mxu0 0.0
      %736 = vmatpush1.msra.mxu0 0.0
      %737 = vmatprep.subr.mxu0 0.0
      %738 = vmatpush1.msra.mxu0 0.0
      %739 = vmatprep.subr.mxu0 0.0
      %740 = vmatpush1.msra.mxu0 0.0
      %741 = vmatprep.subr.mxu0 0.0
      %742 = vmatpush1.msra.mxu0 0.0
      %743 = vmatprep.subr.mxu0 0.0
      %744 = vmatpush1.msra.mxu0 0.0
      %745 = vmatprep.subr.mxu0 0.0
      %746 = vmatpush1.msra.mxu0 0.0
      %747 = vmatprep.subr.mxu0 0.0
      %748 = vmatpush1.msra.mxu0 0.0
      %749 = vmatprep.subr.mxu0 0.0
      %750 = vmatpush1.msra.mxu0 0.0
      %751 = vmatprep.subr.mxu0 0.0
      %752 = vmatpush1.msra.mxu0 0.0
      %753 = vmatprep.subr.mxu0 0.0
      %754 = vmatpush1.msra.mxu0 0.0
      %755 = vmatprep.subr.mxu0 0.0
      %756 = vmatpush1.msra.mxu0 0.0
      %757 = vmatprep.subr.mxu0 0.0
      %758 = vmatpush1.msra.mxu0 0.0
      %759 = vmatprep.subr.mxu0 0.0
      %760 = vmatpush1.msra.mxu0 0.0
      %761 = vmatprep.subr.mxu0 0.0
      %762 = vmatpush1.msra.mxu0 0.0
      %763 = vmatprep.subr.mxu0 0.0
      %764 = vmatpush1.msra.mxu0 0.0
      %765 = vmatprep.subr.mxu0 0.0
      %766 = vmatpush1.msra.mxu0 0.0
      %767 = vmatprep.subr.mxu0 0.0
      %768 = vmatpush1.msra.mxu0 0.0
      %769 = vmatprep.mubr.f32.mxu0 0.0
      %770 = vmatmul.mubr.f32.gmra.mrb[0].mxu0 %v700
      %v771 = vpop.f32.mrb[0].mxu0
      %v772 = vadd.f32 %v691, %v771
      %v773 = vpop.f32.mrb[0].mxu0
      %774 = vmatprep.mubr.f32.mxu0 0.0
      %775 = vmatmul.mubr.f32.gmra.mrb[0].mxu0 %v703
      %v776 = vpop.f32.mrb[0].mxu0
      %v777 = vadd.f32 %v696, %v776
      %v778 = vpop.f32.mrb[0].mxu0
      %779 = vdwg.mxu0
      %s780 = scalar_lea.vmem %s4, 64
      %v781 = vld [vmem:[%s780] sm:$0xff]
      %v782 = vld [vmem:[%s780 + $0x8] sm:$0xff]
      %v783 = vld [vmem:[%s780 + $0x10] sm:$0xff]
      %v784 = vld [vmem:[%s780 + $0x18] sm:$0xff]
      %v785 = vld [vmem:[%s780 + $0x20] sm:$0xff]
      %v786 = vld [vmem:[%s780 + $0x28] sm:$0xff]
      %v787 = vld [vmem:[%s780 + $0x30] sm:$0xff]
      %v788 = vld [vmem:[%s780 + $0x38] sm:$0xff]
      %789 = vrot.lane.b32.xlu0 %v597, 124
      %v790 = vpop.permute.xlu0 %789
      %791 = vrot.lane.b32.xlu0 %v598, 124
      %v792 = vpop.permute.xlu0 %791
      %v793 = vsel %vm617, %v790, 0
      %v795 = vsel %vm617, %v792, 0
      %797 = vmatprep.subr.mxu0 0.0
      %798 = vmatpush1.msra.mxu0 %v781
      %799 = vmatprep.subr.mxu0 0.0
      %800 = vmatpush1.msra.mxu0 %v782
      %801 = vmatprep.subr.mxu0 0.0
      %802 = vmatpush1.msra.mxu0 %v783
      %803 = vmatprep.subr.mxu0 0.0
      %804 = vmatpush1.msra.mxu0 %v784
      %805 = vmatprep.subr.mxu0 0.0
      %806 = vmatpush1.msra.mxu0 %v785
      %807 = vmatprep.subr.mxu0 0.0
      %808 = vmatpush1.msra.mxu0 %v786
      %809 = vmatprep.subr.mxu0 0.0
      %810 = vmatpush1.msra.mxu0 %v787
      %811 = vmatprep.subr.mxu0 0.0
      %812 = vmatpush1.msra.mxu0 %v788
      %813 = vmatprep.subr.mxu0 0.0
      %814 = vmatpush1.msra.mxu0 0.0
      %815 = vmatprep.subr.mxu0 0.0
      %816 = vmatpush1.msra.mxu0 0.0
      %817 = vmatprep.subr.mxu0 0.0
      %818 = vmatpush1.msra.mxu0 0.0
      %819 = vmatprep.subr.mxu0 0.0
      %820 = vmatpush1.msra.mxu0 0.0
      %821 = vmatprep.subr.mxu0 0.0
      %822 = vmatpush1.msra.mxu0 0.0
      %823 = vmatprep.subr.mxu0 0.0
      %824 = vmatpush1.msra.mxu0 0.0
      %825 = vmatprep.subr.mxu0 0.0
      %826 = vmatpush1.msra.mxu0 0.0
      %827 = vmatprep.subr.mxu0 0.0
      %828 = vmatpush1.msra.mxu0 0.0
      %829 = vmatprep.subr.mxu0 0.0
      %830 = vmatpush1.msra.mxu0 0.0
      %831 = vmatprep.subr.mxu0 0.0
      %832 = vmatpush1.msra.mxu0 0.0
      %833 = vmatprep.subr.mxu0 0.0
      %834 = vmatpush1.msra.mxu0 0.0
      %835 = vmatprep.subr.mxu0 0.0
      %836 = vmatpush1.msra.mxu0 0.0
      %837 = vmatprep.subr.mxu0 0.0
      %838 = vmatpush1.msra.mxu0 0.0
      %839 = vmatprep.subr.mxu0 0.0
      %840 = vmatpush1.msra.mxu0 0.0
      %841 = vmatprep.subr.mxu0 0.0
      %842 = vmatpush1.msra.mxu0 0.0
      %843 = vmatprep.subr.mxu0 0.0
      %844 = vmatpush1.msra.mxu0 0.0
      %845 = vmatprep.subr.mxu0 0.0
      %846 = vmatpush1.msra.mxu0 0.0
      %847 = vmatprep.subr.mxu0 0.0
      %848 = vmatpush1.msra.mxu0 0.0
      %849 = vmatprep.subr.mxu0 0.0
      %850 = vmatpush1.msra.mxu0 0.0
      %851 = vmatprep.subr.mxu0 0.0
      %852 = vmatpush1.msra.mxu0 0.0
      %853 = vmatprep.subr.mxu0 0.0
      %854 = vmatpush1.msra.mxu0 0.0
      %855 = vmatprep.subr.mxu0 0.0
      %856 = vmatpush1.msra.mxu0 0.0
      %857 = vmatprep.subr.mxu0 0.0
      %858 = vmatpush1.msra.mxu0 0.0
      %859 = vmatprep.subr.mxu0 0.0
      %860 = vmatpush1.msra.mxu0 0.0
      %861 = vmatprep.mubr.f32.mxu0 0.0
      %862 = vmatmul.mubr.f32.gmra.mrb[0].mxu0 %v793
      %v863 = vpop.f32.mrb[0].mxu0
      %v864 = vadd.f32 0.0, %v863
      %v865 = vpop.f32.mrb[0].mxu0
      %866 = vmatprep.mubr.f32.mxu0 0.0
      %867 = vmatmul.mubr.f32.gmra.mrb[0].mxu0 %v795
      %v868 = vpop.f32.mrb[0].mxu0
      %v869 = vadd.f32 0.0, %v868
      %v870 = vpop.f32.mrb[0].mxu0
      %871 = vdwg.mxu0
      %v872 = vadd.f32 %v772, %v864
      %v873 = vadd.f32 %v777, %v869
      %s874 = scalar_lea.vmem %s5, 64
      %v875 = vld [vmem:[%s874] sm:$0xff]
      %v876 = vld [vmem:[%s874 + $0x8] sm:$0xff]
      %v877 = vld [vmem:[%s874 + $0x10] sm:$0xff]
      %v878 = vld [vmem:[%s874 + $0x18] sm:$0xff]
      %v879 = vld [vmem:[%s874 + $0x20] sm:$0xff]
      %v880 = vld [vmem:[%s874 + $0x28] sm:$0xff]
      %v881 = vld [vmem:[%s874 + $0x30] sm:$0xff]
      %v882 = vld [vmem:[%s874 + $0x38] sm:$0xff]
      %883 = vrot.lane.b32.xlu0 %v607, 124
      %v884 = vpop.permute.xlu0 %883
      %885 = vrot.lane.b32.xlu0 %v608, 124
      %v886 = vpop.permute.xlu0 %885
      %v887 = vsel %vm617, %v884, 0
      %v889 = vsel %vm617, %v886, 0
      %891 = vmatprep.subr.mxu0 0.0
      %892 = vmatpush1.msra.mxu0 %v875
      %893 = vmatprep.subr.mxu0 0.0
      %894 = vmatpush1.msra.mxu0 %v876
      %895 = vmatprep.subr.mxu0 0.0
      %896 = vmatpush1.msra.mxu0 %v877
      %897 = vmatprep.subr.mxu0 0.0
      %898 = vmatpush1.msra.mxu0 %v878
      %899 = vmatprep.subr.mxu0 0.0
      %900 = vmatpush1.msra.mxu0 %v879
      %901 = vmatprep.subr.mxu0 0.0
      %902 = vmatpush1.msra.mxu0 %v880
      %903 = vmatprep.subr.mxu0 0.0
      %904 = vmatpush1.msra.mxu0 %v881
      %905 = vmatprep.subr.mxu0 0.0
      %906 = vmatpush1.msra.mxu0 %v882
      %907 = vmatprep.subr.mxu0 0.0
      %908 = vmatpush1.msra.mxu0 0.0
      %909 = vmatprep.subr.mxu0 0.0
      %910 = vmatpush1.msra.mxu0 0.0
      %911 = vmatprep.subr.mxu0 0.0
      %912 = vmatpush1.msra.mxu0 0.0
      %913 = vmatprep.subr.mxu0 0.0
      %914 = vmatpush1.msra.mxu0 0.0
      %915 = vmatprep.subr.mxu0 0.0
      %916 = vmatpush1.msra.mxu0 0.0
      %917 = vmatprep.subr.mxu0 0.0
      %918 = vmatpush1.msra.mxu0 0.0
      %919 = vmatprep.subr.mxu0 0.0
      %920 = vmatpush1.msra.mxu0 0.0
      %921 = vmatprep.subr.mxu0 0.0
      %922 = vmatpush1.msra.mxu0 0.0
      %923 = vmatprep.subr.mxu0 0.0
      %924 = vmatpush1.msra.mxu0 0.0
      %925 = vmatprep.subr.mxu0 0.0
      %926 = vmatpush1.msra.mxu0 0.0
      %927 = vmatprep.subr.mxu0 0.0
      %928 = vmatpush1.msra.mxu0 0.0
      %929 = vmatprep.subr.mxu0 0.0
      %930 = vmatpush1.msra.mxu0 0.0
      %931 = vmatprep.subr.mxu0 0.0
      %932 = vmatpush1.msra.mxu0 0.0
      %933 = vmatprep.subr.mxu0 0.0
      %934 = vmatpush1.msra.mxu0 0.0
      %935 = vmatprep.subr.mxu0 0.0
      %936 = vmatpush1.msra.mxu0 0.0
      %937 = vmatprep.subr.mxu0 0.0
      %938 = vmatpush1.msra.mxu0 0.0
      %939 = vmatprep.subr.mxu0 0.0
      %940 = vmatpush1.msra.mxu0 0.0
      %941 = vmatprep.subr.mxu0 0.0
      %942 = vmatpush1.msra.mxu0 0.0
      %943 = vmatprep.subr.mxu0 0.0
      %944 = vmatpush1.msra.mxu0 0.0
      %945 = vmatprep.subr.mxu0 0.0
      %946 = vmatpush1.msra.mxu0 0.0
      %947 = vmatprep.subr.mxu0 0.0
      %948 = vmatpush1.msra.mxu0 0.0
      %949 = vmatprep.subr.mxu0 0.0
      %950 = vmatpush1.msra.mxu0 0.0
      %951 = vmatprep.subr.mxu0 0.0
      %952 = vmatpush1.msra.mxu0 0.0
      %953 = vmatprep.subr.mxu0 0.0
      %954 = vmatpush1.msra.mxu0 0.0
      %955 = vmatprep.mubr.f32.mxu0 0.0
      %956 = vmatmul.mubr.f32.gmra.mrb[0].mxu0 %v887
      %v957 = vpop.f32.mrb[0].mxu0
      %v958 = vadd.f32 0.0, %v957
      %v959 = vpop.f32.mrb[0].mxu0
      %960 = vmatprep.mubr.f32.mxu0 0.0
      %961 = vmatmul.mubr.f32.gmra.mrb[0].mxu0 %v889
      %v962 = vpop.f32.mrb[0].mxu0
      %v963 = vadd.f32 0.0, %v962
      %v964 = vpop.f32.mrb[0].mxu0
      %965 = vdwg.mxu0
      %v966 = vadd.f32 %v872, %v958
      %v967 = vadd.f32 %v873, %v963
      %s968 = scalar_lea.vmem %s4, 128
      %v969 = vld [vmem:[%s968] sm:$0xff]
      %v970 = vld [vmem:[%s968 + $0x8] sm:$0xff]
      %v971 = vld [vmem:[%s968 + $0x10] sm:$0xff]
      %v972 = vld [vmem:[%s968 + $0x18] sm:$0xff]
      %v973 = vld [vmem:[%s968 + $0x20] sm:$0xff]
      %v974 = vld [vmem:[%s968 + $0x28] sm:$0xff]
      %v975 = vld [vmem:[%s968 + $0x30] sm:$0xff]
      %v976 = vld [vmem:[%s968 + $0x38] sm:$0xff]
      %977 = vrot.lane.b32.xlu0 %v597, 120
      %v978 = vpop.permute.xlu0 %977
      %979 = vrot.lane.b32.xlu0 %v598, 120
      %v980 = vpop.permute.xlu0 %979
      %v981 = vsel %vm617, %v978, 0
      %v983 = vsel %vm617, %v980, 0
      %985 = vmatprep.subr.mxu0 0.0
      %986 = vmatpush1.msra.mxu0 %v969
      %987 = vmatprep.subr.mxu0 0.0
      %988 = vmatpush1.msra.mxu0 %v970
      %989 = vmatprep.subr.mxu0 0.0
      %990 = vmatpush1.msra.mxu0 %v971
      %991 = vmatprep.subr.mxu0 0.0
      %992 = vmatpush1.msra.mxu0 %v972
      %993 = vmatprep.subr.mxu0 0.0
      %994 = vmatpush1.msra.mxu0 %v973
      %995 = vmatprep.subr.mxu0 0.0
      %996 = vmatpush1.msra.mxu0 %v974
      %997 = vmatprep.subr.mxu0 0.0
      %998 = vmatpush1.msra.mxu0 %v975
      %999 = vmatprep.subr.mxu0 0.0
      %1000 = vmatpush1.msra.mxu0 %v976
      %1001 = vmatprep.subr.mxu0 0.0
      %1002 = vmatpush1.msra.mxu0 0.0
      %1003 = vmatprep.subr.mxu0 0.0
      %1004 = vmatpush1.msra.mxu0 0.0
      %1005 = vmatprep.subr.mxu0 0.0
      %1006 = vmatpush1.msra.mxu0 0.0
      %1007 = vmatprep.subr.mxu0 0.0
      %1008 = vmatpush1.msra.mxu0 0.0
      %1009 = vmatprep.subr.mxu0 0.0
      %1010 = vmatpush1.msra.mxu0 0.0
      %1011 = vmatprep.subr.mxu0 0.0
      %1012 = vmatpush1.msra.mxu0 0.0
      %1013 = vmatprep.subr.mxu0 0.0
      %1014 = vmatpush1.msra.mxu0 0.0
      %1015 = vmatprep.subr.mxu0 0.0
      %1016 = vmatpush1.msra.mxu0 0.0
      %1017 = vmatprep.subr.mxu0 0.0
      %1018 = vmatpush1.msra.mxu0 0.0
      %1019 = vmatprep.subr.mxu0 0.0
      %1020 = vmatpush1.msra.mxu0 0.0
      %1021 = vmatprep.subr.mxu0 0.0
      %1022 = vmatpush1.msra.mxu0 0.0
      %1023 = vmatprep.subr.mxu0 0.0
      %1024 = vmatpush1.msra.mxu0 0.0
      %1025 = vmatprep.subr.mxu0 0.0
      %1026 = vmatpush1.msra.mxu0 0.0
      %1027 = vmatprep.subr.mxu0 0.0
      %1028 = vmatpush1.msra.mxu0 0.0
      %1029 = vmatprep.subr.mxu0 0.0
      %1030 = vmatpush1.msra.mxu0 0.0
      %1031 = vmatprep.subr.mxu0 0.0
      %1032 = vmatpush1.msra.mxu0 0.0
      %1033 = vmatprep.subr.mxu0 0.0
      %1034 = vmatpush1.msra.mxu0 0.0
      %1035 = vmatprep.subr.mxu0 0.0
      %1036 = vmatpush1.msra.mxu0 0.0
      %1037 = vmatprep.subr.mxu0 0.0
      %1038 = vmatpush1.msra.mxu0 0.0
      %1039 = vmatprep.subr.mxu0 0.0
      %1040 = vmatpush1.msra.mxu0 0.0
      %1041 = vmatprep.subr.mxu0 0.0
      %1042 = vmatpush1.msra.mxu0 0.0
      %1043 = vmatprep.subr.mxu0 0.0
      %1044 = vmatpush1.msra.mxu0 0.0
      %1045 = vmatprep.subr.mxu0 0.0
      %1046 = vmatpush1.msra.mxu0 0.0
      %1047 = vmatprep.subr.mxu0 0.0
      %1048 = vmatpush1.msra.mxu0 0.0
      %1049 = vmatprep.mubr.f32.mxu0 0.0
      %1050 = vmatmul.mubr.f32.gmra.mrb[0].mxu0 %v981
      %v1051 = vpop.f32.mrb[0].mxu0
      %v1052 = vadd.f32 0.0, %v1051
      %v1053 = vpop.f32.mrb[0].mxu0
      %1054 = vmatprep.mubr.f32.mxu0 0.0
      %1055 = vmatmul.mubr.f32.gmra.mrb[0].mxu0 %v983
      %v1056 = vpop.f32.mrb[0].mxu0
      %v1057 = vadd.f32 0.0, %v1056
      %v1058 = vpop.f32.mrb[0].mxu0
      %1059 = vdwg.mxu0
      %v1060 = vadd.f32 %v966, %v1052
      %v1061 = vadd.f32 %v967, %v1057
      %s1062 = scalar_lea.vmem %s5, 128
      %v1063 = vld [vmem:[%s1062] sm:$0xff]
      %v1064 = vld [vmem:[%s1062 + $0x8] sm:$0xff]
      %v1065 = vld [vmem:[%s1062 + $0x10] sm:$0xff]
      %v1066 = vld [vmem:[%s1062 + $0x18] sm:$0xff]
      %v1067 = vld [vmem:[%s1062 + $0x20] sm:$0xff]
      %v1068 = vld [vmem:[%s1062 + $0x28] sm:$0xff]
      %v1069 = vld [vmem:[%s1062 + $0x30] sm:$0xff]
      %v1070 = vld [vmem:[%s1062 + $0x38] sm:$0xff]
      %1071 = vrot.lane.b32.xlu0 %v607, 120
      %v1072 = vpop.permute.xlu0 %1071
      %1073 = vrot.lane.b32.xlu0 %v608, 120
      %v1074 = vpop.permute.xlu0 %1073
      %v1075 = vsel %vm617, %v1072, 0
      %v1077 = vsel %vm617, %v1074, 0
      %1079 = vmatprep.subr.mxu0 0.0
      %1080 = vmatpush1.msra.mxu0 %v1063
      %1081 = vmatprep.subr.mxu0 0.0
      %1082 = vmatpush1.msra.mxu0 %v1064
      %1083 = vmatprep.subr.mxu0 0.0
      %1084 = vmatpush1.msra.mxu0 %v1065
      %1085 = vmatprep.subr.mxu0 0.0
      %1086 = vmatpush1.msra.mxu0 %v1066
      %1087 = vmatprep.subr.mxu0 0.0
      %1088 = vmatpush1.msra.mxu0 %v1067
      %1089 = vmatprep.subr.mxu0 0.0
      %1090 = vmatpush1.msra.mxu0 %v1068
      %1091 = vmatprep.subr.mxu0 0.0
      %1092 = vmatpush1.msra.mxu0 %v1069
      %1093 = vmatprep.subr.mxu0 0.0
      %1094 = vmatpush1.msra.mxu0 %v1070
      %1095 = vmatprep.subr.mxu0 0.0
      %1096 = vmatpush1.msra.mxu0 0.0
      %1097 = vmatprep.subr.mxu0 0.0
      %1098 = vmatpush1.msra.mxu0 0.0
      %1099 = vmatprep.subr.mxu0 0.0
      %1100 = vmatpush1.msra.mxu0 0.0
      %1101 = vmatprep.subr.mxu0 0.0
      %1102 = vmatpush1.msra.mxu0 0.0
      %1103 = vmatprep.subr.mxu0 0.0
      %1104 = vmatpush1.msra.mxu0 0.0
      %1105 = vmatprep.subr.mxu0 0.0
      %1106 = vmatpush1.msra.mxu0 0.0
      %1107 = vmatprep.subr.mxu0 0.0
      %1108 = vmatpush1.msra.mxu0 0.0
      %1109 = vmatprep.subr.mxu0 0.0
      %1110 = vmatpush1.msra.mxu0 0.0
      %1111 = vmatprep.subr.mxu0 0.0
      %1112 = vmatpush1.msra.mxu0 0.0
      %1113 = vmatprep.subr.mxu0 0.0
      %1114 = vmatpush1.msra.mxu0 0.0
      %1115 = vmatprep.subr.mxu0 0.0
      %1116 = vmatpush1.msra.mxu0 0.0
      %1117 = vmatprep.subr.mxu0 0.0
      %1118 = vmatpush1.msra.mxu0 0.0
      %1119 = vmatprep.subr.mxu0 0.0
      %1120 = vmatpush1.msra.mxu0 0.0
      %1121 = vmatprep.subr.mxu0 0.0
      %1122 = vmatpush1.msra.mxu0 0.0
      %1123 = vmatprep.subr.mxu0 0.0
      %1124 = vmatpush1.msra.mxu0 0.0
      %1125 = vmatprep.subr.mxu0 0.0
      %1126 = vmatpush1.msra.mxu0 0.0
      %1127 = vmatprep.subr.mxu0 0.0
      %1128 = vmatpush1.msra.mxu0 0.0
      %1129 = vmatprep.subr.mxu0 0.0
      %1130 = vmatpush1.msra.mxu0 0.0
      %1131 = vmatprep.subr.mxu0 0.0
      %1132 = vmatpush1.msra.mxu0 0.0
      %1133 = vmatprep.subr.mxu0 0.0
      %1134 = vmatpush1.msra.mxu0 0.0
      %1135 = vmatprep.subr.mxu0 0.0
      %1136 = vmatpush1.msra.mxu0 0.0
      %1137 = vmatprep.subr.mxu0 0.0
      %1138 = vmatpush1.msra.mxu0 0.0
      %1139 = vmatprep.subr.mxu0 0.0
      %1140 = vmatpush1.msra.mxu0 0.0
      %1141 = vmatprep.subr.mxu0 0.0
      %1142 = vmatpush1.msra.mxu0 0.0
      %1143 = vmatprep.mubr.f32.mxu0 0.0
      %1144 = vmatmul.mubr.f32.gmra.mrb[0].mxu0 %v1075
      %v1145 = vpop.f32.mrb[0].mxu0
      %v1146 = vadd.f32 0.0, %v1145
      %v1147 = vpop.f32.mrb[0].mxu0
      %1148 = vmatprep.mubr.f32.mxu0 0.0
      %1149 = vmatmul.mubr.f32.gmra.mrb[0].mxu0 %v1077
      %v1150 = vpop.f32.mrb[0].mxu0
      %v1151 = vadd.f32 0.0, %v1150
      %v1152 = vpop.f32.mrb[0].mxu0
      %1153 = vdwg.mxu0
      %v1154 = vadd.f32 %v1060, %v1146
      %v1155 = vadd.f32 %v1061, %v1151
      %v1156 = vld [vmem:[%s398 + $0x1] sm:$0xff]
      %v1157 = vld [vmem:[%s398 + $0x9] sm:$0xff]
      %s1158 = scalar_lea.vmem %s4, 192
      %v1159 = vld [vmem:[%s1158] sm:$0xff]
      %v1160 = vld [vmem:[%s1158 + $0x8] sm:$0xff]
      %v1161 = vld [vmem:[%s1158 + $0x10] sm:$0xff]
      %v1162 = vld [vmem:[%s1158 + $0x18] sm:$0xff]
      %v1163 = vld [vmem:[%s1158 + $0x20] sm:$0xff]
      %v1164 = vld [vmem:[%s1158 + $0x28] sm:$0xff]
      %v1165 = vld [vmem:[%s1158 + $0x30] sm:$0xff]
      %v1166 = vld [vmem:[%s1158 + $0x38] sm:$0xff]
      %v1168 = vsel %vm617, %v1156, 0
      %v1171 = vsel %vm617, %v1157, 0
      %1173 = vmatprep.subr.mxu0 0.0
      %1174 = vmatpush1.msra.mxu0 %v1159
      %1175 = vmatprep.subr.mxu0 0.0
      %1176 = vmatpush1.msra.mxu0 %v1160
      %1177 = vmatprep.subr.mxu0 0.0
      %1178 = vmatpush1.msra.mxu0 %v1161
      %1179 = vmatprep.subr.mxu0 0.0
      %1180 = vmatpush1.msra.mxu0 %v1162
      %1181 = vmatprep.subr.mxu0 0.0
      %1182 = vmatpush1.msra.mxu0 %v1163
      %1183 = vmatprep.subr.mxu0 0.0
      %1184 = vmatpush1.msra.mxu0 %v1164
      %1185 = vmatprep.subr.mxu0 0.0
      %1186 = vmatpush1.msra.mxu0 %v1165
      %1187 = vmatprep.subr.mxu0 0.0
      %1188 = vmatpush1.msra.mxu0 %v1166
      %1189 = vmatprep.subr.mxu0 0.0
      %1190 = vmatpush1.msra.mxu0 0.0
      %1191 = vmatprep.subr.mxu0 0.0
      %1192 = vmatpush1.msra.mxu0 0.0
      %1193 = vmatprep.subr.mxu0 0.0
      %1194 = vmatpush1.msra.mxu0 0.0
      %1195 = vmatprep.subr.mxu0 0.0
      %1196 = vmatpush1.msra.mxu0 0.0
      %1197 = vmatprep.subr.mxu0 0.0
      %1198 = vmatpush1.msra.mxu0 0.0
      %1199 = vmatprep.subr.mxu0 0.0
      %1200 = vmatpush1.msra.mxu0 0.0
      %1201 = vmatprep.subr.mxu0 0.0
      %1202 = vmatpush1.msra.mxu0 0.0
      %1203 = vmatprep.subr.mxu0 0.0
      %1204 = vmatpush1.msra.mxu0 0.0
      %1205 = vmatprep.subr.mxu0 0.0
      %1206 = vmatpush1.msra.mxu0 0.0
      %1207 = vmatprep.subr.mxu0 0.0
      %1208 = vmatpush1.msra.mxu0 0.0
      %1209 = vmatprep.subr.mxu0 0.0
      %1210 = vmatpush1.msra.mxu0 0.0
      %1211 = vmatprep.subr.mxu0 0.0
      %1212 = vmatpush1.msra.mxu0 0.0
      %1213 = vmatprep.subr.mxu0 0.0
      %1214 = vmatpush1.msra.mxu0 0.0
      %1215 = vmatprep.subr.mxu0 0.0
      %1216 = vmatpush1.msra.mxu0 0.0
      %1217 = vmatprep.subr.mxu0 0.0
      %1218 = vmatpush1.msra.mxu0 0.0
      %1219 = vmatprep.subr.mxu0 0.0
      %1220 = vmatpush1.msra.mxu0 0.0
      %1221 = vmatprep.subr.mxu0 0.0
      %1222 = vmatpush1.msra.mxu0 0.0
      %1223 = vmatprep.subr.mxu0 0.0
      %1224 = vmatpush1.msra.mxu0 0.0
      %1225 = vmatprep.subr.mxu0 0.0
      %1226 = vmatpush1.msra.mxu0 0.0
      %1227 = vmatprep.subr.mxu0 0.0
      %1228 = vmatpush1.msra.mxu0 0.0
      %1229 = vmatprep.subr.mxu0 0.0
      %1230 = vmatpush1.msra.mxu0 0.0
      %1231 = vmatprep.subr.mxu0 0.0
      %1232 = vmatpush1.msra.mxu0 0.0
      %1233 = vmatprep.subr.mxu0 0.0
      %1234 = vmatpush1.msra.mxu0 0.0
      %1235 = vmatprep.subr.mxu0 0.0
      %1236 = vmatpush1.msra.mxu0 0.0
      %1237 = vmatprep.mubr.f32.mxu0 0.0
      %1238 = vmatmul.mubr.f32.gmra.mrb[0].mxu0 %v1168
      %v1239 = vpop.f32.mrb[0].mxu0
      %v1240 = vadd.f32 0.0, %v1239
      %v1241 = vpop.f32.mrb[0].mxu0
      %1242 = vmatprep.mubr.f32.mxu0 0.0
      %1243 = vmatmul.mubr.f32.gmra.mrb[0].mxu0 %v1171
      %v1244 = vpop.f32.mrb[0].mxu0
      %v1245 = vadd.f32 0.0, %v1244
      %v1246 = vpop.f32.mrb[0].mxu0
      %1247 = vdwg.mxu0
      %v1248 = vadd.f32 %v1154, %v1240
      %v1249 = vadd.f32 %v1155, %v1245
      %v1250 = vld [vmem:[#allocation2 + $0x1] sm:$0xff]
      %v1251 = vld [vmem:[#allocation2 + $0x9] sm:$0xff]
      %s1252 = scalar_lea.vmem %s5, 192
      %v1253 = vld [vmem:[%s1252] sm:$0xff]
      %v1254 = vld [vmem:[%s1252 + $0x8] sm:$0xff]
      %v1255 = vld [vmem:[%s1252 + $0x10] sm:$0xff]
      %v1256 = vld [vmem:[%s1252 + $0x18] sm:$0xff]
      %v1257 = vld [vmem:[%s1252 + $0x20] sm:$0xff]
      %v1258 = vld [vmem:[%s1252 + $0x28] sm:$0xff]
      %v1259 = vld [vmem:[%s1252 + $0x30] sm:$0xff]
      %v1260 = vld [vmem:[%s1252 + $0x38] sm:$0xff]
      %v1262 = vsel %vm617, %v1250, 0
      %v1265 = vsel %vm617, %v1251, 0
      %1267 = vmatprep.subr.mxu0 0.0
      %1268 = vmatpush1.msra.mxu0 %v1253
      %1269 = vmatprep.subr.mxu0 0.0
      %1270 = vmatpush1.msra.mxu0 %v1254
      %1271 = vmatprep.subr.mxu0 0.0
      %1272 = vmatpush1.msra.mxu0 %v1255
      %1273 = vmatprep.subr.mxu0 0.0
      %1274 = vmatpush1.msra.mxu0 %v1256
      %1275 = vmatprep.subr.mxu0 0.0
      %1276 = vmatpush1.msra.mxu0 %v1257
      %1277 = vmatprep.subr.mxu0 0.0
      %1278 = vmatpush1.msra.mxu0 %v1258
      %1279 = vmatprep.subr.mxu0 0.0
      %1280 = vmatpush1.msra.mxu0 %v1259
      %1281 = vmatprep.subr.mxu0 0.0
      %1282 = vmatpush1.msra.mxu0 %v1260
      %1283 = vmatprep.subr.mxu0 0.0
      %1284 = vmatpush1.msra.mxu0 0.0
      %1285 = vmatprep.subr.mxu0 0.0
      %1286 = vmatpush1.msra.mxu0 0.0
      %1287 = vmatprep.subr.mxu0 0.0
      %1288 = vmatpush1.msra.mxu0 0.0
      %1289 = vmatprep.subr.mxu0 0.0
      %1290 = vmatpush1.msra.mxu0 0.0
      %1291 = vmatprep.subr.mxu0 0.0
      %1292 = vmatpush1.msra.mxu0 0.0
      %1293 = vmatprep.subr.mxu0 0.0
      %1294 = vmatpush1.msra.mxu0 0.0
      %1295 = vmatprep.subr.mxu0 0.0
      %1296 = vmatpush1.msra.mxu0 0.0
      %1297 = vmatprep.subr.mxu0 0.0
      %1298 = vmatpush1.msra.mxu0 0.0
      %1299 = vmatprep.subr.mxu0 0.0
      %1300 = vmatpush1.msra.mxu0 0.0
      %1301 = vmatprep.subr.mxu0 0.0
      %1302 = vmatpush1.msra.mxu0 0.0
      %1303 = vmatprep.subr.mxu0 0.0
      %1304 = vmatpush1.msra.mxu0 0.0
      %1305 = vmatprep.subr.mxu0 0.0
      %1306 = vmatpush1.msra.mxu0 0.0
      %1307 = vmatprep.subr.mxu0 0.0
      %1308 = vmatpush1.msra.mxu0 0.0
      %1309 = vmatprep.subr.mxu0 0.0
      %1310 = vmatpush1.msra.mxu0 0.0
      %1311 = vmatprep.subr.mxu0 0.0
      %1312 = vmatpush1.msra.mxu0 0.0
      %1313 = vmatprep.subr.mxu0 0.0
      %1314 = vmatpush1.msra.mxu0 0.0
      %1315 = vmatprep.subr.mxu0 0.0
      %1316 = vmatpush1.msra.mxu0 0.0
      %1317 = vmatprep.subr.mxu0 0.0
      %1318 = vmatpush1.msra.mxu0 0.0
      %1319 = vmatprep.subr.mxu0 0.0
      %1320 = vmatpush1.msra.mxu0 0.0
      %1321 = vmatprep.subr.mxu0 0.0
      %1322 = vmatpush1.msra.mxu0 0.0
      %1323 = vmatprep.subr.mxu0 0.0
      %1324 = vmatpush1.msra.mxu0 0.0
      %1325 = vmatprep.subr.mxu0 0.0
      %1326 = vmatpush1.msra.mxu0 0.0
      %1327 = vmatprep.subr.mxu0 0.0
      %1328 = vmatpush1.msra.mxu0 0.0
      %1329 = vmatprep.subr.mxu0 0.0
      %1330 = vmatpush1.msra.mxu0 0.0
      %1331 = vmatprep.mubr.f32.mxu0 0.0
      %1332 = vmatmul.mubr.f32.gmra.mrb[0].mxu0 %v1262
      %v1333 = vpop.f32.mrb[0].mxu0
      %v1334 = vadd.f32 0.0, %v1333
      %v1335 = vpop.f32.mrb[0].mxu0
      %1336 = vmatprep.mubr.f32.mxu0 0.0
      %1337 = vmatmul.mubr.f32.gmra.mrb[0].mxu0 %v1265
      %v1338 = vpop.f32.mrb[0].mxu0
      %v1339 = vadd.f32 0.0, %v1338
      %v1340 = vpop.f32.mrb[0].mxu0
      %1341 = vdwg.mxu0
      %v1342 = vadd.f32 %v1248, %v1334
      %v1343 = vadd.f32 %v1249, %v1339
      %s1344 = scalar_lea.vmem %s4, 256
      %v1345 = vld [vmem:[%s1344] sm:$0xff]
      %v1346 = vld [vmem:[%s1344 + $0x8] sm:$0xff]
      %v1347 = vld [vmem:[%s1344 + $0x10] sm:$0xff]
      %v1348 = vld [vmem:[%s1344 + $0x18] sm:$0xff]
      %v1349 = vld [vmem:[%s1344 + $0x20] sm:$0xff]
      %v1350 = vld [vmem:[%s1344 + $0x28] sm:$0xff]
      %v1351 = vld [vmem:[%s1344 + $0x30] sm:$0xff]
      %v1352 = vld [vmem:[%s1344 + $0x38] sm:$0xff]
      %1353 = vrot.lane.b32.xlu0 %v1156, 124
      %v1354 = vpop.permute.xlu0 %1353
      %1355 = vrot.lane.b32.xlu0 %v1157, 124
      %v1356 = vpop.permute.xlu0 %1355
      %v1357 = vsel %vm617, %v1354, 0
      %v1359 = vsel %vm617, %v1356, 0
      %1361 = vmatprep.subr.mxu0 0.0
      %1362 = vmatpush1.msra.mxu0 %v1345
      %1363 = vmatprep.subr.mxu0 0.0
      %1364 = vmatpush1.msra.mxu0 %v1346
      %1365 = vmatprep.subr.mxu0 0.0
      %1366 = vmatpush1.msra.mxu0 %v1347
      %1367 = vmatprep.subr.mxu0 0.0
      %1368 = vmatpush1.msra.mxu0 %v1348
      %1369 = vmatprep.subr.mxu0 0.0
      %1370 = vmatpush1.msra.mxu0 %v1349
      %1371 = vmatprep.subr.mxu0 0.0
      %1372 = vmatpush1.msra.mxu0 %v1350
      %1373 = vmatprep.subr.mxu0 0.0
      %1374 = vmatpush1.msra.mxu0 %v1351
      %1375 = vmatprep.subr.mxu0 0.0
      %1376 = vmatpush1.msra.mxu0 %v1352
      %1377 = vmatprep.subr.mxu0 0.0
      %1378 = vmatpush1.msra.mxu0 0.0
      %1379 = vmatprep.subr.mxu0 0.0
      %1380 = vmatpush1.msra.mxu0 0.0
      %1381 = vmatprep.subr.mxu0 0.0
      %1382 = vmatpush1.msra.mxu0 0.0
      %1383 = vmatprep.subr.mxu0 0.0
      %1384 = vmatpush1.msra.mxu0 0.0
      %1385 = vmatprep.subr.mxu0 0.0
      %1386 = vmatpush1.msra.mxu0 0.0
      %1387 = vmatprep.subr.mxu0 0.0
      %1388 = vmatpush1.msra.mxu0 0.0
      %1389 = vmatprep.subr.mxu0 0.0
      %1390 = vmatpush1.msra.mxu0 0.0
      %1391 = vmatprep.subr.mxu0 0.0
      %1392 = vmatpush1.msra.mxu0 0.0
      %1393 = vmatprep.subr.mxu0 0.0
      %1394 = vmatpush1.msra.mxu0 0.0
      %1395 = vmatprep.subr.mxu0 0.0
      %1396 = vmatpush1.msra.mxu0 0.0
      %1397 = vmatprep.subr.mxu0 0.0
      %1398 = vmatpush1.msra.mxu0 0.0
      %1399 = vmatprep.subr.mxu0 0.0
      %1400 = vmatpush1.msra.mxu0 0.0
      %1401 = vmatprep.subr.mxu0 0.0
      %1402 = vmatpush1.msra.mxu0 0.0
      %1403 = vmatprep.subr.mxu0 0.0
      %1404 = vmatpush1.msra.mxu0 0.0
      %1405 = vmatprep.subr.mxu0 0.0
      %1406 = vmatpush1.msra.mxu0 0.0
      %1407 = vmatprep.subr.mxu0 0.0
      %1408 = vmatpush1.msra.mxu0 0.0
      %1409 = vmatprep.subr.mxu0 0.0
      %1410 = vmatpush1.msra.mxu0 0.0
      %1411 = vmatprep.subr.mxu0 0.0
      %1412 = vmatpush1.msra.mxu0 0.0
      %1413 = vmatprep.subr.mxu0 0.0
      %1414 = vmatpush1.msra.mxu0 0.0
      %1415 = vmatprep.subr.mxu0 0.0
      %1416 = vmatpush1.msra.mxu0 0.0
      %1417 = vmatprep.subr.mxu0 0.0
      %1418 = vmatpush1.msra.mxu0 0.0
      %1419 = vmatprep.subr.mxu0 0.0
      %1420 = vmatpush1.msra.mxu0 0.0
      %1421 = vmatprep.subr.mxu0 0.0
      %1422 = vmatpush1.msra.mxu0 0.0
      %1423 = vmatprep.subr.mxu0 0.0
      %1424 = vmatpush1.msra.mxu0 0.0
      %1425 = vmatprep.mubr.f32.mxu0 0.0
      %1426 = vmatmul.mubr.f32.gmra.mrb[0].mxu0 %v1357
      %v1427 = vpop.f32.mrb[0].mxu0
      %v1428 = vadd.f32 0.0, %v1427
      %v1429 = vpop.f32.mrb[0].mxu0
      %1430 = vmatprep.mubr.f32.mxu0 0.0
      %1431 = vmatmul.mubr.f32.gmra.mrb[0].mxu0 %v1359
      %v1432 = vpop.f32.mrb[0].mxu0
      %v1433 = vadd.f32 0.0, %v1432
      %v1434 = vpop.f32.mrb[0].mxu0
      %1435 = vdwg.mxu0
      %v1436 = vadd.f32 %v1342, %v1428
      %v1437 = vadd.f32 %v1343, %v1433
      %s1438 = scalar_lea.vmem %s5, 256
      %v1439 = vld [vmem:[%s1438] sm:$0xff]
      %v1440 = vld [vmem:[%s1438 + $0x8] sm:$0xff]
      %v1441 = vld [vmem:[%s1438 + $0x10] sm:$0xff]
      %v1442 = vld [vmem:[%s1438 + $0x18] sm:$0xff]
      %v1443 = vld [vmem:[%s1438 + $0x20] sm:$0xff]
      %v1444 = vld [vmem:[%s1438 + $0x28] sm:$0xff]
      %v1445 = vld [vmem:[%s1438 + $0x30] sm:$0xff]
      %v1446 = vld [vmem:[%s1438 + $0x38] sm:$0xff]
      %1447 = vrot.lane.b32.xlu0 %v1250, 124
      %v1448 = vpop.permute.xlu0 %1447
      %1449 = vrot.lane.b32.xlu0 %v1251, 124
      %v1450 = vpop.permute.xlu0 %1449
      %v1451 = vsel %vm617, %v1448, 0
      %v1453 = vsel %vm617, %v1450, 0
      %1455 = vmatprep.subr.mxu0 0.0
      %1456 = vmatpush1.msra.mxu0 %v1439
      %1457 = vmatprep.subr.mxu0 0.0
      %1458 = vmatpush1.msra.mxu0 %v1440
      %1459 = vmatprep.subr.mxu0 0.0
      %1460 = vmatpush1.msra.mxu0 %v1441
      %1461 = vmatprep.subr.mxu0 0.0
      %1462 = vmatpush1.msra.mxu0 %v1442
      %1463 = vmatprep.subr.mxu0 0.0
      %1464 = vmatpush1.msra.mxu0 %v1443
      %1465 = vmatprep.subr.mxu0 0.0
      %1466 = vmatpush1.msra.mxu0 %v1444
      %1467 = vmatprep.subr.mxu0 0.0
      %1468 = vmatpush1.msra.mxu0 %v1445
      %1469 = vmatprep.subr.mxu0 0.0
      %1470 = vmatpush1.msra.mxu0 %v1446
      %1471 = vmatprep.subr.mxu0 0.0
      %1472 = vmatpush1.msra.mxu0 0.0
      %1473 = vmatprep.subr.mxu0 0.0
      %1474 = vmatpush1.msra.mxu0 0.0
      %1475 = vmatprep.subr.mxu0 0.0
      %1476 = vmatpush1.msra.mxu0 0.0
      %1477 = vmatprep.subr.mxu0 0.0
      %1478 = vmatpush1.msra.mxu0 0.0
      %1479 = vmatprep.subr.mxu0 0.0
      %1480 = vmatpush1.msra.mxu0 0.0
      %1481 = vmatprep.subr.mxu0 0.0
      %1482 = vmatpush1.msra.mxu0 0.0
      %1483 = vmatprep.subr.mxu0 0.0
      %1484 = vmatpush1.msra.mxu0 0.0
      %1485 = vmatprep.subr.mxu0 0.0
      %1486 = vmatpush1.msra.mxu0 0.0
      %1487 = vmatprep.subr.mxu0 0.0
      %1488 = vmatpush1.msra.mxu0 0.0
      %1489 = vmatprep.subr.mxu0 0.0
      %1490 = vmatpush1.msra.mxu0 0.0
      %1491 = vmatprep.subr.mxu0 0.0
      %1492 = vmatpush1.msra.mxu0 0.0
      %1493 = vmatprep.subr.mxu0 0.0
      %1494 = vmatpush1.msra.mxu0 0.0
      %1495 = vmatprep.subr.mxu0 0.0
      %1496 = vmatpush1.msra.mxu0 0.0
      %1497 = vmatprep.subr.mxu0 0.0
      %1498 = vmatpush1.msra.mxu0 0.0
      %1499 = vmatprep.subr.mxu0 0.0
      %1500 = vmatpush1.msra.mxu0 0.0
      %1501 = vmatprep.subr.mxu0 0.0
      %1502 = vmatpush1.msra.mxu0 0.0
      %1503 = vmatprep.subr.mxu0 0.0
      %1504 = vmatpush1.msra.mxu0 0.0
      %1505 = vmatprep.subr.mxu0 0.0
      %1506 = vmatpush1.msra.mxu0 0.0
      %1507 = vmatprep.subr.mxu0 0.0
      %1508 = vmatpush1.msra.mxu0 0.0
      %1509 = vmatprep.subr.mxu0 0.0
      %1510 = vmatpush1.msra.mxu0 0.0
      %1511 = vmatprep.subr.mxu0 0.0
      %1512 = vmatpush1.msra.mxu0 0.0
      %1513 = vmatprep.subr.mxu0 0.0
      %1514 = vmatpush1.msra.mxu0 0.0
      %1515 = vmatprep.subr.mxu0 0.0
      %1516 = vmatpush1.msra.mxu0 0.0
      %1517 = vmatprep.subr.mxu0 0.0
      %1518 = vmatpush1.msra.mxu0 0.0
      %1519 = vmatprep.mubr.f32.mxu0 0.0
      %1520 = vmatmul.mubr.f32.gmra.mrb[0].mxu0 %v1451
      %v1521 = vpop.f32.mrb[0].mxu0
      %v1522 = vadd.f32 0.0, %v1521
      %v1523 = vpop.f32.mrb[0].mxu0
      %1524 = vmatprep.mubr.f32.mxu0 0.0
      %1525 = vmatmul.mubr.f32.gmra.mrb[0].mxu0 %v1453
      %v1526 = vpop.f32.mrb[0].mxu0
      %v1527 = vadd.f32 0.0, %v1526
      %v1528 = vpop.f32.mrb[0].mxu0
      %1529 = vdwg.mxu0
      %v1530 = vadd.f32 %v1436, %v1522
      %v1531 = vadd.f32 %v1437, %v1527
      %s1532 = scalar_lea.vmem %s4, 320
      %v1533 = vld [vmem:[%s1532] sm:$0xff]
      %v1534 = vld [vmem:[%s1532 + $0x8] sm:$0xff]
      %v1535 = vld [vmem:[%s1532 + $0x10] sm:$0xff]
      %v1536 = vld [vmem:[%s1532 + $0x18] sm:$0xff]
      %v1537 = vld [vmem:[%s1532 + $0x20] sm:$0xff]
      %v1538 = vld [vmem:[%s1532 + $0x28] sm:$0xff]
      %v1539 = vld [vmem:[%s1532 + $0x30] sm:$0xff]
      %v1540 = vld [vmem:[%s1532 + $0x38] sm:$0xff]
      %1541 = vrot.lane.b32.xlu0 %v1156, 120
      %v1542 = vpop.permute.xlu0 %1541
      %1543 = vrot.lane.b32.xlu0 %v1157, 120
      %v1544 = vpop.permute.xlu0 %1543
      %v1545 = vsel %vm617, %v1542, 0
      %v1547 = vsel %vm617, %v1544, 0
      %1549 = vmatprep.subr.mxu0 0.0
      %1550 = vmatpush1.msra.mxu0 %v1533
      %1551 = vmatprep.subr.mxu0 0.0
      %1552 = vmatpush1.msra.mxu0 %v1534
      %1553 = vmatprep.subr.mxu0 0.0
      %1554 = vmatpush1.msra.mxu0 %v1535
      %1555 = vmatprep.subr.mxu0 0.0
      %1556 = vmatpush1.msra.mxu0 %v1536
      %1557 = vmatprep.subr.mxu0 0.0
      %1558 = vmatpush1.msra.mxu0 %v1537
      %1559 = vmatprep.subr.mxu0 0.0
      %1560 = vmatpush1.msra.mxu0 %v1538
      %1561 = vmatprep.subr.mxu0 0.0
      %1562 = vmatpush1.msra.mxu0 %v1539
      %1563 = vmatprep.subr.mxu0 0.0
      %1564 = vmatpush1.msra.mxu0 %v1540
      %1565 = vmatprep.subr.mxu0 0.0
      %1566 = vmatpush1.msra.mxu0 0.0
      %1567 = vmatprep.subr.mxu0 0.0
      %1568 = vmatpush1.msra.mxu0 0.0
      %1569 = vmatprep.subr.mxu0 0.0
      %1570 = vmatpush1.msra.mxu0 0.0
      %1571 = vmatprep.subr.mxu0 0.0
      %1572 = vmatpush1.msra.mxu0 0.0
      %1573 = vmatprep.subr.mxu0 0.0
      %1574 = vmatpush1.msra.mxu0 0.0
      %1575 = vmatprep.subr.mxu0 0.0
      %1576 = vmatpush1.msra.mxu0 0.0
      %1577 = vmatprep.subr.mxu0 0.0
      %1578 = vmatpush1.msra.mxu0 0.0
      %1579 = vmatprep.subr.mxu0 0.0
      %1580 = vmatpush1.msra.mxu0 0.0
      %1581 = vmatprep.subr.mxu0 0.0
      %1582 = vmatpush1.msra.mxu0 0.0
      %1583 = vmatprep.subr.mxu0 0.0
      %1584 = vmatpush1.msra.mxu0 0.0
      %1585 = vmatprep.subr.mxu0 0.0
      %1586 = vmatpush1.msra.mxu0 0.0
      %1587 = vmatprep.subr.mxu0 0.0
      %1588 = vmatpush1.msra.mxu0 0.0
      %1589 = vmatprep.subr.mxu0 0.0
      %1590 = vmatpush1.msra.mxu0 0.0
      %1591 = vmatprep.subr.mxu0 0.0
      %1592 = vmatpush1.msra.mxu0 0.0
      %1593 = vmatprep.subr.mxu0 0.0
      %1594 = vmatpush1.msra.mxu0 0.0
      %1595 = vmatprep.subr.mxu0 0.0
      %1596 = vmatpush1.msra.mxu0 0.0
      %1597 = vmatprep.subr.mxu0 0.0
      %1598 = vmatpush1.msra.mxu0 0.0
      %1599 = vmatprep.subr.mxu0 0.0
      %1600 = vmatpush1.msra.mxu0 0.0
      %1601 = vmatprep.subr.mxu0 0.0
      %1602 = vmatpush1.msra.mxu0 0.0
      %1603 = vmatprep.subr.mxu0 0.0
      %1604 = vmatpush1.msra.mxu0 0.0
      %1605 = vmatprep.subr.mxu0 0.0
      %1606 = vmatpush1.msra.mxu0 0.0
      %1607 = vmatprep.subr.mxu0 0.0
      %1608 = vmatpush1.msra.mxu0 0.0
      %1609 = vmatprep.subr.mxu0 0.0
      %1610 = vmatpush1.msra.mxu0 0.0
      %1611 = vmatprep.subr.mxu0 0.0
      %1612 = vmatpush1.msra.mxu0 0.0
      %1613 = vmatprep.mubr.f32.mxu0 0.0
      %1614 = vmatmul.mubr.f32.gmra.mrb[0].mxu0 %v1545
      %v1615 = vpop.f32.mrb[0].mxu0
      %v1616 = vadd.f32 0.0, %v1615
      %v1617 = vpop.f32.mrb[0].mxu0
      %1618 = vmatprep.mubr.f32.mxu0 0.0
      %1619 = vmatmul.mubr.f32.gmra.mrb[0].mxu0 %v1547
      %v1620 = vpop.f32.mrb[0].mxu0
      %v1621 = vadd.f32 0.0, %v1620
      %v1622 = vpop.f32.mrb[0].mxu0
      %1623 = vdwg.mxu0
      %v1624 = vadd.f32 %v1530, %v1616
      %v1625 = vadd.f32 %v1531, %v1621
      %s1626 = scalar_lea.vmem %s5, 320
      %v1627 = vld [vmem:[%s1626] sm:$0xff]
      %v1628 = vld [vmem:[%s1626 + $0x8] sm:$0xff]
      %v1629 = vld [vmem:[%s1626 + $0x10] sm:$0xff]
      %v1630 = vld [vmem:[%s1626 + $0x18] sm:$0xff]
      %v1631 = vld [vmem:[%s1626 + $0x20] sm:$0xff]
      %v1632 = vld [vmem:[%s1626 + $0x28] sm:$0xff]
      %v1633 = vld [vmem:[%s1626 + $0x30] sm:$0xff]
      %v1634 = vld [vmem:[%s1626 + $0x38] sm:$0xff]
      %1635 = vrot.lane.b32.xlu0 %v1250, 120
      %v1636 = vpop.permute.xlu0 %1635
      %1637 = vrot.lane.b32.xlu0 %v1251, 120
      %v1638 = vpop.permute.xlu0 %1637
      %v1639 = vsel %vm617, %v1636, 0
      %v1641 = vsel %vm617, %v1638, 0
      %1643 = vmatprep.subr.mxu0 0.0
      %1644 = vmatpush1.msra.mxu0 %v1627
      %1645 = vmatprep.subr.mxu0 0.0
      %1646 = vmatpush1.msra.mxu0 %v1628
      %1647 = vmatprep.subr.mxu0 0.0
      %1648 = vmatpush1.msra.mxu0 %v1629
      %1649 = vmatprep.subr.mxu0 0.0
      %1650 = vmatpush1.msra.mxu0 %v1630
      %1651 = vmatprep.subr.mxu0 0.0
      %1652 = vmatpush1.msra.mxu0 %v1631
      %1653 = vmatprep.subr.mxu0 0.0
      %1654 = vmatpush1.msra.mxu0 %v1632
      %1655 = vmatprep.subr.mxu0 0.0
      %1656 = vmatpush1.msra.mxu0 %v1633
      %1657 = vmatprep.subr.mxu0 0.0
      %1658 = vmatpush1.msra.mxu0 %v1634
      %1659 = vmatprep.subr.mxu0 0.0
      %1660 = vmatpush1.msra.mxu0 0.0
      %1661 = vmatprep.subr.mxu0 0.0
      %1662 = vmatpush1.msra.mxu0 0.0
      %1663 = vmatprep.subr.mxu0 0.0
      %1664 = vmatpush1.msra.mxu0 0.0
      %1665 = vmatprep.subr.mxu0 0.0
      %1666 = vmatpush1.msra.mxu0 0.0
      %1667 = vmatprep.subr.mxu0 0.0
      %1668 = vmatpush1.msra.mxu0 0.0
      %1669 = vmatprep.subr.mxu0 0.0
      %1670 = vmatpush1.msra.mxu0 0.0
      %1671 = vmatprep.subr.mxu0 0.0
      %1672 = vmatpush1.msra.mxu0 0.0
      %1673 = vmatprep.subr.mxu0 0.0
      %1674 = vmatpush1.msra.mxu0 0.0
      %1675 = vmatprep.subr.mxu0 0.0
      %1676 = vmatpush1.msra.mxu0 0.0
      %1677 = vmatprep.subr.mxu0 0.0
      %1678 = vmatpush1.msra.mxu0 0.0
      %1679 = vmatprep.subr.mxu0 0.0
      %1680 = vmatpush1.msra.mxu0 0.0
      %1681 = vmatprep.subr.mxu0 0.0
      %1682 = vmatpush1.msra.mxu0 0.0
      %1683 = vmatprep.subr.mxu0 0.0
      %1684 = vmatpush1.msra.mxu0 0.0
      %1685 = vmatprep.subr.mxu0 0.0
      %1686 = vmatpush1.msra.mxu0 0.0
      %1687 = vmatprep.subr.mxu0 0.0
      %1688 = vmatpush1.msra.mxu0 0.0
      %1689 = vmatprep.subr.mxu0 0.0
      %1690 = vmatpush1.msra.mxu0 0.0
      %1691 = vmatprep.subr.mxu0 0.0
      %1692 = vmatpush1.msra.mxu0 0.0
      %1693 = vmatprep.subr.mxu0 0.0
      %1694 = vmatpush1.msra.mxu0 0.0
      %1695 = vmatprep.subr.mxu0 0.0
      %1696 = vmatpush1.msra.mxu0 0.0
      %1697 = vmatprep.subr.mxu0 0.0
      %1698 = vmatpush1.msra.mxu0 0.0
      %1699 = vmatprep.subr.mxu0 0.0
      %1700 = vmatpush1.msra.mxu0 0.0
      %1701 = vmatprep.subr.mxu0 0.0
      %1702 = vmatpush1.msra.mxu0 0.0
      %1703 = vmatprep.subr.mxu0 0.0
      %1704 = vmatpush1.msra.mxu0 0.0
      %1705 = vmatprep.subr.mxu0 0.0
      %1706 = vmatpush1.msra.mxu0 0.0
      %1707 = vmatprep.mubr.f32.mxu0 0.0
      %1708 = vmatmul.mubr.f32.gmra.mrb[0].mxu0 %v1639
      %v1709 = vpop.f32.mrb[0].mxu0
      %v1710 = vadd.f32 0.0, %v1709
      %v1711 = vpop.f32.mrb[0].mxu0
      %1712 = vmatprep.mubr.f32.mxu0 0.0
      %1713 = vmatmul.mubr.f32.gmra.mrb[0].mxu0 %v1641
      %v1714 = vpop.f32.mrb[0].mxu0
      %v1715 = vadd.f32 0.0, %v1714
      %v1716 = vpop.f32.mrb[0].mxu0
      %1717 = vdwg.mxu0
      %v1718 = vadd.f32 %v1624, %v1710
      %v1719 = vadd.f32 %v1625, %v1715
      %v1720 = vld [vmem:[%s398 + $0x2] sm:$0xff]
      %v1721 = vld [vmem:[%s398 + $0xa] sm:$0xff]
      %s1722 = scalar_lea.vmem %s4, 384
      %v1723 = vld [vmem:[%s1722] sm:$0xff]
      %v1724 = vld [vmem:[%s1722 + $0x8] sm:$0xff]
      %v1725 = vld [vmem:[%s1722 + $0x10] sm:$0xff]
      %v1726 = vld [vmem:[%s1722 + $0x18] sm:$0xff]
      %v1727 = vld [vmem:[%s1722 + $0x20] sm:$0xff]
      %v1728 = vld [vmem:[%s1722 + $0x28] sm:$0xff]
      %v1729 = vld [vmem:[%s1722 + $0x30] sm:$0xff]
      %v1730 = vld [vmem:[%s1722 + $0x38] sm:$0xff]
      %v1732 = vsel %vm617, %v1720, 0
      %v1735 = vsel %vm617, %v1721, 0
      %1737 = vmatprep.subr.mxu0 0.0
      %1738 = vmatpush1.msra.mxu0 %v1723
      %1739 = vmatprep.subr.mxu0 0.0
      %1740 = vmatpush1.msra.mxu0 %v1724
      %1741 = vmatprep.subr.mxu0 0.0
      %1742 = vmatpush1.msra.mxu0 %v1725
      %1743 = vmatprep.subr.mxu0 0.0
      %1744 = vmatpush1.msra.mxu0 %v1726
      %1745 = vmatprep.subr.mxu0 0.0
      %1746 = vmatpush1.msra.mxu0 %v1727
      %1747 = vmatprep.subr.mxu0 0.0
      %1748 = vmatpush1.msra.mxu0 %v1728
      %1749 = vmatprep.subr.mxu0 0.0
      %1750 = vmatpush1.msra.mxu0 %v1729
      %1751 = vmatprep.subr.mxu0 0.0
      %1752 = vmatpush1.msra.mxu0 %v1730
      %1753 = vmatprep.subr.mxu0 0.0
      %1754 = vmatpush1.msra.mxu0 0.0
      %1755 = vmatprep.subr.mxu0 0.0
      %1756 = vmatpush1.msra.mxu0 0.0
      %1757 = vmatprep.subr.mxu0 0.0
      %1758 = vmatpush1.msra.mxu0 0.0
      %1759 = vmatprep.subr.mxu0 0.0
      %1760 = vmatpush1.msra.mxu0 0.0
      %1761 = vmatprep.subr.mxu0 0.0
      %1762 = vmatpush1.msra.mxu0 0.0
      %1763 = vmatprep.subr.mxu0 0.0
      %1764 = vmatpush1.msra.mxu0 0.0
      %1765 = vmatprep.subr.mxu0 0.0
      %1766 = vmatpush1.msra.mxu0 0.0
      %1767 = vmatprep.subr.mxu0 0.0
      %1768 = vmatpush1.msra.mxu0 0.0
      %1769 = vmatprep.subr.mxu0 0.0
      %1770 = vmatpush1.msra.mxu0 0.0
      %1771 = vmatprep.subr.mxu0 0.0
      %1772 = vmatpush1.msra.mxu0 0.0
      %1773 = vmatprep.subr.mxu0 0.0
      %1774 = vmatpush1.msra.mxu0 0.0
      %1775 = vmatprep.subr.mxu0 0.0
      %1776 = vmatpush1.msra.mxu0 0.0
      %1777 = vmatprep.subr.mxu0 0.0
      %1778 = vmatpush1.msra.mxu0 0.0
      %1779 = vmatprep.subr.mxu0 0.0
      %1780 = vmatpush1.msra.mxu0 0.0
      %1781 = vmatprep.subr.mxu0 0.0
      %1782 = vmatpush1.msra.mxu0 0.0
      %1783 = vmatprep.subr.mxu0 0.0
      %1784 = vmatpush1.msra.mxu0 0.0
      %1785 = vmatprep.subr.mxu0 0.0
      %1786 = vmatpush1.msra.mxu0 0.0
      %1787 = vmatprep.subr.mxu0 0.0
      %1788 = vmatpush1.msra.mxu0 0.0
      %1789 = vmatprep.subr.mxu0 0.0
      %1790 = vmatpush1.msra.mxu0 0.0
      %1791 = vmatprep.subr.mxu0 0.0
      %1792 = vmatpush1.msra.mxu0 0.0
      %1793 = vmatprep.subr.mxu0 0.0
      %1794 = vmatpush1.msra.mxu0 0.0
      %1795 = vmatprep.subr.mxu0 0.0
      %1796 = vmatpush1.msra.mxu0 0.0
      %1797 = vmatprep.subr.mxu0 0.0
      %1798 = vmatpush1.msra.mxu0 0.0
      %1799 = vmatprep.subr.mxu0 0.0
      %1800 = vmatpush1.msra.mxu0 0.0
      %1801 = vmatprep.mubr.f32.mxu0 0.0
      %1802 = vmatmul.mubr.f32.gmra.mrb[0].mxu0 %v1732
      %v1803 = vpop.f32.mrb[0].mxu0
      %v1804 = vadd.f32 0.0, %v1803
      %v1805 = vpop.f32.mrb[0].mxu0
      %1806 = vmatprep.mubr.f32.mxu0 0.0
      %1807 = vmatmul.mubr.f32.gmra.mrb[0].mxu0 %v1735
      %v1808 = vpop.f32.mrb[0].mxu0
      %v1809 = vadd.f32 0.0, %v1808
      %v1810 = vpop.f32.mrb[0].mxu0
      %1811 = vdwg.mxu0
      %v1812 = vadd.f32 %v1718, %v1804
      %v1813 = vadd.f32 %v1719, %v1809
      %v1814 = vld [vmem:[#allocation2 + $0x2] sm:$0xff]
      %v1815 = vld [vmem:[#allocation2 + $0xa] sm:$0xff]
      %s1816 = scalar_lea.vmem %s5, 384
      %v1817 = vld [vmem:[%s1816] sm:$0xff]
      %v1818 = vld [vmem:[%s1816 + $0x8] sm:$0xff]
      %v1819 = vld [vmem:[%s1816 + $0x10] sm:$0xff]
      %v1820 = vld [vmem:[%s1816 + $0x18] sm:$0xff]
      %v1821 = vld [vmem:[%s1816 + $0x20] sm:$0xff]
      %v1822 = vld [vmem:[%s1816 + $0x28] sm:$0xff]
      %v1823 = vld [vmem:[%s1816 + $0x30] sm:$0xff]
      %v1824 = vld [vmem:[%s1816 + $0x38] sm:$0xff]
      %v1826 = vsel %vm617, %v1814, 0
      %v1829 = vsel %vm617, %v1815, 0
      %1831 = vmatprep.subr.mxu0 0.0
      %1832 = vmatpush1.msra.mxu0 %v1817
      %1833 = vmatprep.subr.mxu0 0.0
      %1834 = vmatpush1.msra.mxu0 %v1818
      %1835 = vmatprep.subr.mxu0 0.0
      %1836 = vmatpush1.msra.mxu0 %v1819
      %1837 = vmatprep.subr.mxu0 0.0
      %1838 = vmatpush1.msra.mxu0 %v1820
      %1839 = vmatprep.subr.mxu0 0.0
      %1840 = vmatpush1.msra.mxu0 %v1821
      %1841 = vmatprep.subr.mxu0 0.0
      %1842 = vmatpush1.msra.mxu0 %v1822
      %1843 = vmatprep.subr.mxu0 0.0
      %1844 = vmatpush1.msra.mxu0 %v1823
      %1845 = vmatprep.subr.mxu0 0.0
      %1846 = vmatpush1.msra.mxu0 %v1824
      %1847 = vmatprep.subr.mxu0 0.0
      %1848 = vmatpush1.msra.mxu0 0.0
      %1849 = vmatprep.subr.mxu0 0.0
      %1850 = vmatpush1.msra.mxu0 0.0
      %1851 = vmatprep.subr.mxu0 0.0
      %1852 = vmatpush1.msra.mxu0 0.0
      %1853 = vmatprep.subr.mxu0 0.0
      %1854 = vmatpush1.msra.mxu0 0.0
      %1855 = vmatprep.subr.mxu0 0.0
      %1856 = vmatpush1.msra.mxu0 0.0
      %1857 = vmatprep.subr.mxu0 0.0
      %1858 = vmatpush1.msra.mxu0 0.0
      %1859 = vmatprep.subr.mxu0 0.0
      %1860 = vmatpush1.msra.mxu0 0.0
      %1861 = vmatprep.subr.mxu0 0.0
      %1862 = vmatpush1.msra.mxu0 0.0
      %1863 = vmatprep.subr.mxu0 0.0
      %1864 = vmatpush1.msra.mxu0 0.0
      %1865 = vmatprep.subr.mxu0 0.0
      %1866 = vmatpush1.msra.mxu0 0.0
      %1867 = vmatprep.subr.mxu0 0.0
      %1868 = vmatpush1.msra.mxu0 0.0
      %1869 = vmatprep.subr.mxu0 0.0
      %1870 = vmatpush1.msra.mxu0 0.0
      %1871 = vmatprep.subr.mxu0 0.0
      %1872 = vmatpush1.msra.mxu0 0.0
      %1873 = vmatprep.subr.mxu0 0.0
      %1874 = vmatpush1.msra.mxu0 0.0
      %1875 = vmatprep.subr.mxu0 0.0
      %1876 = vmatpush1.msra.mxu0 0.0
      %1877 = vmatprep.subr.mxu0 0.0
      %1878 = vmatpush1.msra.mxu0 0.0
      %1879 = vmatprep.subr.mxu0 0.0
      %1880 = vmatpush1.msra.mxu0 0.0
      %1881 = vmatprep.subr.mxu0 0.0
      %1882 = vmatpush1.msra.mxu0 0.0
      %1883 = vmatprep.subr.mxu0 0.0
      %1884 = vmatpush1.msra.mxu0 0.0
      %1885 = vmatprep.subr.mxu0 0.0
      %1886 = vmatpush1.msra.mxu0 0.0
      %1887 = vmatprep.subr.mxu0 0.0
      %1888 = vmatpush1.msra.mxu0 0.0
      %1889 = vmatprep.subr.mxu0 0.0
      %1890 = vmatpush1.msra.mxu0 0.0
      %1891 = vmatprep.subr.mxu0 0.0
      %1892 = vmatpush1.msra.mxu0 0.0
      %1893 = vmatprep.subr.mxu0 0.0
      %1894 = vmatpush1.msra.mxu0 0.0
      %1895 = vmatprep.mubr.f32.mxu0 0.0
      %1896 = vmatmul.mubr.f32.gmra.mrb[0].mxu0 %v1826
      %v1897 = vpop.f32.mrb[0].mxu0
      %v1898 = vadd.f32 0.0, %v1897
      %v1899 = vpop.f32.mrb[0].mxu0
      %1900 = vmatprep.mubr.f32.mxu0 0.0
      %1901 = vmatmul.mubr.f32.gmra.mrb[0].mxu0 %v1829
      %v1902 = vpop.f32.mrb[0].mxu0
      %v1903 = vadd.f32 0.0, %v1902
      %v1904 = vpop.f32.mrb[0].mxu0
      %1905 = vdwg.mxu0
      %v1906 = vadd.f32 %v1812, %v1898
      %v1907 = vadd.f32 %v1813, %v1903
      %s1908 = scalar_lea.vmem %s4, 448
      %v1909 = vld [vmem:[%s1908] sm:$0xff]
      %v1910 = vld [vmem:[%s1908 + $0x8] sm:$0xff]
      %v1911 = vld [vmem:[%s1908 + $0x10] sm:$0xff]
      %v1912 = vld [vmem:[%s1908 + $0x18] sm:$0xff]
      %v1913 = vld [vmem:[%s1908 + $0x20] sm:$0xff]
      %v1914 = vld [vmem:[%s1908 + $0x28] sm:$0xff]
      %v1915 = vld [vmem:[%s1908 + $0x30] sm:$0xff]
      %v1916 = vld [vmem:[%s1908 + $0x38] sm:$0xff]
      %1917 = vrot.lane.b32.xlu0 %v1720, 124
      %v1918 = vpop.permute.xlu0 %1917
      %1919 = vrot.lane.b32.xlu0 %v1721, 124
      %v1920 = vpop.permute.xlu0 %1919
      %v1921 = vsel %vm617, %v1918, 0
      %v1923 = vsel %vm617, %v1920, 0
      %1925 = vmatprep.subr.mxu0 0.0
      %1926 = vmatpush1.msra.mxu0 %v1909
      %1927 = vmatprep.subr.mxu0 0.0
      %1928 = vmatpush1.msra.mxu0 %v1910
      %1929 = vmatprep.subr.mxu0 0.0
      %1930 = vmatpush1.msra.mxu0 %v1911
      %1931 = vmatprep.subr.mxu0 0.0
      %1932 = vmatpush1.msra.mxu0 %v1912
      %1933 = vmatprep.subr.mxu0 0.0
      %1934 = vmatpush1.msra.mxu0 %v1913
      %1935 = vmatprep.subr.mxu0 0.0
      %1936 = vmatpush1.msra.mxu0 %v1914
      %1937 = vmatprep.subr.mxu0 0.0
      %1938 = vmatpush1.msra.mxu0 %v1915
      %1939 = vmatprep.subr.mxu0 0.0
      %1940 = vmatpush1.msra.mxu0 %v1916
      %1941 = vmatprep.subr.mxu0 0.0
      %1942 = vmatpush1.msra.mxu0 0.0
      %1943 = vmatprep.subr.mxu0 0.0
      %1944 = vmatpush1.msra.mxu0 0.0
      %1945 = vmatprep.subr.mxu0 0.0
      %1946 = vmatpush1.msra.mxu0 0.0
      %1947 = vmatprep.subr.mxu0 0.0
      %1948 = vmatpush1.msra.mxu0 0.0
      %1949 = vmatprep.subr.mxu0 0.0
      %1950 = vmatpush1.msra.mxu0 0.0
      %1951 = vmatprep.subr.mxu0 0.0
      %1952 = vmatpush1.msra.mxu0 0.0
      %1953 = vmatprep.subr.mxu0 0.0
      %1954 = vmatpush1.msra.mxu0 0.0
      %1955 = vmatprep.subr.mxu0 0.0
      %1956 = vmatpush1.msra.mxu0 0.0
      %1957 = vmatprep.subr.mxu0 0.0
      %1958 = vmatpush1.msra.mxu0 0.0
      %1959 = vmatprep.subr.mxu0 0.0
      %1960 = vmatpush1.msra.mxu0 0.0
      %1961 = vmatprep.subr.mxu0 0.0
      %1962 = vmatpush1.msra.mxu0 0.0
      %1963 = vmatprep.subr.mxu0 0.0
      %1964 = vmatpush1.msra.mxu0 0.0
      %1965 = vmatprep.subr.mxu0 0.0
      %1966 = vmatpush1.msra.mxu0 0.0
      %1967 = vmatprep.subr.mxu0 0.0
      %1968 = vmatpush1.msra.mxu0 0.0
      %1969 = vmatprep.subr.mxu0 0.0
      %1970 = vmatpush1.msra.mxu0 0.0
      %1971 = vmatprep.subr.mxu0 0.0
      %1972 = vmatpush1.msra.mxu0 0.0
      %1973 = vmatprep.subr.mxu0 0.0
      %1974 = vmatpush1.msra.mxu0 0.0
      %1975 = vmatprep.subr.mxu0 0.0
      %1976 = vmatpush1.msra.mxu0 0.0
      %1977 = vmatprep.subr.mxu0 0.0
      %1978 = vmatpush1.msra.mxu0 0.0
      %1979 = vmatprep.subr.mxu0 0.0
      %1980 = vmatpush1.msra.mxu0 0.0
      %1981 = vmatprep.subr.mxu0 0.0
      %1982 = vmatpush1.msra.mxu0 0.0
      %1983 = vmatprep.subr.mxu0 0.0
      %1984 = vmatpush1.msra.mxu0 0.0
      %1985 = vmatprep.subr.mxu0 0.0
      %1986 = vmatpush1.msra.mxu0 0.0
      %1987 = vmatprep.subr.mxu0 0.0
      %1988 = vmatpush1.msra.mxu0 0.0
      %1989 = vmatprep.mubr.f32.mxu0 0.0
      %1990 = vmatmul.mubr.f32.gmra.mrb[0].mxu0 %v1921
      %v1991 = vpop.f32.mrb[0].mxu0
      %v1992 = vadd.f32 0.0, %v1991
      %v1993 = vpop.f32.mrb[0].mxu0
      %1994 = vmatprep.mubr.f32.mxu0 0.0
      %1995 = vmatmul.mubr.f32.gmra.mrb[0].mxu0 %v1923
      %v1996 = vpop.f32.mrb[0].mxu0
      %v1997 = vadd.f32 0.0, %v1996
      %v1998 = vpop.f32.mrb[0].mxu0
      %1999 = vdwg.mxu0
      %v2000 = vadd.f32 %v1906, %v1992
      %v2001 = vadd.f32 %v1907, %v1997
      %s2002 = scalar_lea.vmem %s5, 448
      %v2003 = vld [vmem:[%s2002] sm:$0xff]
      %v2004 = vld [vmem:[%s2002 + $0x8] sm:$0xff]
      %v2005 = vld [vmem:[%s2002 + $0x10] sm:$0xff]
      %v2006 = vld [vmem:[%s2002 + $0x18] sm:$0xff]
      %v2007 = vld [vmem:[%s2002 + $0x20] sm:$0xff]
      %v2008 = vld [vmem:[%s2002 + $0x28] sm:$0xff]
      %v2009 = vld [vmem:[%s2002 + $0x30] sm:$0xff]
      %v2010 = vld [vmem:[%s2002 + $0x38] sm:$0xff]
      %2011 = vrot.lane.b32.xlu0 %v1814, 124
      %v2012 = vpop.permute.xlu0 %2011
      %2013 = vrot.lane.b32.xlu0 %v1815, 124
      %v2014 = vpop.permute.xlu0 %2013
      %v2015 = vsel %vm617, %v2012, 0
      %v2017 = vsel %vm617, %v2014, 0
      %2019 = vmatprep.subr.mxu0 0.0
      %2020 = vmatpush1.msra.mxu0 %v2003
      %2021 = vmatprep.subr.mxu0 0.0
      %2022 = vmatpush1.msra.mxu0 %v2004
      %2023 = vmatprep.subr.mxu0 0.0
      %2024 = vmatpush1.msra.mxu0 %v2005
      %2025 = vmatprep.subr.mxu0 0.0
      %2026 = vmatpush1.msra.mxu0 %v2006
      %2027 = vmatprep.subr.mxu0 0.0
      %2028 = vmatpush1.msra.mxu0 %v2007
      %2029 = vmatprep.subr.mxu0 0.0
      %2030 = vmatpush1.msra.mxu0 %v2008
      %2031 = vmatprep.subr.mxu0 0.0
      %2032 = vmatpush1.msra.mxu0 %v2009
      %2033 = vmatprep.subr.mxu0 0.0
      %2034 = vmatpush1.msra.mxu0 %v2010
      %2035 = vmatprep.subr.mxu0 0.0
      %2036 = vmatpush1.msra.mxu0 0.0
      %2037 = vmatprep.subr.mxu0 0.0
      %2038 = vmatpush1.msra.mxu0 0.0
      %2039 = vmatprep.subr.mxu0 0.0
      %2040 = vmatpush1.msra.mxu0 0.0
      %2041 = vmatprep.subr.mxu0 0.0
      %2042 = vmatpush1.msra.mxu0 0.0
      %2043 = vmatprep.subr.mxu0 0.0
      %2044 = vmatpush1.msra.mxu0 0.0
      %2045 = vmatprep.subr.mxu0 0.0
      %2046 = vmatpush1.msra.mxu0 0.0
      %2047 = vmatprep.subr.mxu0 0.0
      %2048 = vmatpush1.msra.mxu0 0.0
      %2049 = vmatprep.subr.mxu0 0.0
      %2050 = vmatpush1.msra.mxu0 0.0
      %2051 = vmatprep.subr.mxu0 0.0
      %2052 = vmatpush1.msra.mxu0 0.0
      %2053 = vmatprep.subr.mxu0 0.0
      %2054 = vmatpush1.msra.mxu0 0.0
      %2055 = vmatprep.subr.mxu0 0.0
      %2056 = vmatpush1.msra.mxu0 0.0
      %2057 = vmatprep.subr.mxu0 0.0
      %2058 = vmatpush1.msra.mxu0 0.0
      %2059 = vmatprep.subr.mxu0 0.0
      %2060 = vmatpush1.msra.mxu0 0.0
      %2061 = vmatprep.subr.mxu0 0.0
      %2062 = vmatpush1.msra.mxu0 0.0
      %2063 = vmatprep.subr.mxu0 0.0
      %2064 = vmatpush1.msra.mxu0 0.0
      %2065 = vmatprep.subr.mxu0 0.0
      %2066 = vmatpush1.msra.mxu0 0.0
      %2067 = vmatprep.subr.mxu0 0.0
      %2068 = vmatpush1.msra.mxu0 0.0
      %2069 = vmatprep.subr.mxu0 0.0
      %2070 = vmatpush1.msra.mxu0 0.0
      %2071 = vmatprep.subr.mxu0 0.0
      %2072 = vmatpush1.msra.mxu0 0.0
      %2073 = vmatprep.subr.mxu0 0.0
      %2074 = vmatpush1.msra.mxu0 0.0
      %2075 = vmatprep.subr.mxu0 0.0
      %2076 = vmatpush1.msra.mxu0 0.0
      %2077 = vmatprep.subr.mxu0 0.0
      %2078 = vmatpush1.msra.mxu0 0.0
      %2079 = vmatprep.subr.mxu0 0.0
      %2080 = vmatpush1.msra.mxu0 0.0
      %2081 = vmatprep.subr.mxu0 0.0
      %2082 = vmatpush1.msra.mxu0 0.0
      %2083 = vmatprep.mubr.f32.mxu0 0.0
      %2084 = vmatmul.mubr.f32.gmra.mrb[0].mxu0 %v2015
      %v2085 = vpop.f32.mrb[0].mxu0
      %v2086 = vadd.f32 0.0, %v2085
      %v2087 = vpop.f32.mrb[0].mxu0
      %2088 = vmatprep.mubr.f32.mxu0 0.0
      %2089 = vmatmul.mubr.f32.gmra.mrb[0].mxu0 %v2017
      %v2090 = vpop.f32.mrb[0].mxu0
      %v2091 = vadd.f32 0.0, %v2090
      %v2092 = vpop.f32.mrb[0].mxu0
      %2093 = vdwg.mxu0
      %v2094 = vadd.f32 %v2000, %v2086
      %v2095 = vadd.f32 %v2001, %v2091
      %s2096 = scalar_lea.vmem %s4, 512
      %v2097 = vld [vmem:[%s2096] sm:$0xff]
      %v2098 = vld [vmem:[%s2096 + $0x8] sm:$0xff]
      %v2099 = vld [vmem:[%s2096 + $0x10] sm:$0xff]
      %v2100 = vld [vmem:[%s2096 + $0x18] sm:$0xff]
      %v2101 = vld [vmem:[%s2096 + $0x20] sm:$0xff]
      %v2102 = vld [vmem:[%s2096 + $0x28] sm:$0xff]
      %v2103 = vld [vmem:[%s2096 + $0x30] sm:$0xff]
      %v2104 = vld [vmem:[%s2096 + $0x38] sm:$0xff]
      %2105 = vrot.lane.b32.xlu0 %v1720, 120
      %v2106 = vpop.permute.xlu0 %2105
      %2107 = vrot.lane.b32.xlu0 %v1721, 120
      %v2108 = vpop.permute.xlu0 %2107
      %v2109 = vsel %vm617, %v2106, 0
      %v2111 = vsel %vm617, %v2108, 0
      %2113 = vmatprep.subr.mxu0 0.0
      %2114 = vmatpush1.msra.mxu0 %v2097
      %2115 = vmatprep.subr.mxu0 0.0
      %2116 = vmatpush1.msra.mxu0 %v2098
      %2117 = vmatprep.subr.mxu0 0.0
      %2118 = vmatpush1.msra.mxu0 %v2099
      %2119 = vmatprep.subr.mxu0 0.0
      %2120 = vmatpush1.msra.mxu0 %v2100
      %2121 = vmatprep.subr.mxu0 0.0
      %2122 = vmatpush1.msra.mxu0 %v2101
      %2123 = vmatprep.subr.mxu0 0.0
      %2124 = vmatpush1.msra.mxu0 %v2102
      %2125 = vmatprep.subr.mxu0 0.0
      %2126 = vmatpush1.msra.mxu0 %v2103
      %2127 = vmatprep.subr.mxu0 0.0
      %2128 = vmatpush1.msra.mxu0 %v2104
      %2129 = vmatprep.subr.mxu0 0.0
      %2130 = vmatpush1.msra.mxu0 0.0
      %2131 = vmatprep.subr.mxu0 0.0
      %2132 = vmatpush1.msra.mxu0 0.0
      %2133 = vmatprep.subr.mxu0 0.0
      %2134 = vmatpush1.msra.mxu0 0.0
      %2135 = vmatprep.subr.mxu0 0.0
      %2136 = vmatpush1.msra.mxu0 0.0
      %2137 = vmatprep.subr.mxu0 0.0
      %2138 = vmatpush1.msra.mxu0 0.0
      %2139 = vmatprep.subr.mxu0 0.0
      %2140 = vmatpush1.msra.mxu0 0.0
      %2141 = vmatprep.subr.mxu0 0.0
      %2142 = vmatpush1.msra.mxu0 0.0
      %2143 = vmatprep.subr.mxu0 0.0
      %2144 = vmatpush1.msra.mxu0 0.0
      %2145 = vmatprep.subr.mxu0 0.0
      %2146 = vmatpush1.msra.mxu0 0.0
      %2147 = vmatprep.subr.mxu0 0.0
      %2148 = vmatpush1.msra.mxu0 0.0
      %2149 = vmatprep.subr.mxu0 0.0
      %2150 = vmatpush1.msra.mxu0 0.0
      %2151 = vmatprep.subr.mxu0 0.0
      %2152 = vmatpush1.msra.mxu0 0.0
      %2153 = vmatprep.subr.mxu0 0.0
      %2154 = vmatpush1.msra.mxu0 0.0
      %2155 = vmatprep.subr.mxu0 0.0
      %2156 = vmatpush1.msra.mxu0 0.0
      %2157 = vmatprep.subr.mxu0 0.0
      %2158 = vmatpush1.msra.mxu0 0.0
      %2159 = vmatprep.subr.mxu0 0.0
      %2160 = vmatpush1.msra.mxu0 0.0
      %2161 = vmatprep.subr.mxu0 0.0
      %2162 = vmatpush1.msra.mxu0 0.0
      %2163 = vmatprep.subr.mxu0 0.0
      %2164 = vmatpush1.msra.mxu0 0.0
      %2165 = vmatprep.subr.mxu0 0.0
      %2166 = vmatpush1.msra.mxu0 0.0
      %2167 = vmatprep.subr.mxu0 0.0
      %2168 = vmatpush1.msra.mxu0 0.0
      %2169 = vmatprep.subr.mxu0 0.0
      %2170 = vmatpush1.msra.mxu0 0.0
      %2171 = vmatprep.subr.mxu0 0.0
      %2172 = vmatpush1.msra.mxu0 0.0
      %2173 = vmatprep.subr.mxu0 0.0
      %2174 = vmatpush1.msra.mxu0 0.0
      %2175 = vmatprep.subr.mxu0 0.0
      %2176 = vmatpush1.msra.mxu0 0.0
      %2177 = vmatprep.mubr.f32.mxu0 0.0
      %2178 = vmatmul.mubr.f32.gmra.mrb[0].mxu0 %v2109
      %v2179 = vpop.f32.mrb[0].mxu0
      %v2180 = vadd.f32 0.0, %v2179
      %v2181 = vpop.f32.mrb[0].mxu0
      %2182 = vmatprep.mubr.f32.mxu0 0.0
      %2183 = vmatmul.mubr.f32.gmra.mrb[0].mxu0 %v2111
      %v2184 = vpop.f32.mrb[0].mxu0
      %v2185 = vadd.f32 0.0, %v2184
      %v2186 = vpop.f32.mrb[0].mxu0
      %2187 = vdwg.mxu0
      %v2188 = vadd.f32 %v2094, %v2180
      %v2189 = vadd.f32 %v2095, %v2185
      %s2190 = scalar_lea.vmem %s5, 512
      %v2191 = vld [vmem:[%s2190] sm:$0xff]
      %v2192 = vld [vmem:[%s2190 + $0x8] sm:$0xff]
      %v2193 = vld [vmem:[%s2190 + $0x10] sm:$0xff]
      %v2194 = vld [vmem:[%s2190 + $0x18] sm:$0xff]
      %v2195 = vld [vmem:[%s2190 + $0x20] sm:$0xff]
      %v2196 = vld [vmem:[%s2190 + $0x28] sm:$0xff]
      %v2197 = vld [vmem:[%s2190 + $0x30] sm:$0xff]
      %v2198 = vld [vmem:[%s2190 + $0x38] sm:$0xff]
      %2199 = vrot.lane.b32.xlu0 %v1814, 120
      %v2200 = vpop.permute.xlu0 %2199
      %2201 = vrot.lane.b32.xlu0 %v1815, 120
      %v2202 = vpop.permute.xlu0 %2201
      %v2203 = vsel %vm617, %v2200, 0
      %v2205 = vsel %vm617, %v2202, 0
      %2207 = vmatprep.subr.mxu0 0.0
      %2208 = vmatpush1.msra.mxu0 %v2191
      %2209 = vmatprep.subr.mxu0 0.0
      %2210 = vmatpush1.msra.mxu0 %v2192
      %2211 = vmatprep.subr.mxu0 0.0
      %2212 = vmatpush1.msra.mxu0 %v2193
      %2213 = vmatprep.subr.mxu0 0.0
      %2214 = vmatpush1.msra.mxu0 %v2194
      %2215 = vmatprep.subr.mxu0 0.0
      %2216 = vmatpush1.msra.mxu0 %v2195
      %2217 = vmatprep.subr.mxu0 0.0
      %2218 = vmatpush1.msra.mxu0 %v2196
      %2219 = vmatprep.subr.mxu0 0.0
      %2220 = vmatpush1.msra.mxu0 %v2197
      %2221 = vmatprep.subr.mxu0 0.0
      %2222 = vmatpush1.msra.mxu0 %v2198
      %2223 = vmatprep.subr.mxu0 0.0
      %2224 = vmatpush1.msra.mxu0 0.0
      %2225 = vmatprep.subr.mxu0 0.0
      %2226 = vmatpush1.msra.mxu0 0.0
      %2227 = vmatprep.subr.mxu0 0.0
      %2228 = vmatpush1.msra.mxu0 0.0
      %2229 = vmatprep.subr.mxu0 0.0
      %2230 = vmatpush1.msra.mxu0 0.0
      %2231 = vmatprep.subr.mxu0 0.0
      %2232 = vmatpush1.msra.mxu0 0.0
      %2233 = vmatprep.subr.mxu0 0.0
      %2234 = vmatpush1.msra.mxu0 0.0
      %2235 = vmatprep.subr.mxu0 0.0
      %2236 = vmatpush1.msra.mxu0 0.0
      %2237 = vmatprep.subr.mxu0 0.0
      %2238 = vmatpush1.msra.mxu0 0.0
      %2239 = vmatprep.subr.mxu0 0.0
      %2240 = vmatpush1.msra.mxu0 0.0
      %2241 = vmatprep.subr.mxu0 0.0
      %2242 = vmatpush1.msra.mxu0 0.0
      %2243 = vmatprep.subr.mxu0 0.0
      %2244 = vmatpush1.msra.mxu0 0.0
      %2245 = vmatprep.subr.mxu0 0.0
      %2246 = vmatpush1.msra.mxu0 0.0
      %2247 = vmatprep.subr.mxu0 0.0
      %2248 = vmatpush1.msra.mxu0 0.0
      %2249 = vmatprep.subr.mxu0 0.0
      %2250 = vmatpush1.msra.mxu0 0.0
      %2251 = vmatprep.subr.mxu0 0.0
      %2252 = vmatpush1.msra.mxu0 0.0
      %2253 = vmatprep.subr.mxu0 0.0
      %2254 = vmatpush1.msra.mxu0 0.0
      %2255 = vmatprep.subr.mxu0 0.0
      %2256 = vmatpush1.msra.mxu0 0.0
      %2257 = vmatprep.subr.mxu0 0.0
      %2258 = vmatpush1.msra.mxu0 0.0
      %2259 = vmatprep.subr.mxu0 0.0
      %2260 = vmatpush1.msra.mxu0 0.0
      %2261 = vmatprep.subr.mxu0 0.0
      %2262 = vmatpush1.msra.mxu0 0.0
      %2263 = vmatprep.subr.mxu0 0.0
      %2264 = vmatpush1.msra.mxu0 0.0
      %2265 = vmatprep.subr.mxu0 0.0
      %2266 = vmatpush1.msra.mxu0 0.0
      %2267 = vmatprep.subr.mxu0 0.0
      %2268 = vmatpush1.msra.mxu0 0.0
      %2269 = vmatprep.subr.mxu0 0.0
      %2270 = vmatpush1.msra.mxu0 0.0
      %2271 = vmatprep.mubr.f32.mxu0 0.0
      %2272 = vmatmul.mubr.f32.gmra.mrb[0].mxu0 %v2203
      %v2273 = vpop.f32.mrb[0].mxu0
      %v2274 = vadd.f32 0.0, %v2273
      %v2275 = vpop.f32.mrb[0].mxu0
      %2276 = vmatprep.mubr.f32.mxu0 0.0
      %2277 = vmatmul.mubr.f32.gmra.mrb[0].mxu0 %v2205
      %v2278 = vpop.f32.mrb[0].mxu0
      %v2279 = vadd.f32 0.0, %v2278
      %v2280 = vpop.f32.mrb[0].mxu0
      %2281 = vdwg.mxu0
      %v2282 = vadd.f32 %v2188, %v2274
      %v2283 = vadd.f32 %v2189, %v2279
      %v2284 = vld [vmem:[%s7] sm:$0x1]
      %v2286 = vlaneseq
      %v2287 = vshrl.u32 %v2286, 7
      %v2288 = vsub.s32 0, %v2287
      %v2289 = vrot.slane %v2284, %v2288
      %v2291 = vmul.f32 %v2282, %v2289
      %v2292 = vmul.f32 %v2283, %v2289
      %v2293 = vld [vmem:[%s8] sm:$0x1]
      %v2295 = vlaneseq
      %v2296 = vshrl.u32 %v2295, 7
      %v2297 = vsub.s32 0, %v2296
      %v2298 = vrot.slane %v2293, %v2297
      %v2300 = vadd.f32 %v2291, %v2298
      %v2301 = vadd.f32 %v2292, %v2298
      %v2302 = vmax.f32 %v2300, 0.0
      %v2303 = vmax.f32 %v2301, 0.0
      %2304 = vst.msk [vmem:[#allocation3] sm:$0xff] %vm592, 0.0
      %2305 = vst.msk [vmem:[#allocation3 + $0x8] sm:$0xff] %vm592, 0.0
      %2306 = vst.msk [vmem:[#allocation3 + $0x10] sm:$0x3] %vm595, 0.0
      %2307 = vst.msk [vmem:[#allocation3 + $0x1] sm:$0xff] %vm592, %v2302
      %2308 = vst.msk [vmem:[#allocation3 + $0x9] sm:$0xff] %vm592, %v2303
      %v2309 = vld [vmem:[#allocation3] sm:$0xff]
      %v2310 = vld [vmem:[#allocation3 + $0x8] sm:$0xff]
      %v2311 = vld [vmem:[%s6] sm:$0xff]
      %v2312 = vld [vmem:[%s6 + $0x8] sm:$0xff]
      %v2313 = vld [vmem:[%s6 + $0x10] sm:$0xff]
      %v2314 = vld [vmem:[%s6 + $0x18] sm:$0xff]
      %v2315 = vld [vmem:[%s6 + $0x20] sm:$0xff]
      %v2316 = vld [vmem:[%s6 + $0x28] sm:$0xff]
      %v2317 = vld [vmem:[%s6 + $0x30] sm:$0xff]
      %v2318 = vld [vmem:[%s6 + $0x38] sm:$0xff]
      %s2319 = scalar_lea.vmem %s6, 64
      %v2320 = vld [vmem:[%s2319] sm:$0xff]
      %v2321 = vld [vmem:[%s2319 + $0x8] sm:$0xff]
      %v2322 = vld [vmem:[%s2319 + $0x10] sm:$0xff]
      %v2323 = vld [vmem:[%s2319 + $0x18] sm:$0xff]
      %v2324 = vld [vmem:[%s2319 + $0x20] sm:$0xff]
      %v2325 = vld [vmem:[%s2319 + $0x28] sm:$0xff]
      %v2326 = vld [vmem:[%s2319 + $0x30] sm:$0xff]
      %v2327 = vld [vmem:[%s2319 + $0x38] sm:$0xff]
      %2330 = vrot.lane.b32.xlu0 %v2309, 124
      %v2331 = vpop.permute.xlu0 %2330
      %2332 = vrot.lane.b32.xlu0 %v2310, 124
      %v2333 = vpop.permute.xlu0 %2332
      %v2334 = vsel %vm617, %v2331, 0
      %v2336 = vsel %vm617, %v2333, 0
      %2338 = vmatprep.subr.mxu0 0.0
      %2339 = vmatpush1.msra.mxu0 %v2320
      %2340 = vmatprep.subr.mxu0 0.0
      %2341 = vmatpush1.msra.mxu0 %v2321
      %2342 = vmatprep.subr.mxu0 0.0
      %2343 = vmatpush1.msra.mxu0 %v2322
      %2344 = vmatprep.subr.mxu0 0.0
      %2345 = vmatpush1.msra.mxu0 %v2323
      %2346 = vmatprep.subr.mxu0 0.0
      %2347 = vmatpush1.msra.mxu0 %v2324
      %2348 = vmatprep.subr.mxu0 0.0
      %2349 = vmatpush1.msra.mxu0 %v2325
      %2350 = vmatprep.subr.mxu0 0.0
      %2351 = vmatpush1.msra.mxu0 %v2326
      %2352 = vmatprep.subr.mxu0 0.0
      %2353 = vmatpush1.msra.mxu0 %v2327
      %2354 = vmatprep.subr.mxu0 0.0
      %2355 = vmatpush1.msra.mxu0 0.0
      %2356 = vmatprep.subr.mxu0 0.0
      %2357 = vmatpush1.msra.mxu0 0.0
      %2358 = vmatprep.subr.mxu0 0.0
      %2359 = vmatpush1.msra.mxu0 0.0
      %2360 = vmatprep.subr.mxu0 0.0
      %2361 = vmatpush1.msra.mxu0 0.0
      %2362 = vmatprep.subr.mxu0 0.0
      %2363 = vmatpush1.msra.mxu0 0.0
      %2364 = vmatprep.subr.mxu0 0.0
      %2365 = vmatpush1.msra.mxu0 0.0
      %2366 = vmatprep.subr.mxu0 0.0
      %2367 = vmatpush1.msra.mxu0 0.0
      %2368 = vmatprep.subr.mxu0 0.0
      %2369 = vmatpush1.msra.mxu0 0.0
      %2370 = vmatprep.subr.mxu0 0.0
      %2371 = vmatpush1.msra.mxu0 0.0
      %2372 = vmatprep.subr.mxu0 0.0
      %2373 = vmatpush1.msra.mxu0 0.0
      %2374 = vmatprep.subr.mxu0 0.0
      %2375 = vmatpush1.msra.mxu0 0.0
      %2376 = vmatprep.subr.mxu0 0.0
      %2377 = vmatpush1.msra.mxu0 0.0
      %2378 = vmatprep.subr.mxu0 0.0
      %2379 = vmatpush1.msra.mxu0 0.0
      %2380 = vmatprep.subr.mxu0 0.0
      %2381 = vmatpush1.msra.mxu0 0.0
      %2382 = vmatprep.subr.mxu0 0.0
      %2383 = vmatpush1.msra.mxu0 0.0
      %2384 = vmatprep.subr.mxu0 0.0
      %2385 = vmatpush1.msra.mxu0 0.0
      %2386 = vmatprep.subr.mxu0 0.0
      %2387 = vmatpush1.msra.mxu0 0.0
      %2388 = vmatprep.subr.mxu0 0.0
      %2389 = vmatpush1.msra.mxu0 0.0
      %2390 = vmatprep.subr.mxu0 0.0
      %2391 = vmatpush1.msra.mxu0 0.0
      %2392 = vmatprep.subr.mxu0 0.0
      %2393 = vmatpush1.msra.mxu0 0.0
      %2394 = vmatprep.subr.mxu0 0.0
      %2395 = vmatpush1.msra.mxu0 0.0
      %2396 = vmatprep.subr.mxu0 0.0
      %2397 = vmatpush1.msra.mxu0 0.0
      %2398 = vmatprep.subr.mxu0 0.0
      %2399 = vmatpush1.msra.mxu0 0.0
      %2400 = vmatprep.subr.mxu0 0.0
      %2401 = vmatpush1.msra.mxu0 0.0
      %2402 = vmatprep.mubr.f32.mxu0 0.0
      %2403 = vmatmul.mubr.f32.gmra.mrb[0].mxu0 %v2334
      %v2404 = vpop.f32.mrb[0].mxu0
      %v2405 = vadd.f32 0.0, %v2404
      %v2406 = vpop.f32.mrb[0].mxu0
      %2407 = vmatprep.mubr.f32.mxu0 0.0
      %2408 = vmatmul.mubr.f32.gmra.mrb[0].mxu0 %v2336
      %v2409 = vpop.f32.mrb[0].mxu0
      %v2410 = vadd.f32 0.0, %v2409
      %v2411 = vpop.f32.mrb[0].mxu0
      %2412 = vdwg.mxu0
      %v2413 = vsel %vm617, %v2309, 0
      %v2415 = vsel %vm617, %v2310, 0
      %2417 = vmatprep.subr.mxu0 0.0
      %2418 = vmatpush1.msra.mxu0 %v2311
      %2419 = vmatprep.subr.mxu0 0.0
      %2420 = vmatpush1.msra.mxu0 %v2312
      %2421 = vmatprep.subr.mxu0 0.0
      %2422 = vmatpush1.msra.mxu0 %v2313
      %2423 = vmatprep.subr.mxu0 0.0
      %2424 = vmatpush1.msra.mxu0 %v2314
      %2425 = vmatprep.subr.mxu0 0.0
      %2426 = vmatpush1.msra.mxu0 %v2315
      %2427 = vmatprep.subr.mxu0 0.0
      %2428 = vmatpush1.msra.mxu0 %v2316
      %2429 = vmatprep.subr.mxu0 0.0
      %2430 = vmatpush1.msra.mxu0 %v2317
      %2431 = vmatprep.subr.mxu0 0.0
      %2432 = vmatpush1.msra.mxu0 %v2318
      %2433 = vmatprep.subr.mxu0 0.0
      %2434 = vmatpush1.msra.mxu0 0.0
      %2435 = vmatprep.subr.mxu0 0.0
      %2436 = vmatpush1.msra.mxu0 0.0
      %2437 = vmatprep.subr.mxu0 0.0
      %2438 = vmatpush1.msra.mxu0 0.0
      %2439 = vmatprep.subr.mxu0 0.0
      %2440 = vmatpush1.msra.mxu0 0.0
      %2441 = vmatprep.subr.mxu0 0.0
      %2442 = vmatpush1.msra.mxu0 0.0
      %2443 = vmatprep.subr.mxu0 0.0
      %2444 = vmatpush1.msra.mxu0 0.0
      %2445 = vmatprep.subr.mxu0 0.0
      %2446 = vmatpush1.msra.mxu0 0.0
      %2447 = vmatprep.subr.mxu0 0.0
      %2448 = vmatpush1.msra.mxu0 0.0
      %2449 = vmatprep.subr.mxu0 0.0
      %2450 = vmatpush1.msra.mxu0 0.0
      %2451 = vmatprep.subr.mxu0 0.0
      %2452 = vmatpush1.msra.mxu0 0.0
      %2453 = vmatprep.subr.mxu0 0.0
      %2454 = vmatpush1.msra.mxu0 0.0
      %2455 = vmatprep.subr.mxu0 0.0
      %2456 = vmatpush1.msra.mxu0 0.0
      %2457 = vmatprep.subr.mxu0 0.0
      %2458 = vmatpush1.msra.mxu0 0.0
      %2459 = vmatprep.subr.mxu0 0.0
      %2460 = vmatpush1.msra.mxu0 0.0
      %2461 = vmatprep.subr.mxu0 0.0
      %2462 = vmatpush1.msra.mxu0 0.0
      %2463 = vmatprep.subr.mxu0 0.0
      %2464 = vmatpush1.msra.mxu0 0.0
      %2465 = vmatprep.subr.mxu0 0.0
      %2466 = vmatpush1.msra.mxu0 0.0
      %2467 = vmatprep.subr.mxu0 0.0
      %2468 = vmatpush1.msra.mxu0 0.0
      %2469 = vmatprep.subr.mxu0 0.0
      %2470 = vmatpush1.msra.mxu0 0.0
      %2471 = vmatprep.subr.mxu0 0.0
      %2472 = vmatpush1.msra.mxu0 0.0
      %2473 = vmatprep.subr.mxu0 0.0
      %2474 = vmatpush1.msra.mxu0 0.0
      %2475 = vmatprep.subr.mxu0 0.0
      %2476 = vmatpush1.msra.mxu0 0.0
      %2477 = vmatprep.subr.mxu0 0.0
      %2478 = vmatpush1.msra.mxu0 0.0
      %2479 = vmatprep.subr.mxu0 0.0
      %2480 = vmatpush1.msra.mxu0 0.0
      %2481 = vmatprep.mubr.f32.mxu0 0.0
      %2482 = vmatmul.mubr.f32.gmra.mrb[0].mxu0 %v2413
      %v2483 = vpop.f32.mrb[0].mxu0
      %v2484 = vadd.f32 %v2405, %v2483
      %v2485 = vpop.f32.mrb[0].mxu0
      %2486 = vmatprep.mubr.f32.mxu0 0.0
      %2487 = vmatmul.mubr.f32.gmra.mrb[0].mxu0 %v2415
      %v2488 = vpop.f32.mrb[0].mxu0
      %v2489 = vadd.f32 %v2410, %v2488
      %v2490 = vpop.f32.mrb[0].mxu0
      %2491 = vdwg.mxu0
      %s2492 = scalar_lea.vmem %s6, 128
      %v2493 = vld [vmem:[%s2492] sm:$0xff]
      %v2494 = vld [vmem:[%s2492 + $0x8] sm:$0xff]
      %v2495 = vld [vmem:[%s2492 + $0x10] sm:$0xff]
      %v2496 = vld [vmem:[%s2492 + $0x18] sm:$0xff]
      %v2497 = vld [vmem:[%s2492 + $0x20] sm:$0xff]
      %v2498 = vld [vmem:[%s2492 + $0x28] sm:$0xff]
      %v2499 = vld [vmem:[%s2492 + $0x30] sm:$0xff]
      %v2500 = vld [vmem:[%s2492 + $0x38] sm:$0xff]
      %2501 = vrot.lane.b32.xlu0 %v2309, 120
      %v2502 = vpop.permute.xlu0 %2501
      %2503 = vrot.lane.b32.xlu0 %v2310, 120
      %v2504 = vpop.permute.xlu0 %2503
      %v2505 = vsel %vm617, %v2502, 0
      %v2507 = vsel %vm617, %v2504, 0
      %2509 = vmatprep.subr.mxu0 0.0
      %2510 = vmatpush1.msra.mxu0 %v2493
      %2511 = vmatprep.subr.mxu0 0.0
      %2512 = vmatpush1.msra.mxu0 %v2494
      %2513 = vmatprep.subr.mxu0 0.0
      %2514 = vmatpush1.msra.mxu0 %v2495
      %2515 = vmatprep.subr.mxu0 0.0
      %2516 = vmatpush1.msra.mxu0 %v2496
      %2517 = vmatprep.subr.mxu0 0.0
      %2518 = vmatpush1.msra.mxu0 %v2497
      %2519 = vmatprep.subr.mxu0 0.0
      %2520 = vmatpush1.msra.mxu0 %v2498
      %2521 = vmatprep.subr.mxu0 0.0
      %2522 = vmatpush1.msra.mxu0 %v2499
      %2523 = vmatprep.subr.mxu0 0.0
      %2524 = vmatpush1.msra.mxu0 %v2500
      %2525 = vmatprep.subr.mxu0 0.0
      %2526 = vmatpush1.msra.mxu0 0.0
      %2527 = vmatprep.subr.mxu0 0.0
      %2528 = vmatpush1.msra.mxu0 0.0
      %2529 = vmatprep.subr.mxu0 0.0
      %2530 = vmatpush1.msra.mxu0 0.0
      %2531 = vmatprep.subr.mxu0 0.0
      %2532 = vmatpush1.msra.mxu0 0.0
      %2533 = vmatprep.subr.mxu0 0.0
      %2534 = vmatpush1.msra.mxu0 0.0
      %2535 = vmatprep.subr.mxu0 0.0
      %2536 = vmatpush1.msra.mxu0 0.0
      %2537 = vmatprep.subr.mxu0 0.0
      %2538 = vmatpush1.msra.mxu0 0.0
      %2539 = vmatprep.subr.mxu0 0.0
      %2540 = vmatpush1.msra.mxu0 0.0
      %2541 = vmatprep.subr.mxu0 0.0
      %2542 = vmatpush1.msra.mxu0 0.0
      %2543 = vmatprep.subr.mxu0 0.0
      %2544 = vmatpush1.msra.mxu0 0.0
      %2545 = vmatprep.subr.mxu0 0.0
      %2546 = vmatpush1.msra.mxu0 0.0
      %2547 = vmatprep.subr.mxu0 0.0
      %2548 = vmatpush1.msra.mxu0 0.0
      %2549 = vmatprep.subr.mxu0 0.0
      %2550 = vmatpush1.msra.mxu0 0.0
      %2551 = vmatprep.subr.mxu0 0.0
      %2552 = vmatpush1.msra.mxu0 0.0
      %2553 = vmatprep.subr.mxu0 0.0
      %2554 = vmatpush1.msra.mxu0 0.0
      %2555 = vmatprep.subr.mxu0 0.0
      %2556 = vmatpush1.msra.mxu0 0.0
      %2557 = vmatprep.subr.mxu0 0.0
      %2558 = vmatpush1.msra.mxu0 0.0
      %2559 = vmatprep.subr.mxu0 0.0
      %2560 = vmatpush1.msra.mxu0 0.0
      %2561 = vmatprep.subr.mxu0 0.0
      %2562 = vmatpush1.msra.mxu0 0.0
      %2563 = vmatprep.subr.mxu0 0.0
      %2564 = vmatpush1.msra.mxu0 0.0
      %2565 = vmatprep.subr.mxu0 0.0
      %2566 = vmatpush1.msra.mxu0 0.0
      %2567 = vmatprep.subr.mxu0 0.0
      %2568 = vmatpush1.msra.mxu0 0.0
      %2569 = vmatprep.subr.mxu0 0.0
      %2570 = vmatpush1.msra.mxu0 0.0
      %2571 = vmatprep.subr.mxu0 0.0
      %2572 = vmatpush1.msra.mxu0 0.0
      %2573 = vmatprep.mubr.f32.mxu0 0.0
      %2574 = vmatmul.mubr.f32.gmra.mrb[0].mxu0 %v2505
      %v2575 = vpop.f32.mrb[0].mxu0
      %v2576 = vadd.f32 0.0, %v2575
      %v2577 = vpop.f32.mrb[0].mxu0
      %2578 = vmatprep.mubr.f32.mxu0 0.0
      %2579 = vmatmul.mubr.f32.gmra.mrb[0].mxu0 %v2507
      %v2580 = vpop.f32.mrb[0].mxu0
      %v2581 = vadd.f32 0.0, %v2580
      %v2582 = vpop.f32.mrb[0].mxu0
      %2583 = vdwg.mxu0
      %v2584 = vadd.f32 %v2484, %v2576
      %v2585 = vadd.f32 %v2489, %v2581
      %v2586 = vld [vmem:[#allocation3 + $0x1] sm:$0xff]
      %v2587 = vld [vmem:[#allocation3 + $0x9] sm:$0xff]
      %s2588 = scalar_lea.vmem %s6, 192
      %v2589 = vld [vmem:[%s2588] sm:$0xff]
      %v2590 = vld [vmem:[%s2588 + $0x8] sm:$0xff]
      %v2591 = vld [vmem:[%s2588 + $0x10] sm:$0xff]
      %v2592 = vld [vmem:[%s2588 + $0x18] sm:$0xff]
      %v2593 = vld [vmem:[%s2588 + $0x20] sm:$0xff]
      %v2594 = vld [vmem:[%s2588 + $0x28] sm:$0xff]
      %v2595 = vld [vmem:[%s2588 + $0x30] sm:$0xff]
      %v2596 = vld [vmem:[%s2588 + $0x38] sm:$0xff]
      %v2598 = vsel %vm617, %v2586, 0
      %v2601 = vsel %vm617, %v2587, 0
      %2603 = vmatprep.subr.mxu0 0.0
      %2604 = vmatpush1.msra.mxu0 %v2589
      %2605 = vmatprep.subr.mxu0 0.0
      %2606 = vmatpush1.msra.mxu0 %v2590
      %2607 = vmatprep.subr.mxu0 0.0
      %2608 = vmatpush1.msra.mxu0 %v2591
      %2609 = vmatprep.subr.mxu0 0.0
      %2610 = vmatpush1.msra.mxu0 %v2592
      %2611 = vmatprep.subr.mxu0 0.0
      %2612 = vmatpush1.msra.mxu0 %v2593
      %2613 = vmatprep.subr.mxu0 0.0
      %2614 = vmatpush1.msra.mxu0 %v2594
      %2615 = vmatprep.subr.mxu0 0.0
      %2616 = vmatpush1.msra.mxu0 %v2595
      %2617 = vmatprep.subr.mxu0 0.0
      %2618 = vmatpush1.msra.mxu0 %v2596
      %2619 = vmatprep.subr.mxu0 0.0
      %2620 = vmatpush1.msra.mxu0 0.0
      %2621 = vmatprep.subr.mxu0 0.0
      %2622 = vmatpush1.msra.mxu0 0.0
      %2623 = vmatprep.subr.mxu0 0.0
      %2624 = vmatpush1.msra.mxu0 0.0
      %2625 = vmatprep.subr.mxu0 0.0
      %2626 = vmatpush1.msra.mxu0 0.0
      %2627 = vmatprep.subr.mxu0 0.0
      %2628 = vmatpush1.msra.mxu0 0.0
      %2629 = vmatprep.subr.mxu0 0.0
      %2630 = vmatpush1.msra.mxu0 0.0
      %2631 = vmatprep.subr.mxu0 0.0
      %2632 = vmatpush1.msra.mxu0 0.0
      %2633 = vmatprep.subr.mxu0 0.0
      %2634 = vmatpush1.msra.mxu0 0.0
      %2635 = vmatprep.subr.mxu0 0.0
      %2636 = vmatpush1.msra.mxu0 0.0
      %2637 = vmatprep.subr.mxu0 0.0
      %2638 = vmatpush1.msra.mxu0 0.0
      %2639 = vmatprep.subr.mxu0 0.0
      %2640 = vmatpush1.msra.mxu0 0.0
      %2641 = vmatprep.subr.mxu0 0.0
      %2642 = vmatpush1.msra.mxu0 0.0
      %2643 = vmatprep.subr.mxu0 0.0
      %2644 = vmatpush1.msra.mxu0 0.0
      %2645 = vmatprep.subr.mxu0 0.0
      %2646 = vmatpush1.msra.mxu0 0.0
      %2647 = vmatprep.subr.mxu0 0.0
      %2648 = vmatpush1.msra.mxu0 0.0
      %2649 = vmatprep.subr.mxu0 0.0
      %2650 = vmatpush1.msra.mxu0 0.0
      %2651 = vmatprep.subr.mxu0 0.0
      %2652 = vmatpush1.msra.mxu0 0.0
      %2653 = vmatprep.subr.mxu0 0.0
      %2654 = vmatpush1.msra.mxu0 0.0
      %2655 = vmatprep.subr.mxu0 0.0
      %2656 = vmatpush1.msra.mxu0 0.0
      %2657 = vmatprep.subr.mxu0 0.0
      %2658 = vmatpush1.msra.mxu0 0.0
      %2659 = vmatprep.subr.mxu0 0.0
      %2660 = vmatpush1.msra.mxu0 0.0
      %2661 = vmatprep.subr.mxu0 0.0
      %2662 = vmatpush1.msra.mxu0 0.0
      %2663 = vmatprep.subr.mxu0 0.0
      %2664 = vmatpush1.msra.mxu0 0.0
      %2665 = vmatprep.subr.mxu0 0.0
      %2666 = vmatpush1.msra.mxu0 0.0
      %2667 = vmatprep.mubr.f32.mxu0 0.0
      %2668 = vmatmul.mubr.f32.gmra.mrb[0].mxu0 %v2598
      %v2669 = vpop.f32.mrb[0].mxu0
      %v2670 = vadd.f32 0.0, %v2669
      %v2671 = vpop.f32.mrb[0].mxu0
      %2672 = vmatprep.mubr.f32.mxu0 0.0
      %2673 = vmatmul.mubr.f32.gmra.mrb[0].mxu0 %v2601
      %v2674 = vpop.f32.mrb[0].mxu0
      %v2675 = vadd.f32 0.0, %v2674
      %v2676 = vpop.f32.mrb[0].mxu0
      %2677 = vdwg.mxu0
      %v2678 = vadd.f32 %v2584, %v2670
      %v2679 = vadd.f32 %v2585, %v2675
      %s2680 = scalar_lea.vmem %s6, 256
      %v2681 = vld [vmem:[%s2680] sm:$0xff]
      %v2682 = vld [vmem:[%s2680 + $0x8] sm:$0xff]
      %v2683 = vld [vmem:[%s2680 + $0x10] sm:$0xff]
      %v2684 = vld [vmem:[%s2680 + $0x18] sm:$0xff]
      %v2685 = vld [vmem:[%s2680 + $0x20] sm:$0xff]
      %v2686 = vld [vmem:[%s2680 + $0x28] sm:$0xff]
      %v2687 = vld [vmem:[%s2680 + $0x30] sm:$0xff]
      %v2688 = vld [vmem:[%s2680 + $0x38] sm:$0xff]
      %2689 = vrot.lane.b32.xlu0 %v2586, 124
      %v2690 = vpop.permute.xlu0 %2689
      %2691 = vrot.lane.b32.xlu0 %v2587, 124
      %v2692 = vpop.permute.xlu0 %2691
      %v2693 = vsel %vm617, %v2690, 0
      %v2695 = vsel %vm617, %v2692, 0
      %2697 = vmatprep.subr.mxu0 0.0
      %2698 = vmatpush1.msra.mxu0 %v2681
      %2699 = vmatprep.subr.mxu0 0.0
      %2700 = vmatpush1.msra.mxu0 %v2682
      %2701 = vmatprep.subr.mxu0 0.0
      %2702 = vmatpush1.msra.mxu0 %v2683
      %2703 = vmatprep.subr.mxu0 0.0
      %2704 = vmatpush1.msra.mxu0 %v2684
      %2705 = vmatprep.subr.mxu0 0.0
      %2706 = vmatpush1.msra.mxu0 %v2685
      %2707 = vmatprep.subr.mxu0 0.0
      %2708 = vmatpush1.msra.mxu0 %v2686
      %2709 = vmatprep.subr.mxu0 0.0
      %2710 = vmatpush1.msra.mxu0 %v2687
      %2711 = vmatprep.subr.mxu0 0.0
      %2712 = vmatpush1.msra.mxu0 %v2688
      %2713 = vmatprep.subr.mxu0 0.0
      %2714 = vmatpush1.msra.mxu0 0.0
      %2715 = vmatprep.subr.mxu0 0.0
      %2716 = vmatpush1.msra.mxu0 0.0
      %2717 = vmatprep.subr.mxu0 0.0
      %2718 = vmatpush1.msra.mxu0 0.0
      %2719 = vmatprep.subr.mxu0 0.0
      %2720 = vmatpush1.msra.mxu0 0.0
      %2721 = vmatprep.subr.mxu0 0.0
      %2722 = vmatpush1.msra.mxu0 0.0
      %2723 = vmatprep.subr.mxu0 0.0
      %2724 = vmatpush1.msra.mxu0 0.0
      %2725 = vmatprep.subr.mxu0 0.0
      %2726 = vmatpush1.msra.mxu0 0.0
      %2727 = vmatprep.subr.mxu0 0.0
      %2728 = vmatpush1.msra.mxu0 0.0
      %2729 = vmatprep.subr.mxu0 0.0
      %2730 = vmatpush1.msra.mxu0 0.0
      %2731 = vmatprep.subr.mxu0 0.0
      %2732 = vmatpush1.msra.mxu0 0.0
      %2733 = vmatprep.subr.mxu0 0.0
      %2734 = vmatpush1.msra.mxu0 0.0
      %2735 = vmatprep.subr.mxu0 0.0
      %2736 = vmatpush1.msra.mxu0 0.0
      %2737 = vmatprep.subr.mxu0 0.0
      %2738 = vmatpush1.msra.mxu0 0.0
      %2739 = vmatprep.subr.mxu0 0.0
      %2740 = vmatpush1.msra.mxu0 0.0
      %2741 = vmatprep.subr.mxu0 0.0
      %2742 = vmatpush1.msra.mxu0 0.0
      %2743 = vmatprep.subr.mxu0 0.0
      %2744 = vmatpush1.msra.mxu0 0.0
      %2745 = vmatprep.subr.mxu0 0.0
      %2746 = vmatpush1.msra.mxu0 0.0
      %2747 = vmatprep.subr.mxu0 0.0
      %2748 = vmatpush1.msra.mxu0 0.0
      %2749 = vmatprep.subr.mxu0 0.0
      %2750 = vmatpush1.msra.mxu0 0.0
      %2751 = vmatprep.subr.mxu0 0.0
      %2752 = vmatpush1.msra.mxu0 0.0
      %2753 = vmatprep.subr.mxu0 0.0
      %2754 = vmatpush1.msra.mxu0 0.0
      %2755 = vmatprep.subr.mxu0 0.0
      %2756 = vmatpush1.msra.mxu0 0.0
      %2757 = vmatprep.subr.mxu0 0.0
      %2758 = vmatpush1.msra.mxu0 0.0
      %2759 = vmatprep.subr.mxu0 0.0
      %2760 = vmatpush1.msra.mxu0 0.0
      %2761 = vmatprep.mubr.f32.mxu0 0.0
      %2762 = vmatmul.mubr.f32.gmra.mrb[0].mxu0 %v2693
      %v2763 = vpop.f32.mrb[0].mxu0
      %v2764 = vadd.f32 0.0, %v2763
      %v2765 = vpop.f32.mrb[0].mxu0
      %2766 = vmatprep.mubr.f32.mxu0 0.0
      %2767 = vmatmul.mubr.f32.gmra.mrb[0].mxu0 %v2695
      %v2768 = vpop.f32.mrb[0].mxu0
      %v2769 = vadd.f32 0.0, %v2768
      %v2770 = vpop.f32.mrb[0].mxu0
      %2771 = vdwg.mxu0
      %v2772 = vadd.f32 %v2678, %v2764
      %v2773 = vadd.f32 %v2679, %v2769
      %s2774 = scalar_lea.vmem %s6, 320
      %v2775 = vld [vmem:[%s2774] sm:$0xff]
      %v2776 = vld [vmem:[%s2774 + $0x8] sm:$0xff]
      %v2777 = vld [vmem:[%s2774 + $0x10] sm:$0xff]
      %v2778 = vld [vmem:[%s2774 + $0x18] sm:$0xff]
      %v2779 = vld [vmem:[%s2774 + $0x20] sm:$0xff]
      %v2780 = vld [vmem:[%s2774 + $0x28] sm:$0xff]
      %v2781 = vld [vmem:[%s2774 + $0x30] sm:$0xff]
      %v2782 = vld [vmem:[%s2774 + $0x38] sm:$0xff]
      %2783 = vrot.lane.b32.xlu0 %v2586, 120
      %v2784 = vpop.permute.xlu0 %2783
      %2785 = vrot.lane.b32.xlu0 %v2587, 120
      %v2786 = vpop.permute.xlu0 %2785
      %v2787 = vsel %vm617, %v2784, 0
      %v2789 = vsel %vm617, %v2786, 0
      %2791 = vmatprep.subr.mxu0 0.0
      %2792 = vmatpush1.msra.mxu0 %v2775
      %2793 = vmatprep.subr.mxu0 0.0
      %2794 = vmatpush1.msra.mxu0 %v2776
      %2795 = vmatprep.subr.mxu0 0.0
      %2796 = vmatpush1.msra.mxu0 %v2777
      %2797 = vmatprep.subr.mxu0 0.0
      %2798 = vmatpush1.msra.mxu0 %v2778
      %2799 = vmatprep.subr.mxu0 0.0
      %2800 = vmatpush1.msra.mxu0 %v2779
      %2801 = vmatprep.subr.mxu0 0.0
      %2802 = vmatpush1.msra.mxu0 %v2780
      %2803 = vmatprep.subr.mxu0 0.0
      %2804 = vmatpush1.msra.mxu0 %v2781
      %2805 = vmatprep.subr.mxu0 0.0
      %2806 = vmatpush1.msra.mxu0 %v2782
      %2807 = vmatprep.subr.mxu0 0.0
      %2808 = vmatpush1.msra.mxu0 0.0
      %2809 = vmatprep.subr.mxu0 0.0
      %2810 = vmatpush1.msra.mxu0 0.0
      %2811 = vmatprep.subr.mxu0 0.0
      %2812 = vmatpush1.msra.mxu0 0.0
      %2813 = vmatprep.subr.mxu0 0.0
      %2814 = vmatpush1.msra.mxu0 0.0
      %2815 = vmatprep.subr.mxu0 0.0
      %2816 = vmatpush1.msra.mxu0 0.0
      %2817 = vmatprep.subr.mxu0 0.0
      %2818 = vmatpush1.msra.mxu0 0.0
      %2819 = vmatprep.subr.mxu0 0.0
      %2820 = vmatpush1.msra.mxu0 0.0
      %2821 = vmatprep.subr.mxu0 0.0
      %2822 = vmatpush1.msra.mxu0 0.0
      %2823 = vmatprep.subr.mxu0 0.0
      %2824 = vmatpush1.msra.mxu0 0.0
      %2825 = vmatprep.subr.mxu0 0.0
      %2826 = vmatpush1.msra.mxu0 0.0
      %2827 = vmatprep.subr.mxu0 0.0
      %2828 = vmatpush1.msra.mxu0 0.0
      %2829 = vmatprep.subr.mxu0 0.0
      %2830 = vmatpush1.msra.mxu0 0.0
      %2831 = vmatprep.subr.mxu0 0.0
      %2832 = vmatpush1.msra.mxu0 0.0
      %2833 = vmatprep.subr.mxu0 0.0
      %2834 = vmatpush1.msra.mxu0 0.0
      %2835 = vmatprep.subr.mxu0 0.0
      %2836 = vmatpush1.msra.mxu0 0.0
      %2837 = vmatprep.subr.mxu0 0.0
      %2838 = vmatpush1.msra.mxu0 0.0
      %2839 = vmatprep.subr.mxu0 0.0
      %2840 = vmatpush1.msra.mxu0 0.0
      %2841 = vmatprep.subr.mxu0 0.0
      %2842 = vmatpush1.msra.mxu0 0.0
      %2843 = vmatprep.subr.mxu0 0.0
      %2844 = vmatpush1.msra.mxu0 0.0
      %2845 = vmatprep.subr.mxu0 0.0
      %2846 = vmatpush1.msra.mxu0 0.0
      %2847 = vmatprep.subr.mxu0 0.0
      %2848 = vmatpush1.msra.mxu0 0.0
      %2849 = vmatprep.subr.mxu0 0.0
      %2850 = vmatpush1.msra.mxu0 0.0
      %2851 = vmatprep.subr.mxu0 0.0
      %2852 = vmatpush1.msra.mxu0 0.0
      %2853 = vmatprep.subr.mxu0 0.0
      %2854 = vmatpush1.msra.mxu0 0.0
      %2855 = vmatprep.mubr.f32.mxu0 0.0
      %2856 = vmatmul.mubr.f32.gmra.mrb[0].mxu0 %v2787
      %v2857 = vpop.f32.mrb[0].mxu0
      %v2858 = vadd.f32 0.0, %v2857
      %v2859 = vpop.f32.mrb[0].mxu0
      %2860 = vmatprep.mubr.f32.mxu0 0.0
      %2861 = vmatmul.mubr.f32.gmra.mrb[0].mxu0 %v2789
      %v2862 = vpop.f32.mrb[0].mxu0
      %v2863 = vadd.f32 0.0, %v2862
      %v2864 = vpop.f32.mrb[0].mxu0
      %2865 = vdwg.mxu0
      %v2866 = vadd.f32 %v2772, %v2858
      %v2867 = vadd.f32 %v2773, %v2863
      %v2868 = vld [vmem:[#allocation3 + $0x2] sm:$0xff]
      %v2869 = vld [vmem:[#allocation3 + $0xa] sm:$0xff]
      %s2870 = scalar_lea.vmem %s6, 384
      %v2871 = vld [vmem:[%s2870] sm:$0xff]
      %v2872 = vld [vmem:[%s2870 + $0x8] sm:$0xff]
      %v2873 = vld [vmem:[%s2870 + $0x10] sm:$0xff]
      %v2874 = vld [vmem:[%s2870 + $0x18] sm:$0xff]
      %v2875 = vld [vmem:[%s2870 + $0x20] sm:$0xff]
      %v2876 = vld [vmem:[%s2870 + $0x28] sm:$0xff]
      %v2877 = vld [vmem:[%s2870 + $0x30] sm:$0xff]
      %v2878 = vld [vmem:[%s2870 + $0x38] sm:$0xff]
      %v2880 = vsel %vm617, %v2868, 0
      %v2883 = vsel %vm617, %v2869, 0
      %2885 = vmatprep.subr.mxu0 0.0
      %2886 = vmatpush1.msra.mxu0 %v2871
      %2887 = vmatprep.subr.mxu0 0.0
      %2888 = vmatpush1.msra.mxu0 %v2872
      %2889 = vmatprep.subr.mxu0 0.0
      %2890 = vmatpush1.msra.mxu0 %v2873
      %2891 = vmatprep.subr.mxu0 0.0
      %2892 = vmatpush1.msra.mxu0 %v2874
      %2893 = vmatprep.subr.mxu0 0.0
      %2894 = vmatpush1.msra.mxu0 %v2875
      %2895 = vmatprep.subr.mxu0 0.0
      %2896 = vmatpush1.msra.mxu0 %v2876
      %2897 = vmatprep.subr.mxu0 0.0
      %2898 = vmatpush1.msra.mxu0 %v2877
      %2899 = vmatprep.subr.mxu0 0.0
      %2900 = vmatpush1.msra.mxu0 %v2878
      %2901 = vmatprep.subr.mxu0 0.0
      %2902 = vmatpush1.msra.mxu0 0.0
      %2903 = vmatprep.subr.mxu0 0.0
      %2904 = vmatpush1.msra.mxu0 0.0
      %2905 = vmatprep.subr.mxu0 0.0
      %2906 = vmatpush1.msra.mxu0 0.0
      %2907 = vmatprep.subr.mxu0 0.0
      %2908 = vmatpush1.msra.mxu0 0.0
      %2909 = vmatprep.subr.mxu0 0.0
      %2910 = vmatpush1.msra.mxu0 0.0
      %2911 = vmatprep.subr.mxu0 0.0
      %2912 = vmatpush1.msra.mxu0 0.0
      %2913 = vmatprep.subr.mxu0 0.0
      %2914 = vmatpush1.msra.mxu0 0.0
      %2915 = vmatprep.subr.mxu0 0.0
      %2916 = vmatpush1.msra.mxu0 0.0
      %2917 = vmatprep.subr.mxu0 0.0
      %2918 = vmatpush1.msra.mxu0 0.0
      %2919 = vmatprep.subr.mxu0 0.0
      %2920 = vmatpush1.msra.mxu0 0.0
      %2921 = vmatprep.subr.mxu0 0.0
      %2922 = vmatpush1.msra.mxu0 0.0
      %2923 = vmatprep.subr.mxu0 0.0
      %2924 = vmatpush1.msra.mxu0 0.0
      %2925 = vmatprep.subr.mxu0 0.0
      %2926 = vmatpush1.msra.mxu0 0.0
      %2927 = vmatprep.subr.mxu0 0.0
      %2928 = vmatpush1.msra.mxu0 0.0
      %2929 = vmatprep.subr.mxu0 0.0
      %2930 = vmatpush1.msra.mxu0 0.0
      %2931 = vmatprep.subr.mxu0 0.0
      %2932 = vmatpush1.msra.mxu0 0.0
      %2933 = vmatprep.subr.mxu0 0.0
      %2934 = vmatpush1.msra.mxu0 0.0
      %2935 = vmatprep.subr.mxu0 0.0
      %2936 = vmatpush1.msra.mxu0 0.0
      %2937 = vmatprep.subr.mxu0 0.0
      %2938 = vmatpush1.msra.mxu0 0.0
      %2939 = vmatprep.subr.mxu0 0.0
      %2940 = vmatpush1.msra.mxu0 0.0
      %2941 = vmatprep.subr.mxu0 0.0
      %2942 = vmatpush1.msra.mxu0 0.0
      %2943 = vmatprep.subr.mxu0 0.0
      %2944 = vmatpush1.msra.mxu0 0.0
      %2945 = vmatprep.subr.mxu0 0.0
      %2946 = vmatpush1.msra.mxu0 0.0
      %2947 = vmatprep.subr.mxu0 0.0
      %2948 = vmatpush1.msra.mxu0 0.0
      %2949 = vmatprep.mubr.f32.mxu0 0.0
      %2950 = vmatmul.mubr.f32.gmra.mrb[0].mxu0 %v2880
      %v2951 = vpop.f32.mrb[0].mxu0
      %v2952 = vadd.f32 0.0, %v2951
      %v2953 = vpop.f32.mrb[0].mxu0
      %2954 = vmatprep.mubr.f32.mxu0 0.0
      %2955 = vmatmul.mubr.f32.gmra.mrb[0].mxu0 %v2883
      %v2956 = vpop.f32.mrb[0].mxu0
      %v2957 = vadd.f32 0.0, %v2956
      %v2958 = vpop.f32.mrb[0].mxu0
      %2959 = vdwg.mxu0
      %v2960 = vadd.f32 %v2866, %v2952
      %v2961 = vadd.f32 %v2867, %v2957
      %s2962 = scalar_lea.vmem %s6, 448
      %v2963 = vld [vmem:[%s2962] sm:$0xff]
      %v2964 = vld [vmem:[%s2962 + $0x8] sm:$0xff]
      %v2965 = vld [vmem:[%s2962 + $0x10] sm:$0xff]
      %v2966 = vld [vmem:[%s2962 + $0x18] sm:$0xff]
      %v2967 = vld [vmem:[%s2962 + $0x20] sm:$0xff]
      %v2968 = vld [vmem:[%s2962 + $0x28] sm:$0xff]
      %v2969 = vld [vmem:[%s2962 + $0x30] sm:$0xff]
      %v2970 = vld [vmem:[%s2962 + $0x38] sm:$0xff]
      %2971 = vrot.lane.b32.xlu0 %v2868, 124
      %v2972 = vpop.permute.xlu0 %2971
      %2973 = vrot.lane.b32.xlu0 %v2869, 124
      %v2974 = vpop.permute.xlu0 %2973
      %v2975 = vsel %vm617, %v2972, 0
      %v2977 = vsel %vm617, %v2974, 0
      %2979 = vmatprep.subr.mxu0 0.0
      %2980 = vmatpush1.msra.mxu0 %v2963
      %2981 = vmatprep.subr.mxu0 0.0
      %2982 = vmatpush1.msra.mxu0 %v2964
      %2983 = vmatprep.subr.mxu0 0.0
      %2984 = vmatpush1.msra.mxu0 %v2965
      %2985 = vmatprep.subr.mxu0 0.0
      %2986 = vmatpush1.msra.mxu0 %v2966
      %2987 = vmatprep.subr.mxu0 0.0
      %2988 = vmatpush1.msra.mxu0 %v2967
      %2989 = vmatprep.subr.mxu0 0.0
      %2990 = vmatpush1.msra.mxu0 %v2968
      %2991 = vmatprep.subr.mxu0 0.0
      %2992 = vmatpush1.msra.mxu0 %v2969
      %2993 = vmatprep.subr.mxu0 0.0
      %2994 = vmatpush1.msra.mxu0 %v2970
      %2995 = vmatprep.subr.mxu0 0.0
      %2996 = vmatpush1.msra.mxu0 0.0
      %2997 = vmatprep.subr.mxu0 0.0
      %2998 = vmatpush1.msra.mxu0 0.0
      %2999 = vmatprep.subr.mxu0 0.0
      %3000 = vmatpush1.msra.mxu0 0.0
      %3001 = vmatprep.subr.mxu0 0.0
      %3002 = vmatpush1.msra.mxu0 0.0
      %3003 = vmatprep.subr.mxu0 0.0
      %3004 = vmatpush1.msra.mxu0 0.0
      %3005 = vmatprep.subr.mxu0 0.0
      %3006 = vmatpush1.msra.mxu0 0.0
      %3007 = vmatprep.subr.mxu0 0.0
      %3008 = vmatpush1.msra.mxu0 0.0
      %3009 = vmatprep.subr.mxu0 0.0
      %3010 = vmatpush1.msra.mxu0 0.0
      %3011 = vmatprep.subr.mxu0 0.0
      %3012 = vmatpush1.msra.mxu0 0.0
      %3013 = vmatprep.subr.mxu0 0.0
      %3014 = vmatpush1.msra.mxu0 0.0
      %3015 = vmatprep.subr.mxu0 0.0
      %3016 = vmatpush1.msra.mxu0 0.0
      %3017 = vmatprep.subr.mxu0 0.0
      %3018 = vmatpush1.msra.mxu0 0.0
      %3019 = vmatprep.subr.mxu0 0.0
      %3020 = vmatpush1.msra.mxu0 0.0
      %3021 = vmatprep.subr.mxu0 0.0
      %3022 = vmatpush1.msra.mxu0 0.0
      %3023 = vmatprep.subr.mxu0 0.0
      %3024 = vmatpush1.msra.mxu0 0.0
      %3025 = vmatprep.subr.mxu0 0.0
      %3026 = vmatpush1.msra.mxu0 0.0
      %3027 = vmatprep.subr.mxu0 0.0
      %3028 = vmatpush1.msra.mxu0 0.0
      %3029 = vmatprep.subr.mxu0 0.0
      %3030 = vmatpush1.msra.mxu0 0.0
      %3031 = vmatprep.subr.mxu0 0.0
      %3032 = vmatpush1.msra.mxu0 0.0
      %3033 = vmatprep.subr.mxu0 0.0
      %3034 = vmatpush1.msra.mxu0 0.0
      %3035 = vmatprep.subr.mxu0 0.0
      %3036 = vmatpush1.msra.mxu0 0.0
      %3037 = vmatprep.subr.mxu0 0.0
      %3038 = vmatpush1.msra.mxu0 0.0
      %3039 = vmatprep.subr.mxu0 0.0
      %3040 = vmatpush1.msra.mxu0 0.0
      %3041 = vmatprep.subr.mxu0 0.0
      %3042 = vmatpush1.msra.mxu0 0.0
      %3043 = vmatprep.mubr.f32.mxu0 0.0
      %3044 = vmatmul.mubr.f32.gmra.mrb[0].mxu0 %v2975
      %v3045 = vpop.f32.mrb[0].mxu0
      %v3046 = vadd.f32 0.0, %v3045
      %v3047 = vpop.f32.mrb[0].mxu0
      %3048 = vmatprep.mubr.f32.mxu0 0.0
      %3049 = vmatmul.mubr.f32.gmra.mrb[0].mxu0 %v2977
      %v3050 = vpop.f32.mrb[0].mxu0
      %v3051 = vadd.f32 0.0, %v3050
      %v3052 = vpop.f32.mrb[0].mxu0
      %3053 = vdwg.mxu0
      %v3054 = vadd.f32 %v2960, %v3046
      %v3055 = vadd.f32 %v2961, %v3051
      %s3056 = scalar_lea.vmem %s6, 512
      %v3057 = vld [vmem:[%s3056] sm:$0xff]
      %v3058 = vld [vmem:[%s3056 + $0x8] sm:$0xff]
      %v3059 = vld [vmem:[%s3056 + $0x10] sm:$0xff]
      %v3060 = vld [vmem:[%s3056 + $0x18] sm:$0xff]
      %v3061 = vld [vmem:[%s3056 + $0x20] sm:$0xff]
      %v3062 = vld [vmem:[%s3056 + $0x28] sm:$0xff]
      %v3063 = vld [vmem:[%s3056 + $0x30] sm:$0xff]
      %v3064 = vld [vmem:[%s3056 + $0x38] sm:$0xff]
      %3065 = vrot.lane.b32.xlu0 %v2868, 120
      %v3066 = vpop.permute.xlu0 %3065
      %3067 = vrot.lane.b32.xlu0 %v2869, 120
      %v3068 = vpop.permute.xlu0 %3067
      %v3069 = vsel %vm617, %v3066, 0
      %v3071 = vsel %vm617, %v3068, 0
      %3073 = vmatprep.subr.mxu0 0.0
      %3074 = vmatpush1.msra.mxu0 %v3057
      %3075 = vmatprep.subr.mxu0 0.0
      %3076 = vmatpush1.msra.mxu0 %v3058
      %3077 = vmatprep.subr.mxu0 0.0
      %3078 = vmatpush1.msra.mxu0 %v3059
      %3079 = vmatprep.subr.mxu0 0.0
      %3080 = vmatpush1.msra.mxu0 %v3060
      %3081 = vmatprep.subr.mxu0 0.0
      %3082 = vmatpush1.msra.mxu0 %v3061
      %3083 = vmatprep.subr.mxu0 0.0
      %3084 = vmatpush1.msra.mxu0 %v3062
      %3085 = vmatprep.subr.mxu0 0.0
      %3086 = vmatpush1.msra.mxu0 %v3063
      %3087 = vmatprep.subr.mxu0 0.0
      %3088 = vmatpush1.msra.mxu0 %v3064
      %3089 = vmatprep.subr.mxu0 0.0
      %3090 = vmatpush1.msra.mxu0 0.0
      %3091 = vmatprep.subr.mxu0 0.0
      %3092 = vmatpush1.msra.mxu0 0.0
      %3093 = vmatprep.subr.mxu0 0.0
      %3094 = vmatpush1.msra.mxu0 0.0
      %3095 = vmatprep.subr.mxu0 0.0
      %3096 = vmatpush1.msra.mxu0 0.0
      %3097 = vmatprep.subr.mxu0 0.0
      %3098 = vmatpush1.msra.mxu0 0.0
      %3099 = vmatprep.subr.mxu0 0.0
      %3100 = vmatpush1.msra.mxu0 0.0
      %3101 = vmatprep.subr.mxu0 0.0
      %3102 = vmatpush1.msra.mxu0 0.0
      %3103 = vmatprep.subr.mxu0 0.0
      %3104 = vmatpush1.msra.mxu0 0.0
      %3105 = vmatprep.subr.mxu0 0.0
      %3106 = vmatpush1.msra.mxu0 0.0
      %3107 = vmatprep.subr.mxu0 0.0
      %3108 = vmatpush1.msra.mxu0 0.0
      %3109 = vmatprep.subr.mxu0 0.0
      %3110 = vmatpush1.msra.mxu0 0.0
      %3111 = vmatprep.subr.mxu0 0.0
      %3112 = vmatpush1.msra.mxu0 0.0
      %3113 = vmatprep.subr.mxu0 0.0
      %3114 = vmatpush1.msra.mxu0 0.0
      %3115 = vmatprep.subr.mxu0 0.0
      %3116 = vmatpush1.msra.mxu0 0.0
      %3117 = vmatprep.subr.mxu0 0.0
      %3118 = vmatpush1.msra.mxu0 0.0
      %3119 = vmatprep.subr.mxu0 0.0
      %3120 = vmatpush1.msra.mxu0 0.0
      %3121 = vmatprep.subr.mxu0 0.0
      %3122 = vmatpush1.msra.mxu0 0.0
      %3123 = vmatprep.subr.mxu0 0.0
      %3124 = vmatpush1.msra.mxu0 0.0
      %3125 = vmatprep.subr.mxu0 0.0
      %3126 = vmatpush1.msra.mxu0 0.0
      %3127 = vmatprep.subr.mxu0 0.0
      %3128 = vmatpush1.msra.mxu0 0.0
      %3129 = vmatprep.subr.mxu0 0.0
      %3130 = vmatpush1.msra.mxu0 0.0
      %3131 = vmatprep.subr.mxu0 0.0
      %3132 = vmatpush1.msra.mxu0 0.0
      %3133 = vmatprep.subr.mxu0 0.0
      %3134 = vmatpush1.msra.mxu0 0.0
      %3135 = vmatprep.subr.mxu0 0.0
      %3136 = vmatpush1.msra.mxu0 0.0
      %3137 = vmatprep.mubr.f32.mxu0 0.0
      %3138 = vmatmul.mubr.f32.gmra.mrb[0].mxu0 %v3069
      %v3139 = vpop.f32.mrb[0].mxu0
      %v3140 = vadd.f32 0.0, %v3139
      %v3141 = vpop.f32.mrb[0].mxu0
      %3142 = vmatprep.mubr.f32.mxu0 0.0
      %3143 = vmatmul.mubr.f32.gmra.mrb[0].mxu0 %v3071
      %v3144 = vpop.f32.mrb[0].mxu0
      %v3145 = vadd.f32 0.0, %v3144
      %v3146 = vpop.f32.mrb[0].mxu0
      %3147 = vdwg.mxu0
      %v3148 = vadd.f32 %v3054, %v3140
      %v3149 = vadd.f32 %v3055, %v3145
      %v3150 = vld [vmem:[%s9] sm:$0x1]
      %v3152 = vlaneseq
      %v3153 = vshrl.u32 %v3152, 7
      %v3154 = vsub.s32 0, %v3153
      %v3155 = vrot.slane %v3150, %v3154
      %v3157 = vmul.f32 %v3148, %v3155
      %v3158 = vmul.f32 %v3149, %v3155
      %v3159 = vld [vmem:[%s10] sm:$0x1]
      %v3161 = vlaneseq
      %v3162 = vshrl.u32 %v3161, 7
      %v3163 = vsub.s32 0, %v3162
      %v3164 = vrot.slane %v3159, %v3163
      %v3166 = vadd.f32 %v3157, %v3164
      %v3167 = vadd.f32 %v3158, %v3164
      %v3168 = vmax.f32 %v3166, 0.0
      %v3169 = vmax.f32 %v3167, 0.0
      %3170 = vst.msk [vmem:[%s403] sm:$0xff] %vm617, %v3168
      %3171 = vst.msk [vmem:[%s403 + $0x8] sm:$0xff] %vm617, %v3169
      %p3172 = scmp.lt.s32.totalorder %s22, 1
      %s3173 = scalar_select %p3172, %s22, 1
      %s3174 = smul.addr %s3173, 2
      %s3175 = smul.addr %s3174, 8
      %s3176 = scalar_lea.vmem %s11, %s3175
      // Predicated region
      $region65: #{up_bilinear_forward.1} parent=63 // pred_check
        %p3177 = pneg %p281
      $region66: #{up_bilinear_forward.1} parent=63 // pred_check_branch
        %3179 = sbr.rel (%p3177) target = $region68
      $region67: #{up_bilinear_forward.1} parent=63 // pred_region
        _
      $region68: #{up_bilinear_forward.1} parent=63 // pred_fallthru
        _
    $region64: #{up_bilinear_forward.1} parent=5 // pred_fallthru
      _
    %p3180 = scmp.le.s32.totalorder 2, %s17
    // Predicated region
    $region69: #{up_bilinear_forward.1} parent=5 // pred_check
      %p3181 = pneg %p3180
    $region70: #{up_bilinear_forward.1} parent=5 // pred_check_branch
      %3183 = sbr.rel (%p3181) target = $region72
    $region71: #{up_bilinear_forward.1} parent=5 // pred_region
      %s3184 = ssub.s32 %s17, 2
      // Predicated region
      $region73: #{up_bilinear_forward.1} parent=71 // pred_check
        %p3185 = pneg %p287
      $region74: #{up_bilinear_forward.1} parent=71 // pred_check_branch
        %3187 = sbr.rel (%p3185) target = $region76
      $region75: #{up_bilinear_forward.1} parent=71 // pred_region
        %p3188 = scmp.lt.s32.totalorder %s23, 1
        %s3189 = scalar_select %p3188, %s23, 1
        %s3190 = smul.addr %s3189, 2
        %s3191 = smul.addr %s3190, 8
        %s3192 = scalar_lea.vmem %s11, %s3191
      $region76: #{up_bilinear_forward.1} parent=71 // pred_fallthru
        _
    $region72: #{up_bilinear_forward.1} parent=5 // pred_fallthru
      _
  $region6: #{up_bilinear_forward.1} parent=0 // loop_footer
    %s21 = sadd.s32 1, %s17
  $region7: #{up_bilinear_forward.1} parent=0 // loop_footer_branch
    %16 = sbr.rel target = $region3
  $region8: #{up_bilinear_forward.1} parent=0 // loop_exit
    _

</llo_original>
